<compile_context>
chip_gen: v7x
topology: tpu7x:2x2x1
jax: 0.10.0
libtpu: 0.0.40
codegen_flags: <defaults>
</compile_context>

<pallas_src>
import numpy as np
import jax
import jax.numpy as jnp
from jax.experimental import pallas as pl
from jax.experimental.pallas import tpu as pltpu

EPS = 1e-5   # nn.BatchNorm2d default eps
SUB = 8      # sublane alignment for chunk channel blocks (use 16 if channels allow,
             # for fully unmasked bf16 stores; real nets have c0,g multiples of 16)


def _round_up(x, m):
    return (x + m - 1) // m * m


def _make_block_kernel(num_layers, c0, growth, n, h, w):
    """Builds the fused _DenseBlock kernel for a fixed configuration."""
    nhw = n * h * w
    c0p = _round_up(c0, SUB)                 # padded input-chunk channels
    gp = _round_up(growth, SUB)              # padded growth (matmul M dim + newf rows)
    # chunk j: j==0 -> original input, j>0 -> new features of layer j-1
    chunk_off = [0] + [c0p + (j - 1) * gp for j in range(1, num_layers)]
    chunk_ccp = [c0p] + [gp] * (num_layers - 1)
    ctot = c0p + (num_layers - 1) * gp       # total padded channels (all chunks)
    kmax = 9 * ctot                          # chunk-major im2col rows (8-aligned)
    # tap order t = kh*3 + kw ; flattened-spatial-index offset of tap t
    tap_off = [(kh - 1) * w + (kw - 1) for kh in range(3) for kw in range(3)]
    inv_m = 1.0 / float(nhw)

    def kernel(*refs):
        x_ref = refs[0]                           # (c0p, nhw)      f32, channel-major input (pad rows zero)
        mask_ref = refs[1]                        # (9, 1, nhw)     f32, per-tap boundary masks
        layer_refs = refs[2:2 + 3 * num_layers]   # per layer: gamma (cpad_i,1), beta (cpad_i,1), w (gp,k_i) bf16
        o_ref = refs[2 + 3 * num_layers]          # (gp, nhw)       f32, lane-dense output
        newf_ref = refs[3 + 3 * num_layers]       # (L-1, gp, nhw)  f32, resident new features
        col_ref = refs[4 + 3 * num_layers]        # (kmax, nhw)     bf16, chunk-major im2col staging
        mean_ref = refs[5 + 3 * num_layers]       # (ctot, 1)       f32, cached per-channel batch mean
        rstd_ref = refs[6 + 3 * num_layers]       # (ctot, 1)       f32, cached per-channel 1/sqrt(var+eps)

        for i in range(num_layers):               # statically unrolled over layers
            gamma_ref = layer_refs[3 * i + 0]
            beta_ref = layer_refs[3 * i + 1]
            w_ref = layer_refs[3 * i + 2]

            # ---- per input chunk: (cached-stats) BN -> ReLU -> shifted im2col writes ----
            for j in range(i + 1):
                poff = chunk_off[j]
                ccp = chunk_ccp[j]
                rbase = 9 * poff                                       # chunk's col row base
                feats = x_ref[...] if j == 0 else newf_ref[j - 1]      # (ccp, nhw) f32

                if i == 0 and j == 0:
                    # input-chunk stats: computed once (centred variance), cached for all layers
                    mean = jnp.sum(feats, axis=1, keepdims=True) * inv_m
                    d = feats - mean
                    var = jnp.sum(d * d, axis=1, keepdims=True) * inv_m
                    rstd = jax.lax.rsqrt(var + EPS)
                    mean_ref[0:ccp, :] = mean
                    rstd_ref[0:ccp, :] = rstd
                else:
                    mean = mean_ref[poff:poff + ccp, :]
                    rstd = rstd_ref[poff:poff + ccp, :]

                # per-layer gamma/beta (pad channels have gamma=beta=0 -> y pad rows = 0)
                scale = gamma_ref[poff:poff + ccp, :] * rstd
                shift = beta_ref[poff:poff + ccp, :] - mean * scale
                y = jnp.maximum(feats * scale + shift, 0.0)            # (ccp, nhw) f32

                for t in range(9):
                    off = tap_off[t]
                    if off == 0:
                        patch = y                                      # centre tap: no shift, no mask
                    else:
                        rolled = pltpu.roll(y, shift=(-off) % nhw, axis=1)
                        patch = rolled * mask_ref[t]                   # zero the conv padding region
                    row = rbase + t * ccp                              # 8-sublane-aligned start
                    col_ref[row:row + ccp, :] = patch.astype(jnp.bfloat16)

            # ---- single bf16 MXU matmul, contracting ONLY over this layer's channels ----
            k_i = 9 * (c0p + i * gp)
            out = jnp.dot(w_ref[...], col_ref[0:k_i, :],
                          preferred_element_type=jnp.float32)          # (gp, nhw) f32

            if i < num_layers - 1:
                # cache the new chunk's BN stats while `out` is live (no extra reload later)
                poff_new = c0p + i * gp
                m_new = jnp.sum(out, axis=1, keepdims=True) * inv_m
                d = out - m_new
                v_new = jnp.sum(d * d, axis=1, keepdims=True) * inv_m
                mean_ref[poff_new:poff_new + gp, :] = m_new
                rstd_ref[poff_new:poff_new + gp, :] = jax.lax.rsqrt(v_new + EPS)
                newf_ref[i] = out                                      # keep resident for later layers
            else:
                o_ref[...] = out                                       # block output (lane-dense)

    return kernel, c0p, gp, ctot, kmax


def dense_block_forward(x_nchw, params):
    """_DenseBlock.forward: returns only the last layer's new features, NCHW."""
    n, c0, h, w = x_nchw.shape
    num_layers = len(params)
    growth = params[0][2].shape[-1]
    nhw = n * h * w
    kernel, c0p, gp, ctot, kmax = _make_block_kernel(num_layers, c0, growth, n, h, w)

    # Channel-major, flattened-spatial layout (C, N*H*W), padded to 8 channel rows.
    x2d = jnp.transpose(x_nchw, (1, 0, 2, 3)).reshape(c0, nhw)
    x2d = jnp.zeros((c0p, nhw), jnp.float32).at[:c0].set(x2d)

    # Boundary masks per 3x3 tap, precomputed on host (no in-kernel div/mod needed).
    masks = np.zeros((9, 1, nhw), np.float32)
    hh, ww = np.arange(h), np.arange(w)
    for kh in range(3):
        for kw in range(3):
            dh, dw = kh - 1, kw - 1
            valid = ((((hh + dh) >= 0) & ((hh + dh) < h))[:, None] &
                     (((ww + dw) >= 0) & ((ww + dw) < w))[None, :])
            masks[kh * 3 + kw, 0] = np.tile(valid[None].astype(np.float32),
                                            (n, 1, 1)).reshape(nhw)
    masks = jnp.asarray(masks)

    # Chunk bookkeeping (padded channel offsets / original concatenated-channel offsets).
    chunk_off = [0] + [c0p + (j - 1) * gp for j in range(1, num_layers)]
    chunk_cc_real = [c0] + [growth] * (num_layers - 1)
    chunk_cc_pad = [c0p] + [gp] * (num_layers - 1)
    chunk_goff = [0] + [c0 + (j - 1) * growth for j in range(1, num_layers)]

    inputs = [x2d, masks]
    flops = 0
    bytes_accessed = int(x2d.size) * 4 + int(masks.size) * 4
    for i, (gamma, beta, w9) in enumerate(params):
        cin = c0 + i * growth
        cpad_i = c0p + i * gp
        k_i = 9 * cpad_i
        gflat = gamma.reshape(-1)
        bflat = beta.reshape(-1)
        gam = jnp.zeros((cpad_i, 1), jnp.float32)
        bet = jnp.zeros((cpad_i, 1), jnp.float32)
        # (9, cin, g) -> (gp, k_i), chunk-major: chunk j, tap t occupies columns
        # [9*poff_j + t*ccp_j, ... + cc_real_j); pad rows/cols stay zero.
        w2d = jnp.zeros((gp, k_i), jnp.float32)
        for j in range(i + 1):
            poff = chunk_off[j]
            ccr = chunk_cc_real[j]
            ccp = chunk_cc_pad[j]
            goff = chunk_goff[j]
            gam = gam.at[poff:poff + ccr, 0].set(gflat[goff:goff + ccr])
            bet = bet.at[poff:poff + ccr, 0].set(bflat[goff:goff + ccr])
            rbase = 9 * poff
            for t in range(9):
                w2d = w2d.at[:growth, rbase + t * ccp: rbase + t * ccp + ccr].set(
                    w9[t, goff:goff + ccr, :].T)
        inputs.append(gam)                                   # BN weight (padded layout)
        inputs.append(bet)                                   # BN bias   (padded layout)
        inputs.append(w2d.astype(jnp.bfloat16))              # conv weight, bf16
        flops += 2 * growth * 9 * cin * nhw
        bytes_accessed += int(gam.size) * 4 + int(bet.size) * 4 + int(w2d.size) * 2
    bytes_accessed += gp * nhw * 4                           # output slab

    # Resident-VMEM budget (grid-less): col (bf16) + newf + inputs/output + stats, x2 headroom.
    resident = (kmax * nhw * 2 + max(num_layers - 1, 1) * gp * nhw * 4 +
                bytes_accessed + 2 * ctot * 128 * 4)
    vmem_limit = int(min(max(2 * resident, 16 << 20), 48 << 20))

    vmem = pl.BlockSpec(memory_space=pltpu.MemorySpace.VMEM)  # whole arrays resident in VMEM
    out2d = pl.pallas_call(
        kernel,
        out_shape=jax.ShapeDtypeStruct((gp, nhw), jnp.float32),
        in_specs=[vmem] * len(inputs),
        out_specs=vmem,
        scratch_shapes=[
            pltpu.VMEM((max(num_layers - 1, 1), gp, nhw), jnp.float32),  # resident new features
            pltpu.VMEM((kmax, nhw), jnp.bfloat16),                        # im2col staging (bf16)
            pltpu.VMEM((ctot, 1), jnp.float32),                           # cached BN mean
            pltpu.VMEM((ctot, 1), jnp.float32),                           # cached BN rstd
        ],
        compiler_params=pltpu.CompilerParams(vmem_limit_bytes=vmem_limit),
        cost_estimate=pl.CostEstimate(flops=int(flops),
                                      transcendentals=int(2 * ctot),
                                      bytes_accessed=int(bytes_accessed)),
    )(*inputs)

    # Drop the growth padding rows, back to NCHW.
    return jnp.transpose(out2d[:growth].reshape(growth, n, h, w), (1, 0, 2, 3))


def init_params(key, num_layers, num_input_features, growth_rate):
    """Deterministic synthetic parameters. Per layer i: Cin = num_input_features + i*growth."""
    params = []
    for i in range(num_layers):
        cin = num_input_features + i * growth_rate
        key, kg, kb, kw = jax.random.split(key, 4)
        gamma = 1.0 + 0.1 * jax.random.normal(kg, (1, cin), jnp.float32)
        beta = 0.1 * jax.random.normal(kb, (1, cin), jnp.float32)
        std = (2.0 / (cin * 9)) ** 0.5
        w9 = std * jax.random.normal(kw, (9, cin, growth_rate), jnp.float32)
        params.append((gamma, beta, w9))
    return params


def dense_block_reference(x_nchw, params):
    """Pure-JAX reference (NCHW, lax.conv, f32) for numerical verification."""
    feats = x_nchw
    new = None
    for gamma, beta, w9 in params:
        cin = feats.shape[1]
        g = w9.shape[-1]
        mean = jnp.mean(feats, axis=(0, 2, 3), keepdims=True)
        var = jnp.mean((feats - mean) ** 2, axis=(0, 2, 3), keepdims=True)
        y = (feats - mean) * jax.lax.rsqrt(var + EPS)
        y = y * gamma.reshape(1, cin, 1, 1) + beta.reshape(1, cin, 1, 1)
        y = jnp.maximum(y, 0.0)
        w_oihw = jnp.transpose(w9.reshape(3, 3, cin, g), (3, 2, 0, 1))
        new = jax.lax.conv_general_dilated(
            y, w_oihw, window_strides=(1, 1), padding=((1, 1), (1, 1)),
            dimension_numbers=("NCHW", "OIHW", "NCHW"),
            precision=jax.lax.Precision.HIGHEST)
        feats = jnp.concatenate([feats, new], axis=1)
    return new


if __name__ == "__main__":
    N, C0, H, W = 2, 4, 16, 16
    NUM_LAYERS, GROWTH = 3, 4          # drop_rate = 0.0 (dropout no-op)

    key = jax.random.PRNGKey(0)
    kx, kp = jax.random.split(key)
    x = jax.random.normal(kx, (N, C0, H, W), dtype=jnp.float32)   # NCHW, like PyTorch
    params = init_params(kp, NUM_LAYERS, C0, GROWTH)

    out = jax.block_until_ready(dense_block_forward(x, params))
    assert out.shape == (N, GROWTH, H, W), out.shape

    ref = jax.block_until_ready(dense_block_reference(x, params))
    # bf16 MXU inputs (f32 accumulation) -> slightly looser tolerance than pure-f32;
    # still far below any structural-error magnitude.
    np.testing.assert_allclose(np.asarray(out), np.asarray(ref), rtol=5e-2, atol=5e-2)

    print("KERNEL_OK")
</pallas_src>

<mosaic_0001>
module attributes {stable_mosaic.version = 11 : i64} {
  func.func @kernel(%arg0: memref<8x512xf32, #tpu.memory_space<vmem>>, %arg1: memref<9x1x512xf32, #tpu.memory_space<vmem>>, %arg2: memref<8x1xf32, #tpu.memory_space<vmem>>, %arg3: memref<8x1xf32, #tpu.memory_space<vmem>>, %arg4: memref<8x72xbf16, #tpu.memory_space<vmem>>, %arg5: memref<16x1xf32, #tpu.memory_space<vmem>>, %arg6: memref<16x1xf32, #tpu.memory_space<vmem>>, %arg7: memref<8x144xbf16, #tpu.memory_space<vmem>>, %arg8: memref<24x1xf32, #tpu.memory_space<vmem>>, %arg9: memref<24x1xf32, #tpu.memory_space<vmem>>, %arg10: memref<8x216xbf16, #tpu.memory_space<vmem>>, %arg11: memref<8x512xf32, #tpu.memory_space<vmem>>, %arg12: memref<2x8x512xf32, #tpu.memory_space<vmem>>, %arg13: memref<216x512xbf16, #tpu.memory_space<vmem>>, %arg14: memref<24x1xf32, #tpu.memory_space<vmem>>, %arg15: memref<24x1xf32, #tpu.memory_space<vmem>>) attributes {dimension_semantics = [], scalar_prefetch = 0 : i64, scratch_operands = 4 : i64, tpu.core_type = #tpu.core_type<tc>} {
    %c0 = arith.constant 0 : index
    %c0_0 = arith.constant 0 : index
    %0 = vector.load %arg0[%c0, %c0_0] : memref<8x512xf32, #tpu.memory_space<vmem>>, vector<8x512xf32>
    %cst = arith.constant dense<0.000000e+00> : vector<8xf32>
    %1 = vector.multi_reduction <add>, %0, %cst [1] : vector<8x512xf32> to vector<8xf32>
    %2 = vector.shape_cast %1 : vector<8xf32> to vector<8x1xf32>
    %cst_1 = arith.constant 0.001953125 : f32
    %3 = vector.broadcast %cst_1 : f32 to vector<8x1xf32>
    %4 = arith.mulf %2, %3 : vector<8x1xf32>
    %5 = vector.broadcast %4 : vector<8x1xf32> to vector<8x512xf32>
    %6 = arith.subf %0, %5 : vector<8x512xf32>
    %7 = arith.mulf %6, %6 : vector<8x512xf32>
    %cst_2 = arith.constant dense<0.000000e+00> : vector<8xf32>
    %8 = vector.multi_reduction <add>, %7, %cst_2 [1] : vector<8x512xf32> to vector<8xf32>
    %9 = vector.shape_cast %8 : vector<8xf32> to vector<8x1xf32>
    %cst_3 = arith.constant 0.001953125 : f32
    %10 = vector.broadcast %cst_3 : f32 to vector<8x1xf32>
    %11 = arith.mulf %9, %10 : vector<8x1xf32>
    %cst_4 = arith.constant 9.99999974E-6 : f32
    %12 = vector.broadcast %cst_4 : f32 to vector<8x1xf32>
    %13 = arith.addf %11, %12 : vector<8x1xf32>
    %14 = math.rsqrt %13 : vector<8x1xf32>
    %c0_5 = arith.constant 0 : index
    %c0_6 = arith.constant 0 : index
    %15 = vector.load %arg14[%c0_5, %c0_6] : memref<24x1xf32, #tpu.memory_space<vmem>>, vector<8x1xf32>
    tpu.vector_store %arg14[%c0_5, %c0_6], %4 {strides = array<i32>} : memref<24x1xf32, #tpu.memory_space<vmem>>, vector<8x1xf32>,
    %c0_7 = arith.constant 0 : index
    %c0_8 = arith.constant 0 : index
    %16 = vector.load %arg15[%c0_7, %c0_8] : memref<24x1xf32, #tpu.memory_space<vmem>>, vector<8x1xf32>
    tpu.vector_store %arg15[%c0_7, %c0_8], %14 {strides = array<i32>} : memref<24x1xf32, #tpu.memory_space<vmem>>, vector<8x1xf32>,
    %c0_9 = arith.constant 0 : index
    %c0_10 = arith.constant 0 : index
    %17 = vector.load %arg2[%c0_9, %c0_10] : memref<8x1xf32, #tpu.memory_space<vmem>>, vector<8x1xf32>
    %18 = arith.mulf %17, %14 : vector<8x1xf32>
    %c0_11 = arith.constant 0 : index
    %c0_12 = arith.constant 0 : index
    %19 = vector.load %arg3[%c0_11, %c0_12] : memref<8x1xf32, #tpu.memory_space<vmem>>, vector<8x1xf32>
    %20 = arith.mulf %4, %18 : vector<8x1xf32>
    %21 = arith.subf %19, %20 : vector<8x1xf32>
    %22 = vector.broadcast %18 : vector<8x1xf32> to vector<8x512xf32>
    %23 = arith.mulf %0, %22 : vector<8x512xf32>
    %24 = vector.broadcast %21 : vector<8x1xf32> to vector<8x512xf32>
    %25 = arith.addf %23, %24 : vector<8x512xf32>
    %cst_13 = arith.constant 0.000000e+00 : f32
    %26 = vector.broadcast %cst_13 : f32 to vector<8x512xf32>
    %27 = arith.maximumf %25, %26 : vector<8x512xf32>
    %c17_i32 = arith.constant 17 : i32
    %28 = tpu.dynamic_rotate %27 by %c17_i32 dim 1 : vector<8x512xf32>, i32 -> vector<8x512xf32>
    %c0_14 = arith.constant 0 : index
    %c0_15 = arith.constant 0 : index
    %c0_16 = arith.constant 0 : index
    %29 = vector.load %arg1[%c0_14, %c0_15, %c0_16] : memref<9x1x512xf32, #tpu.memory_space<vmem>>, vector<1x1x512xf32>
    %30 = vector.shape_cast %29 : vector<1x1x512xf32> to vector<1x512xf32>
    %31 = vector.broadcast %30 : vector<1x512xf32> to vector<8x512xf32>
    %32 = arith.mulf %28, %31 : vector<8x512xf32>
    %33 = arith.truncf %32 : vector<8x512xf32> to vector<8x512xbf16>
    %c0_17 = arith.constant 0 : index
    %c0_18 = arith.constant 0 : index
    %34 = vector.load %arg13[%c0_17, %c0_18] : memref<216x512xbf16, #tpu.memory_space<vmem>>, vector<8x512xbf16>
    tpu.vector_store %arg13[%c0_17, %c0_18], %33 {strides = array<i32>} : memref<216x512xbf16, #tpu.memory_space<vmem>>, vector<8x512xbf16>,
    %c16_i32 = arith.constant 16 : i32
    %35 = tpu.dynamic_rotate %27 by %c16_i32 dim 1 : vector<8x512xf32>, i32 -> vector<8x512xf32>
    %c1 = arith.constant 1 : index
    %c0_19 = arith.constant 0 : index
    %c0_20 = arith.constant 0 : index
    %36 = vector.load %arg1[%c1, %c0_19, %c0_20] : memref<9x1x512xf32, #tpu.memory_space<vmem>>, vector<1x1x512xf32>
    %37 = vector.shape_cast %36 : vector<1x1x512xf32> to vector<1x512xf32>
    %38 = vector.broadcast %37 : vector<1x512xf32> to vector<8x512xf32>
    %39 = arith.mulf %35, %38 : vector<8x512xf32>
    %40 = arith.truncf %39 : vector<8x512xf32> to vector<8x512xbf16>
    %c8 = arith.constant 8 : index
    %c0_21 = arith.constant 0 : index
    %41 = vector.load %arg13[%c8, %c0_21] : memref<216x512xbf16, #tpu.memory_space<vmem>>, vector<8x512xbf16>
    tpu.vector_store %arg13[%c8, %c0_21], %40 {strides = array<i32>} : memref<216x512xbf16, #tpu.memory_space<vmem>>, vector<8x512xbf16>,
    %c15_i32 = arith.constant 15 : i32
    %42 = tpu.dynamic_rotate %27 by %c15_i32 dim 1 : vector<8x512xf32>, i32 -> vector<8x512xf32>
    %c2 = arith.constant 2 : index
    %c0_22 = arith.constant 0 : index
    %c0_23 = arith.constant 0 : index
    %43 = vector.load %arg1[%c2, %c0_22, %c0_23] : memref<9x1x512xf32, #tpu.memory_space<vmem>>, vector<1x1x512xf32>
    %44 = vector.shape_cast %43 : vector<1x1x512xf32> to vector<1x512xf32>
    %45 = vector.broadcast %44 : vector<1x512xf32> to vector<8x512xf32>
    %46 = arith.mulf %42, %45 : vector<8x512xf32>
    %47 = arith.truncf %46 : vector<8x512xf32> to vector<8x512xbf16>
    %c16 = arith.constant 16 : index
    %c0_24 = arith.constant 0 : index
    %48 = vector.load %arg13[%c16, %c0_24] : memref<216x512xbf16, #tpu.memory_space<vmem>>, vector<8x512xbf16>
    tpu.vector_store %arg13[%c16, %c0_24], %47 {strides = array<i32>} : memref<216x512xbf16, #tpu.memory_space<vmem>>, vector<8x512xbf16>,
    %c1_i32 = arith.constant 1 : i32
    %49 = tpu.dynamic_rotate %27 by %c1_i32 dim 1 : vector<8x512xf32>, i32 -> vector<8x512xf32>
    %c3 = arith.constant 3 : index
    %c0_25 = arith.constant 0 : index
    %c0_26 = arith.constant 0 : index
    %50 = vector.load %arg1[%c3, %c0_25, %c0_26] : memref<9x1x512xf32, #tpu.memory_space<vmem>>, vector<1x1x512xf32>
    %51 = vector.shape_cast %50 : vector<1x1x512xf32> to vector<1x512xf32>
    %52 = vector.broadcast %51 : vector<1x512xf32> to vector<8x512xf32>
    %53 = arith.mulf %49, %52 : vector<8x512xf32>
    %54 = arith.truncf %53 : vector<8x512xf32> to vector<8x512xbf16>
    %c24 = arith.constant 24 : index
    %c0_27 = arith.constant 0 : index
    %55 = vector.load %arg13[%c24, %c0_27] : memref<216x512xbf16, #tpu.memory_space<vmem>>, vector<8x512xbf16>
    tpu.vector_store %arg13[%c24, %c0_27], %54 {strides = array<i32>} : memref<216x512xbf16, #tpu.memory_space<vmem>>, vector<8x512xbf16>,
    %56 = arith.truncf %27 : vector<8x512xf32> to vector<8x512xbf16>
    %c32 = arith.constant 32 : index
    %c0_28 = arith.constant 0 : index
    %57 = vector.load %arg13[%c32, %c0_28] : memref<216x512xbf16, #tpu.memory_space<vmem>>, vector<8x512xbf16>
    tpu.vector_store %arg13[%c32, %c0_28], %56 {strides = array<i32>} : memref<216x512xbf16, #tpu.memory_space<vmem>>, vector<8x512xbf16>,
    %c511_i32 = arith.constant 511 : i32
    %58 = tpu.dynamic_rotate %27 by %c511_i32 dim 1 : vector<8x512xf32>, i32 -> vector<8x512xf32>
    %c5 = arith.constant 5 : index
    %c0_29 = arith.constant 0 : index
    %c0_30 = arith.constant 0 : index
    %59 = vector.load %arg1[%c5, %c0_29, %c0_30] : memref<9x1x512xf32, #tpu.memory_space<vmem>>, vector<1x1x512xf32>
    %60 = vector.shape_cast %59 : vector<1x1x512xf32> to vector<1x512xf32>
    %61 = vector.broadcast %60 : vector<1x512xf32> to vector<8x512xf32>
    %62 = arith.mulf %58, %61 : vector<8x512xf32>
    %63 = arith.truncf %62 : vector<8x512xf32> to vector<8x512xbf16>
    %c40 = arith.constant 40 : index
    %c0_31 = arith.constant 0 : index
    %64 = vector.load %arg13[%c40, %c0_31] : memref<216x512xbf16, #tpu.memory_space<vmem>>, vector<8x512xbf16>
    tpu.vector_store %arg13[%c40, %c0_31], %63 {strides = array<i32>} : memref<216x512xbf16, #tpu.memory_space<vmem>>, vector<8x512xbf16>,
    %c497_i32 = arith.constant 497 : i32
    %65 = tpu.dynamic_rotate %27 by %c497_i32 dim 1 : vector<8x512xf32>, i32 -> vector<8x512xf32>
    %c6 = arith.constant 6 : index
    %c0_32 = arith.constant 0 : index
    %c0_33 = arith.constant 0 : index
    %66 = vector.load %arg1[%c6, %c0_32, %c0_33] : memref<9x1x512xf32, #tpu.memory_space<vmem>>, vector<1x1x512xf32>
    %67 = vector.shape_cast %66 : vector<1x1x512xf32> to vector<1x512xf32>
    %68 = vector.broadcast %67 : vector<1x512xf32> to vector<8x512xf32>
    %69 = arith.mulf %65, %68 : vector<8x512xf32>
    %70 = arith.truncf %69 : vector<8x512xf32> to vector<8x512xbf16>
    %c48 = arith.constant 48 : index
    %c0_34 = arith.constant 0 : index
    %71 = vector.load %arg13[%c48, %c0_34] : memref<216x512xbf16, #tpu.memory_space<vmem>>, vector<8x512xbf16>
    tpu.vector_store %arg13[%c48, %c0_34], %70 {strides = array<i32>} : memref<216x512xbf16, #tpu.memory_space<vmem>>, vector<8x512xbf16>,
    %c496_i32 = arith.constant 496 : i32
    %72 = tpu.dynamic_rotate %27 by %c496_i32 dim 1 : vector<8x512xf32>, i32 -> vector<8x512xf32>
    %c7 = arith.constant 7 : index
    %c0_35 = arith.constant 0 : index
    %c0_36 = arith.constant 0 : index
    %73 = vector.load %arg1[%c7, %c0_35, %c0_36] : memref<9x1x512xf32, #tpu.memory_space<vmem>>, vector<1x1x512xf32>
    %74 = vector.shape_cast %73 : vector<1x1x512xf32> to vector<1x512xf32>
    %75 = vector.broadcast %74 : vector<1x512xf32> to vector<8x512xf32>
    %76 = arith.mulf %72, %75 : vector<8x512xf32>
    %77 = arith.truncf %76 : vector<8x512xf32> to vector<8x512xbf16>
    %c56 = arith.constant 56 : index
    %c0_37 = arith.constant 0 : index
    %78 = vector.load %arg13[%c56, %c0_37] : memref<216x512xbf16, #tpu.memory_space<vmem>>, vector<8x512xbf16>
    tpu.vector_store %arg13[%c56, %c0_37], %77 {strides = array<i32>} : memref<216x512xbf16, #tpu.memory_space<vmem>>, vector<8x512xbf16>,
    %c495_i32 = arith.constant 495 : i32
    %79 = tpu.dynamic_rotate %27 by %c495_i32 dim 1 : vector<8x512xf32>, i32 -> vector<8x512xf32>
    %c8_38 = arith.constant 8 : index
    %c0_39 = arith.constant 0 : index
    %c0_40 = arith.constant 0 : index
    %80 = vector.load %arg1[%c8_38, %c0_39, %c0_40] : memref<9x1x512xf32, #tpu.memory_space<vmem>>, vector<1x1x512xf32>
    %81 = vector.shape_cast %80 : vector<1x1x512xf32> to vector<1x512xf32>
    %82 = vector.broadcast %81 : vector<1x512xf32> to vector<8x512xf32>
    %83 = arith.mulf %79, %82 : vector<8x512xf32>
    %84 = arith.truncf %83 : vector<8x512xf32> to vector<8x512xbf16>
    %c64 = arith.constant 64 : index
    %c0_41 = arith.constant 0 : index
    %85 = vector.load %arg13[%c64, %c0_41] : memref<216x512xbf16, #tpu.memory_space<vmem>>, vector<8x512xbf16>
    tpu.vector_store %arg13[%c64, %c0_41], %84 {strides = array<i32>} : memref<216x512xbf16, #tpu.memory_space<vmem>>, vector<8x512xbf16>,
    %c0_42 = arith.constant 0 : index
    %c0_43 = arith.constant 0 : index
    %86 = vector.load %arg4[%c0_42, %c0_43] : memref<8x72xbf16, #tpu.memory_space<vmem>>, vector<8x72xbf16>
    %c0_44 = arith.constant 0 : index
    %c0_45 = arith.constant 0 : index
    %87 = vector.load %arg13[%c0_44, %c0_45] : memref<216x512xbf16, #tpu.memory_space<vmem>>, vector<72x512xbf16>
    %cst_46 = arith.constant dense<0.000000e+00> : vector<8x512xf32>
    %88 = tpu.matmul %86, %87, %cst_46 {dimension_numbers = #tpu.dot_dimension_numbers<[1], [0], [0], [1], [0, 0, 1, 1], [], []>} : vector<8x72xbf16>, vector<72x512xbf16>, vector<8x512xf32> -> vector<8x512xf32>
    %cst_47 = arith.constant dense<0.000000e+00> : vector<8xf32>
    %89 = vector.multi_reduction <add>, %88, %cst_47 [1] : vector<8x512xf32> to vector<8xf32>
    %90 = vector.shape_cast %89 : vector<8xf32> to vector<8x1xf32>
    %cst_48 = arith.constant 0.001953125 : f32
    %91 = vector.broadcast %cst_48 : f32 to vector<8x1xf32>
    %92 = arith.mulf %90, %91 : vector<8x1xf32>
    %93 = vector.broadcast %92 : vector<8x1xf32> to vector<8x512xf32>
    %94 = arith.subf %88, %93 : vector<8x512xf32>
    %95 = arith.mulf %94, %94 : vector<8x512xf32>
    %cst_49 = arith.constant dense<0.000000e+00> : vector<8xf32>
    %96 = vector.multi_reduction <add>, %95, %cst_49 [1] : vector<8x512xf32> to vector<8xf32>
    %97 = vector.shape_cast %96 : vector<8xf32> to vector<8x1xf32>
    %cst_50 = arith.constant 0.001953125 : f32
    %98 = vector.broadcast %cst_50 : f32 to vector<8x1xf32>
    %99 = arith.mulf %97, %98 : vector<8x1xf32>
    %c8_51 = arith.constant 8 : index
    %c0_52 = arith.constant 0 : index
    %100 = vector.load %arg14[%c8_51, %c0_52] : memref<24x1xf32, #tpu.memory_space<vmem>>, vector<8x1xf32>
    tpu.vector_store %arg14[%c8_51, %c0_52], %92 {strides = array<i32>} : memref<24x1xf32, #tpu.memory_space<vmem>>, vector<8x1xf32>,
    %cst_53 = arith.constant 9.99999974E-6 : f32
    %101 = vector.broadcast %cst_53 : f32 to vector<8x1xf32>
    %102 = arith.addf %99, %101 : vector<8x1xf32>
    %103 = math.rsqrt %102 : vector<8x1xf32>
    %c8_54 = arith.constant 8 : index
    %c0_55 = arith.constant 0 : index
    %104 = vector.load %arg15[%c8_54, %c0_55] : memref<24x1xf32, #tpu.memory_space<vmem>>, vector<8x1xf32>
    tpu.vector_store %arg15[%c8_54, %c0_55], %103 {strides = array<i32>} : memref<24x1xf32, #tpu.memory_space<vmem>>, vector<8x1xf32>,
    %c0_56 = arith.constant 0 : index
    %c0_57 = arith.constant 0 : index
    %c0_58 = arith.constant 0 : index
    %105 = vector.load %arg12[%c0_56, %c0_57, %c0_58] : memref<2x8x512xf32, #tpu.memory_space<vmem>>, vector<1x8x512xf32>
    %106 = vector.shape_cast %105 : vector<1x8x512xf32> to vector<8x512xf32>
    %107 = vector.shape_cast %88 : vector<8x512xf32> to vector<1x8x512xf32>
    tpu.vector_store %arg12[%c0_56, %c0_57, %c0_58], %107 {strides = array<i32>} : memref<2x8x512xf32, #tpu.memory_space<vmem>>, vector<1x8x512xf32>,
    %c0_59 = arith.constant 0 : index
    %c0_60 = arith.constant 0 : index
    %108 = vector.load %arg0[%c0_59, %c0_60] : memref<8x512xf32, #tpu.memory_space<vmem>>, vector<8x512xf32>
    %c0_61 = arith.constant 0 : index
    %c0_62 = arith.constant 0 : index
    %109 = vector.load %arg14[%c0_61, %c0_62] : memref<24x1xf32, #tpu.memory_space<vmem>>, vector<8x1xf32>
    %c0_63 = arith.constant 0 : index
    %c0_64 = arith.constant 0 : index
    %110 = vector.load %arg15[%c0_63, %c0_64] : memref<24x1xf32, #tpu.memory_space<vmem>>, vector<8x1xf32>
    %c0_65 = arith.constant 0 : index
    %c0_66 = arith.constant 0 : index
    %111 = vector.load %arg5[%c0_65, %c0_66] : memref<16x1xf32, #tpu.memory_space<vmem>>, vector<8x1xf32>
    %112 = arith.mulf %111, %110 : vector<8x1xf32>
    %c0_67 = arith.constant 0 : index
    %c0_68 = arith.constant 0 : index
    %113 = vector.load %arg6[%c0_67, %c0_68] : memref<16x1xf32, #tpu.memory_space<vmem>>, vector<8x1xf32>
    %114 = arith.mulf %109, %112 : vector<8x1xf32>
    %115 = arith.subf %113, %114 : vector<8x1xf32>
    %116 = vector.broadcast %112 : vector<8x1xf32> to vector<8x512xf32>
    %117 = arith.mulf %108, %116 : vector<8x512xf32>
    %118 = vector.broadcast %115 : vector<8x1xf32> to vector<8x512xf32>
    %119 = arith.addf %117, %118 : vector<8x512xf32>
    %cst_69 = arith.constant 0.000000e+00 : f32
    %120 = vector.broadcast %cst_69 : f32 to vector<8x512xf32>
    %121 = arith.maximumf %119, %120 : vector<8x512xf32>
    %c17_i32_70 = arith.constant 17 : i32
    %122 = tpu.dynamic_rotate %121 by %c17_i32_70 dim 1 : vector<8x512xf32>, i32 -> vector<8x512xf32>
    %c0_71 = arith.constant 0 : index
    %c0_72 = arith.constant 0 : index
    %c0_73 = arith.constant 0 : index
    %123 = vector.load %arg1[%c0_71, %c0_72, %c0_73] : memref<9x1x512xf32, #tpu.memory_space<vmem>>, vector<1x1x512xf32>
    %124 = vector.shape_cast %123 : vector<1x1x512xf32> to vector<1x512xf32>
    %125 = vector.broadcast %124 : vector<1x512xf32> to vector<8x512xf32>
    %126 = arith.mulf %122, %125 : vector<8x512xf32>
    %127 = arith.truncf %126 : vector<8x512xf32> to vector<8x512xbf16>
    %c0_74 = arith.constant 0 : index
    %c0_75 = arith.constant 0 : index
    %128 = vector.load %arg13[%c0_74, %c0_75] : memref<216x512xbf16, #tpu.memory_space<vmem>>, vector<8x512xbf16>
    tpu.vector_store %arg13[%c0_74, %c0_75], %127 {strides = array<i32>} : memref<216x512xbf16, #tpu.memory_space<vmem>>, vector<8x512xbf16>,
    %c16_i32_76 = arith.constant 16 : i32
    %129 = tpu.dynamic_rotate %121 by %c16_i32_76 dim 1 : vector<8x512xf32>, i32 -> vector<8x512xf32>
    %c1_77 = arith.constant 1 : index
    %c0_78 = arith.constant 0 : index
    %c0_79 = arith.constant 0 : index
    %130 = vector.load %arg1[%c1_77, %c0_78, %c0_79] : memref<9x1x512xf32, #tpu.memory_space<vmem>>, vector<1x1x512xf32>
    %131 = vector.shape_cast %130 : vector<1x1x512xf32> to vector<1x512xf32>
    %132 = vector.broadcast %131 : vector<1x512xf32> to vector<8x512xf32>
    %133 = arith.mulf %129, %132 : vector<8x512xf32>
    %134 = arith.truncf %133 : vector<8x512xf32> to vector<8x512xbf16>
    %c8_80 = arith.constant 8 : index
    %c0_81 = arith.constant 0 : index
    %135 = vector.load %arg13[%c8_80, %c0_81] : memref<216x512xbf16, #tpu.memory_space<vmem>>, vector<8x512xbf16>
    tpu.vector_store %arg13[%c8_80, %c0_81], %134 {strides = array<i32>} : memref<216x512xbf16, #tpu.memory_space<vmem>>, vector<8x512xbf16>,
    %c15_i32_82 = arith.constant 15 : i32
    %136 = tpu.dynamic_rotate %121 by %c15_i32_82 dim 1 : vector<8x512xf32>, i32 -> vector<8x512xf32>
    %c2_83 = arith.constant 2 : index
    %c0_84 = arith.constant 0 : index
    %c0_85 = arith.constant 0 : index
    %137 = vector.load %arg1[%c2_83, %c0_84, %c0_85] : memref<9x1x512xf32, #tpu.memory_space<vmem>>, vector<1x1x512xf32>
    %138 = vector.shape_cast %137 : vector<1x1x512xf32> to vector<1x512xf32>
    %139 = vector.broadcast %138 : vector<1x512xf32> to vector<8x512xf32>
    %140 = arith.mulf %136, %139 : vector<8x512xf32>
    %141 = arith.truncf %140 : vector<8x512xf32> to vector<8x512xbf16>
    %c16_86 = arith.constant 16 : index
    %c0_87 = arith.constant 0 : index
    %142 = vector.load %arg13[%c16_86, %c0_87] : memref<216x512xbf16, #tpu.memory_space<vmem>>, vector<8x512xbf16>
    tpu.vector_store %arg13[%c16_86, %c0_87], %141 {strides = array<i32>} : memref<216x512xbf16, #tpu.memory_space<vmem>>, vector<8x512xbf16>,
    %c1_i32_88 = arith.constant 1 : i32
    %143 = tpu.dynamic_rotate %121 by %c1_i32_88 dim 1 : vector<8x512xf32>, i32 -> vector<8x512xf32>
    %c3_89 = arith.constant 3 : index
    %c0_90 = arith.constant 0 : index
    %c0_91 = arith.constant 0 : index
    %144 = vector.load %arg1[%c3_89, %c0_90, %c0_91] : memref<9x1x512xf32, #tpu.memory_space<vmem>>, vector<1x1x512xf32>
    %145 = vector.shape_cast %144 : vector<1x1x512xf32> to vector<1x512xf32>
    %146 = vector.broadcast %145 : vector<1x512xf32> to vector<8x512xf32>
    %147 = arith.mulf %143, %146 : vector<8x512xf32>
    %148 = arith.truncf %147 : vector<8x512xf32> to vector<8x512xbf16>
    %c24_92 = arith.constant 24 : index
    %c0_93 = arith.constant 0 : index
    %149 = vector.load %arg13[%c24_92, %c0_93] : memref<216x512xbf16, #tpu.memory_space<vmem>>, vector<8x512xbf16>
    tpu.vector_store %arg13[%c24_92, %c0_93], %148 {strides = array<i32>} : memref<216x512xbf16, #tpu.memory_space<vmem>>, vector<8x512xbf16>,
    %150 = arith.truncf %121 : vector<8x512xf32> to vector<8x512xbf16>
    %c32_94 = arith.constant 32 : index
    %c0_95 = arith.constant 0 : index
    %151 = vector.load %arg13[%c32_94, %c0_95] : memref<216x512xbf16, #tpu.memory_space<vmem>>, vector<8x512xbf16>
    tpu.vector_store %arg13[%c32_94, %c0_95], %150 {strides = array<i32>} : memref<216x512xbf16, #tpu.memory_space<vmem>>, vector<8x512xbf16>,
    %c511_i32_96 = arith.constant 511 : i32
    %152 = tpu.dynamic_rotate %121 by %c511_i32_96 dim 1 : vector<8x512xf32>, i32 -> vector<8x512xf32>
    %c5_97 = arith.constant 5 : index
    %c0_98 = arith.constant 0 : index
    %c0_99 = arith.constant 0 : index
    %153 = vector.load %arg1[%c5_97, %c0_98, %c0_99] : memref<9x1x512xf32, #tpu.memory_space<vmem>>, vector<1x1x512xf32>
    %154 = vector.shape_cast %153 : vector<1x1x512xf32> to vector<1x512xf32>
    %155 = vector.broadcast %154 : vector<1x512xf32> to vector<8x512xf32>
    %156 = arith.mulf %152, %155 : vector<8x512xf32>
    %157 = arith.truncf %156 : vector<8x512xf32> to vector<8x512xbf16>
    %c40_100 = arith.constant 40 : index
    %c0_101 = arith.constant 0 : index
    %158 = vector.load %arg13[%c40_100, %c0_101] : memref<216x512xbf16, #tpu.memory_space<vmem>>, vector<8x512xbf16>
    tpu.vector_store %arg13[%c40_100, %c0_101], %157 {strides = array<i32>} : memref<216x512xbf16, #tpu.memory_space<vmem>>, vector<8x512xbf16>,
    %c497_i32_102 = arith.constant 497 : i32
    %159 = tpu.dynamic_rotate %121 by %c497_i32_102 dim 1 : vector<8x512xf32>, i32 -> vector<8x512xf32>
    %c6_103 = arith.constant 6 : index
    %c0_104 = arith.constant 0 : index
    %c0_105 = arith.constant 0 : index
    %160 = vector.load %arg1[%c6_103, %c0_104, %c0_105] : memref<9x1x512xf32, #tpu.memory_space<vmem>>, vector<1x1x512xf32>
    %161 = vector.shape_cast %160 : vector<1x1x512xf32> to vector<1x512xf32>
    %162 = vector.broadcast %161 : vector<1x512xf32> to vector<8x512xf32>
    %163 = arith.mulf %159, %162 : vector<8x512xf32>
    %164 = arith.truncf %163 : vector<8x512xf32> to vector<8x512xbf16>
    %c48_106 = arith.constant 48 : index
    %c0_107 = arith.constant 0 : index
    %165 = vector.load %arg13[%c48_106, %c0_107] : memref<216x512xbf16, #tpu.memory_space<vmem>>, vector<8x512xbf16>
    tpu.vector_store %arg13[%c48_106, %c0_107], %164 {strides = array<i32>} : memref<216x512xbf16, #tpu.memory_space<vmem>>, vector<8x512xbf16>,
    %c496_i32_108 = arith.constant 496 : i32
    %166 = tpu.dynamic_rotate %121 by %c496_i32_108 dim 1 : vector<8x512xf32>, i32 -> vector<8x512xf32>
    %c7_109 = arith.constant 7 : index
    %c0_110 = arith.constant 0 : index
    %c0_111 = arith.constant 0 : index
    %167 = vector.load %arg1[%c7_109, %c0_110, %c0_111] : memref<9x1x512xf32, #tpu.memory_space<vmem>>, vector<1x1x512xf32>
    %168 = vector.shape_cast %167 : vector<1x1x512xf32> to vector<1x512xf32>
    %169 = vector.broadcast %168 : vector<1x512xf32> to vector<8x512xf32>
    %170 = arith.mulf %166, %169 : vector<8x512xf32>
    %171 = arith.truncf %170 : vector<8x512xf32> to vector<8x512xbf16>
    %c56_112 = arith.constant 56 : index
    %c0_113 = arith.constant 0 : index
    %172 = vector.load %arg13[%c56_112, %c0_113] : memref<216x512xbf16, #tpu.memory_space<vmem>>, vector<8x512xbf16>
    tpu.vector_store %arg13[%c56_112, %c0_113], %171 {strides = array<i32>} : memref<216x512xbf16, #tpu.memory_space<vmem>>, vector<8x512xbf16>,
    %c495_i32_114 = arith.constant 495 : i32
    %173 = tpu.dynamic_rotate %121 by %c495_i32_114 dim 1 : vector<8x512xf32>, i32 -> vector<8x512xf32>
    %c8_115 = arith.constant 8 : index
    %c0_116 = arith.constant 0 : index
    %c0_117 = arith.constant 0 : index
    %174 = vector.load %arg1[%c8_115, %c0_116, %c0_117] : memref<9x1x512xf32, #tpu.memory_space<vmem>>, vector<1x1x512xf32>
    %175 = vector.shape_cast %174 : vector<1x1x512xf32> to vector<1x512xf32>
    %176 = vector.broadcast %175 : vector<1x512xf32> to vector<8x512xf32>
    %177 = arith.mulf %173, %176 : vector<8x512xf32>
    %178 = arith.truncf %177 : vector<8x512xf32> to vector<8x512xbf16>
    %c64_118 = arith.constant 64 : index
    %c0_119 = arith.constant 0 : index
    %179 = vector.load %arg13[%c64_118, %c0_119] : memref<216x512xbf16, #tpu.memory_space<vmem>>, vector<8x512xbf16>
    tpu.vector_store %arg13[%c64_118, %c0_119], %178 {strides = array<i32>} : memref<216x512xbf16, #tpu.memory_space<vmem>>, vector<8x512xbf16>,
    %c0_120 = arith.constant 0 : index
    %c0_121 = arith.constant 0 : index
    %c0_122 = arith.constant 0 : index
    %180 = vector.load %arg12[%c0_120, %c0_121, %c0_122] : memref<2x8x512xf32, #tpu.memory_space<vmem>>, vector<1x8x512xf32>
    %181 = vector.shape_cast %180 : vector<1x8x512xf32> to vector<8x512xf32>
    %c8_123 = arith.constant 8 : index
    %c0_124 = arith.constant 0 : index
    %182 = vector.load %arg14[%c8_123, %c0_124] : memref<24x1xf32, #tpu.memory_space<vmem>>, vector<8x1xf32>
    %c8_125 = arith.constant 8 : index
    %c0_126 = arith.constant 0 : index
    %183 = vector.load %arg15[%c8_125, %c0_126] : memref<24x1xf32, #tpu.memory_space<vmem>>, vector<8x1xf32>
    %c8_127 = arith.constant 8 : index
    %c0_128 = arith.constant 0 : index
    %184 = vector.load %arg5[%c8_127, %c0_128] : memref<16x1xf32, #tpu.memory_space<vmem>>, vector<8x1xf32>
    %185 = arith.mulf %184, %183 : vector<8x1xf32>
    %c8_129 = arith.constant 8 : index
    %c0_130 = arith.constant 0 : index
    %186 = vector.load %arg6[%c8_129, %c0_130] : memref<16x1xf32, #tpu.memory_space<vmem>>, vector<8x1xf32>
    %187 = arith.mulf %182, %185 : vector<8x1xf32>
    %188 = arith.subf %186, %187 : vector<8x1xf32>
    %189 = vector.broadcast %185 : vector<8x1xf32> to vector<8x512xf32>
    %190 = arith.mulf %181, %189 : vector<8x512xf32>
    %191 = vector.broadcast %188 : vector<8x1xf32> to vector<8x512xf32>
    %192 = arith.addf %190, %191 : vector<8x512xf32>
    %cst_131 = arith.constant 0.000000e+00 : f32
    %193 = vector.broadcast %cst_131 : f32 to vector<8x512xf32>
    %194 = arith.maximumf %192, %193 : vector<8x512xf32>
    %c17_i32_132 = arith.constant 17 : i32
    %195 = tpu.dynamic_rotate %194 by %c17_i32_132 dim 1 : vector<8x512xf32>, i32 -> vector<8x512xf32>
    %c0_133 = arith.constant 0 : index
    %c0_134 = arith.constant 0 : index
    %c0_135 = arith.constant 0 : index
    %196 = vector.load %arg1[%c0_133, %c0_134, %c0_135] : memref<9x1x512xf32, #tpu.memory_space<vmem>>, vector<1x1x512xf32>
    %197 = vector.shape_cast %196 : vector<1x1x512xf32> to vector<1x512xf32>
    %198 = vector.broadcast %197 : vector<1x512xf32> to vector<8x512xf32>
    %199 = arith.mulf %195, %198 : vector<8x512xf32>
    %200 = arith.truncf %199 : vector<8x512xf32> to vector<8x512xbf16>
    %c72 = arith.constant 72 : index
    %c0_136 = arith.constant 0 : index
    %201 = vector.load %arg13[%c72, %c0_136] : memref<216x512xbf16, #tpu.memory_space<vmem>>, vector<8x512xbf16>
    tpu.vector_store %arg13[%c72, %c0_136], %200 {strides = array<i32>} : memref<216x512xbf16, #tpu.memory_space<vmem>>, vector<8x512xbf16>,
    %c16_i32_137 = arith.constant 16 : i32
    %202 = tpu.dynamic_rotate %194 by %c16_i32_137 dim 1 : vector<8x512xf32>, i32 -> vector<8x512xf32>
    %c1_138 = arith.constant 1 : index
    %c0_139 = arith.constant 0 : index
    %c0_140 = arith.constant 0 : index
    %203 = vector.load %arg1[%c1_138, %c0_139, %c0_140] : memref<9x1x512xf32, #tpu.memory_space<vmem>>, vector<1x1x512xf32>
    %204 = vector.shape_cast %203 : vector<1x1x512xf32> to vector<1x512xf32>
    %205 = vector.broadcast %204 : vector<1x512xf32> to vector<8x512xf32>
    %206 = arith.mulf %202, %205 : vector<8x512xf32>
    %207 = arith.truncf %206 : vector<8x512xf32> to vector<8x512xbf16>
    %c80 = arith.constant 80 : index
    %c0_141 = arith.constant 0 : index
    %208 = vector.load %arg13[%c80, %c0_141] : memref<216x512xbf16, #tpu.memory_space<vmem>>, vector<8x512xbf16>
    tpu.vector_store %arg13[%c80, %c0_141], %207 {strides = array<i32>} : memref<216x512xbf16, #tpu.memory_space<vmem>>, vector<8x512xbf16>,
    %c15_i32_142 = arith.constant 15 : i32
    %209 = tpu.dynamic_rotate %194 by %c15_i32_142 dim 1 : vector<8x512xf32>, i32 -> vector<8x512xf32>
    %c2_143 = arith.constant 2 : index
    %c0_144 = arith.constant 0 : index
    %c0_145 = arith.constant 0 : index
    %210 = vector.load %arg1[%c2_143, %c0_144, %c0_145] : memref<9x1x512xf32, #tpu.memory_space<vmem>>, vector<1x1x512xf32>
    %211 = vector.shape_cast %210 : vector<1x1x512xf32> to vector<1x512xf32>
    %212 = vector.broadcast %211 : vector<1x512xf32> to vector<8x512xf32>
    %213 = arith.mulf %209, %212 : vector<8x512xf32>
    %214 = arith.truncf %213 : vector<8x512xf32> to vector<8x512xbf16>
    %c88 = arith.constant 88 : index
    %c0_146 = arith.constant 0 : index
    %215 = vector.load %arg13[%c88, %c0_146] : memref<216x512xbf16, #tpu.memory_space<vmem>>, vector<8x512xbf16>
    tpu.vector_store %arg13[%c88, %c0_146], %214 {strides = array<i32>} : memref<216x512xbf16, #tpu.memory_space<vmem>>, vector<8x512xbf16>,
    %c1_i32_147 = arith.constant 1 : i32
    %216 = tpu.dynamic_rotate %194 by %c1_i32_147 dim 1 : vector<8x512xf32>, i32 -> vector<8x512xf32>
    %c3_148 = arith.constant 3 : index
    %c0_149 = arith.constant 0 : index
    %c0_150 = arith.constant 0 : index
    %217 = vector.load %arg1[%c3_148, %c0_149, %c0_150] : memref<9x1x512xf32, #tpu.memory_space<vmem>>, vector<1x1x512xf32>
    %218 = vector.shape_cast %217 : vector<1x1x512xf32> to vector<1x512xf32>
    %219 = vector.broadcast %218 : vector<1x512xf32> to vector<8x512xf32>
    %220 = arith.mulf %216, %219 : vector<8x512xf32>
    %221 = arith.truncf %220 : vector<8x512xf32> to vector<8x512xbf16>
    %c96 = arith.constant 96 : index
    %c0_151 = arith.constant 0 : index
    %222 = vector.load %arg13[%c96, %c0_151] : memref<216x512xbf16, #tpu.memory_space<vmem>>, vector<8x512xbf16>
    tpu.vector_store %arg13[%c96, %c0_151], %221 {strides = array<i32>} : memref<216x512xbf16, #tpu.memory_space<vmem>>, vector<8x512xbf16>,
    %223 = arith.truncf %194 : vector<8x512xf32> to vector<8x512xbf16>
    %c104 = arith.constant 104 : index
    %c0_152 = arith.constant 0 : index
    %224 = vector.load %arg13[%c104, %c0_152] : memref<216x512xbf16, #tpu.memory_space<vmem>>, vector<8x512xbf16>
    tpu.vector_store %arg13[%c104, %c0_152], %223 {strides = array<i32>} : memref<216x512xbf16, #tpu.memory_space<vmem>>, vector<8x512xbf16>,
    %c511_i32_153 = arith.constant 511 : i32
    %225 = tpu.dynamic_rotate %194 by %c511_i32_153 dim 1 : vector<8x512xf32>, i32 -> vector<8x512xf32>
    %c5_154 = arith.constant 5 : index
    %c0_155 = arith.constant 0 : index
    %c0_156 = arith.constant 0 : index
    %226 = vector.load %arg1[%c5_154, %c0_155, %c0_156] : memref<9x1x512xf32, #tpu.memory_space<vmem>>, vector<1x1x512xf32>
    %227 = vector.shape_cast %226 : vector<1x1x512xf32> to vector<1x512xf32>
    %228 = vector.broadcast %227 : vector<1x512xf32> to vector<8x512xf32>
    %229 = arith.mulf %225, %228 : vector<8x512xf32>
    %230 = arith.truncf %229 : vector<8x512xf32> to vector<8x512xbf16>
    %c112 = arith.constant 112 : index
    %c0_157 = arith.constant 0 : index
    %231 = vector.load %arg13[%c112, %c0_157] : memref<216x512xbf16, #tpu.memory_space<vmem>>, vector<8x512xbf16>
    tpu.vector_store %arg13[%c112, %c0_157], %230 {strides = array<i32>} : memref<216x512xbf16, #tpu.memory_space<vmem>>, vector<8x512xbf16>,
    %c497_i32_158 = arith.constant 497 : i32
    %232 = tpu.dynamic_rotate %194 by %c497_i32_158 dim 1 : vector<8x512xf32>, i32 -> vector<8x512xf32>
    %c6_159 = arith.constant 6 : index
    %c0_160 = arith.constant 0 : index
    %c0_161 = arith.constant 0 : index
    %233 = vector.load %arg1[%c6_159, %c0_160, %c0_161] : memref<9x1x512xf32, #tpu.memory_space<vmem>>, vector<1x1x512xf32>
    %234 = vector.shape_cast %233 : vector<1x1x512xf32> to vector<1x512xf32>
    %235 = vector.broadcast %234 : vector<1x512xf32> to vector<8x512xf32>
    %236 = arith.mulf %232, %235 : vector<8x512xf32>
    %237 = arith.truncf %236 : vector<8x512xf32> to vector<8x512xbf16>
    %c120 = arith.constant 120 : index
    %c0_162 = arith.constant 0 : index
    %238 = vector.load %arg13[%c120, %c0_162] : memref<216x512xbf16, #tpu.memory_space<vmem>>, vector<8x512xbf16>
    tpu.vector_store %arg13[%c120, %c0_162], %237 {strides = array<i32>} : memref<216x512xbf16, #tpu.memory_space<vmem>>, vector<8x512xbf16>,
    %c496_i32_163 = arith.constant 496 : i32
    %239 = tpu.dynamic_rotate %194 by %c496_i32_163 dim 1 : vector<8x512xf32>, i32 -> vector<8x512xf32>
    %c7_164 = arith.constant 7 : index
    %c0_165 = arith.constant 0 : index
    %c0_166 = arith.constant 0 : index
    %240 = vector.load %arg1[%c7_164, %c0_165, %c0_166] : memref<9x1x512xf32, #tpu.memory_space<vmem>>, vector<1x1x512xf32>
    %241 = vector.shape_cast %240 : vector<1x1x512xf32> to vector<1x512xf32>
    %242 = vector.broadcast %241 : vector<1x512xf32> to vector<8x512xf32>
    %243 = arith.mulf %239, %242 : vector<8x512xf32>
    %244 = arith.truncf %243 : vector<8x512xf32> to vector<8x512xbf16>
    %c128 = arith.constant 128 : index
    %c0_167 = arith.constant 0 : index
    %245 = vector.load %arg13[%c128, %c0_167] : memref<216x512xbf16, #tpu.memory_space<vmem>>, vector<8x512xbf16>
    tpu.vector_store %arg13[%c128, %c0_167], %244 {strides = array<i32>} : memref<216x512xbf16, #tpu.memory_space<vmem>>, vector<8x512xbf16>,
    %c495_i32_168 = arith.constant 495 : i32
    %246 = tpu.dynamic_rotate %194 by %c495_i32_168 dim 1 : vector<8x512xf32>, i32 -> vector<8x512xf32>
    %c8_169 = arith.constant 8 : index
    %c0_170 = arith.constant 0 : index
    %c0_171 = arith.constant 0 : index
    %247 = vector.load %arg1[%c8_169, %c0_170, %c0_171] : memref<9x1x512xf32, #tpu.memory_space<vmem>>, vector<1x1x512xf32>
    %248 = vector.shape_cast %247 : vector<1x1x512xf32> to vector<1x512xf32>
    %249 = vector.broadcast %248 : vector<1x512xf32> to vector<8x512xf32>
    %250 = arith.mulf %246, %249 : vector<8x512xf32>
    %251 = arith.truncf %250 : vector<8x512xf32> to vector<8x512xbf16>
    %c136 = arith.constant 136 : index
    %c0_172 = arith.constant 0 : index
    %252 = vector.load %arg13[%c136, %c0_172] : memref<216x512xbf16, #tpu.memory_space<vmem>>, vector<8x512xbf16>
    tpu.vector_store %arg13[%c136, %c0_172], %251 {strides = array<i32>} : memref<216x512xbf16, #tpu.memory_space<vmem>>, vector<8x512xbf16>,
    %c0_173 = arith.constant 0 : index
    %c0_174 = arith.constant 0 : index
    %253 = vector.load %arg7[%c0_173, %c0_174] : memref<8x144xbf16, #tpu.memory_space<vmem>>, vector<8x144xbf16>
    %c0_175 = arith.constant 0 : index
    %c0_176 = arith.constant 0 : index
    %254 = vector.load %arg13[%c0_175, %c0_176] : memref<216x512xbf16, #tpu.memory_space<vmem>>, vector<144x512xbf16>
    %cst_177 = arith.constant dense<0.000000e+00> : vector<8x512xf32>
    %255 = tpu.matmul %253, %254, %cst_177 {dimension_numbers = #tpu.dot_dimension_numbers<[1], [0], [0], [1], [0, 0, 1, 1], [], []>} : vector<8x144xbf16>, vector<144x512xbf16>, vector<8x512xf32> -> vector<8x512xf32>
    %cst_178 = arith.constant dense<0.000000e+00> : vector<8xf32>
    %256 = vector.multi_reduction <add>, %255, %cst_178 [1] : vector<8x512xf32> to vector<8xf32>
    %257 = vector.shape_cast %256 : vector<8xf32> to vector<8x1xf32>
    %cst_179 = arith.constant 0.001953125 : f32
    %258 = vector.broadcast %cst_179 : f32 to vector<8x1xf32>
    %259 = arith.mulf %257, %258 : vector<8x1xf32>
    %260 = vector.broadcast %259 : vector<8x1xf32> to vector<8x512xf32>
    %261 = arith.subf %255, %260 : vector<8x512xf32>
    %262 = arith.mulf %261, %261 : vector<8x512xf32>
    %cst_180 = arith.constant dense<0.000000e+00> : vector<8xf32>
    %263 = vector.multi_reduction <add>, %262, %cst_180 [1] : vector<8x512xf32> to vector<8xf32>
    %264 = vector.shape_cast %263 : vector<8xf32> to vector<8x1xf32>
    %cst_181 = arith.constant 0.001953125 : f32
    %265 = vector.broadcast %cst_181 : f32 to vector<8x1xf32>
    %266 = arith.mulf %264, %265 : vector<8x1xf32>
    %c16_182 = arith.constant 16 : index
    %c0_183 = arith.constant 0 : index
    %267 = vector.load %arg14[%c16_182, %c0_183] : memref<24x1xf32, #tpu.memory_space<vmem>>, vector<8x1xf32>
    tpu.vector_store %arg14[%c16_182, %c0_183], %259 {strides = array<i32>} : memref<24x1xf32, #tpu.memory_space<vmem>>, vector<8x1xf32>,
    %cst_184 = arith.constant 9.99999974E-6 : f32
    %268 = vector.broadcast %cst_184 : f32 to vector<8x1xf32>
    %269 = arith.addf %266, %268 : vector<8x1xf32>
    %270 = math.rsqrt %269 : vector<8x1xf32>
    %c16_185 = arith.constant 16 : index
    %c0_186 = arith.constant 0 : index
    %271 = vector.load %arg15[%c16_185, %c0_186] : memref<24x1xf32, #tpu.memory_space<vmem>>, vector<8x1xf32>
    tpu.vector_store %arg15[%c16_185, %c0_186], %270 {strides = array<i32>} : memref<24x1xf32, #tpu.memory_space<vmem>>, vector<8x1xf32>,
    %c1_187 = arith.constant 1 : index
    %c0_188 = arith.constant 0 : index
    %c0_189 = arith.constant 0 : index
    %272 = vector.load %arg12[%c1_187, %c0_188, %c0_189] : memref<2x8x512xf32, #tpu.memory_space<vmem>>, vector<1x8x512xf32>
    %273 = vector.shape_cast %272 : vector<1x8x512xf32> to vector<8x512xf32>
    %274 = vector.shape_cast %255 : vector<8x512xf32> to vector<1x8x512xf32>
    tpu.vector_store %arg12[%c1_187, %c0_188, %c0_189], %274 {strides = array<i32>} : memref<2x8x512xf32, #tpu.memory_space<vmem>>, vector<1x8x512xf32>,
    %c0_190 = arith.constant 0 : index
    %c0_191 = arith.constant 0 : index
    %275 = vector.load %arg0[%c0_190, %c0_191] : memref<8x512xf32, #tpu.memory_space<vmem>>, vector<8x512xf32>
    %c0_192 = arith.constant 0 : index
    %c0_193 = arith.constant 0 : index
    %276 = vector.load %arg14[%c0_192, %c0_193] : memref<24x1xf32, #tpu.memory_space<vmem>>, vector<8x1xf32>
    %c0_194 = arith.constant 0 : index
    %c0_195 = arith.constant 0 : index
    %277 = vector.load %arg15[%c0_194, %c0_195] : memref<24x1xf32, #tpu.memory_space<vmem>>, vector<8x1xf32>
    %c0_196 = arith.constant 0 : index
    %c0_197 = arith.constant 0 : index
    %278 = vector.load %arg8[%c0_196, %c0_197] : memref<24x1xf32, #tpu.memory_space<vmem>>, vector<8x1xf32>
    %279 = arith.mulf %278, %277 : vector<8x1xf32>
    %c0_198 = arith.constant 0 : index
    %c0_199 = arith.constant 0 : index
    %280 = vector.load %arg9[%c0_198, %c0_199] : memref<24x1xf32, #tpu.memory_space<vmem>>, vector<8x1xf32>
    %281 = arith.mulf %276, %279 : vector<8x1xf32>
    %282 = arith.subf %280, %281 : vector<8x1xf32>
    %283 = vector.broadcast %279 : vector<8x1xf32> to vector<8x512xf32>
    %284 = arith.mulf %275, %283 : vector<8x512xf32>
    %285 = vector.broadcast %282 : vector<8x1xf32> to vector<8x512xf32>
    %286 = arith.addf %284, %285 : vector<8x512xf32>
    %cst_200 = arith.constant 0.000000e+00 : f32
    %287 = vector.broadcast %cst_200 : f32 to vector<8x512xf32>
    %288 = arith.maximumf %286, %287 : vector<8x512xf32>
    %c17_i32_201 = arith.constant 17 : i32
    %289 = tpu.dynamic_rotate %288 by %c17_i32_201 dim 1 : vector<8x512xf32>, i32 -> vector<8x512xf32>
    %c0_202 = arith.constant 0 : index
    %c0_203 = arith.constant 0 : index
    %c0_204 = arith.constant 0 : index
    %290 = vector.load %arg1[%c0_202, %c0_203, %c0_204] : memref<9x1x512xf32, #tpu.memory_space<vmem>>, vector<1x1x512xf32>
    %291 = vector.shape_cast %290 : vector<1x1x512xf32> to vector<1x512xf32>
    %292 = vector.broadcast %291 : vector<1x512xf32> to vector<8x512xf32>
    %293 = arith.mulf %289, %292 : vector<8x512xf32>
    %294 = arith.truncf %293 : vector<8x512xf32> to vector<8x512xbf16>
    %c0_205 = arith.constant 0 : index
    %c0_206 = arith.constant 0 : index
    %295 = vector.load %arg13[%c0_205, %c0_206] : memref<216x512xbf16, #tpu.memory_space<vmem>>, vector<8x512xbf16>
    tpu.vector_store %arg13[%c0_205, %c0_206], %294 {strides = array<i32>} : memref<216x512xbf16, #tpu.memory_space<vmem>>, vector<8x512xbf16>,
    %c16_i32_207 = arith.constant 16 : i32
    %296 = tpu.dynamic_rotate %288 by %c16_i32_207 dim 1 : vector<8x512xf32>, i32 -> vector<8x512xf32>
    %c1_208 = arith.constant 1 : index
    %c0_209 = arith.constant 0 : index
    %c0_210 = arith.constant 0 : index
    %297 = vector.load %arg1[%c1_208, %c0_209, %c0_210] : memref<9x1x512xf32, #tpu.memory_space<vmem>>, vector<1x1x512xf32>
    %298 = vector.shape_cast %297 : vector<1x1x512xf32> to vector<1x512xf32>
    %299 = vector.broadcast %298 : vector<1x512xf32> to vector<8x512xf32>
    %300 = arith.mulf %296, %299 : vector<8x512xf32>
    %301 = arith.truncf %300 : vector<8x512xf32> to vector<8x512xbf16>
    %c8_211 = arith.constant 8 : index
    %c0_212 = arith.constant 0 : index
    %302 = vector.load %arg13[%c8_211, %c0_212] : memref<216x512xbf16, #tpu.memory_space<vmem>>, vector<8x512xbf16>
    tpu.vector_store %arg13[%c8_211, %c0_212], %301 {strides = array<i32>} : memref<216x512xbf16, #tpu.memory_space<vmem>>, vector<8x512xbf16>,
    %c15_i32_213 = arith.constant 15 : i32
    %303 = tpu.dynamic_rotate %288 by %c15_i32_213 dim 1 : vector<8x512xf32>, i32 -> vector<8x512xf32>
    %c2_214 = arith.constant 2 : index
    %c0_215 = arith.constant 0 : index
    %c0_216 = arith.constant 0 : index
    %304 = vector.load %arg1[%c2_214, %c0_215, %c0_216] : memref<9x1x512xf32, #tpu.memory_space<vmem>>, vector<1x1x512xf32>
    %305 = vector.shape_cast %304 : vector<1x1x512xf32> to vector<1x512xf32>
    %306 = vector.broadcast %305 : vector<1x512xf32> to vector<8x512xf32>
    %307 = arith.mulf %303, %306 : vector<8x512xf32>
    %308 = arith.truncf %307 : vector<8x512xf32> to vector<8x512xbf16>
    %c16_217 = arith.constant 16 : index
    %c0_218 = arith.constant 0 : index
    %309 = vector.load %arg13[%c16_217, %c0_218] : memref<216x512xbf16, #tpu.memory_space<vmem>>, vector<8x512xbf16>
    tpu.vector_store %arg13[%c16_217, %c0_218], %308 {strides = array<i32>} : memref<216x512xbf16, #tpu.memory_space<vmem>>, vector<8x512xbf16>,
    %c1_i32_219 = arith.constant 1 : i32
    %310 = tpu.dynamic_rotate %288 by %c1_i32_219 dim 1 : vector<8x512xf32>, i32 -> vector<8x512xf32>
    %c3_220 = arith.constant 3 : index
    %c0_221 = arith.constant 0 : index
    %c0_222 = arith.constant 0 : index
    %311 = vector.load %arg1[%c3_220, %c0_221, %c0_222] : memref<9x1x512xf32, #tpu.memory_space<vmem>>, vector<1x1x512xf32>
    %312 = vector.shape_cast %311 : vector<1x1x512xf32> to vector<1x512xf32>
    %313 = vector.broadcast %312 : vector<1x512xf32> to vector<8x512xf32>
    %314 = arith.mulf %310, %313 : vector<8x512xf32>
    %315 = arith.truncf %314 : vector<8x512xf32> to vector<8x512xbf16>
    %c24_223 = arith.constant 24 : index
    %c0_224 = arith.constant 0 : index
    %316 = vector.load %arg13[%c24_223, %c0_224] : memref<216x512xbf16, #tpu.memory_space<vmem>>, vector<8x512xbf16>
    tpu.vector_store %arg13[%c24_223, %c0_224], %315 {strides = array<i32>} : memref<216x512xbf16, #tpu.memory_space<vmem>>, vector<8x512xbf16>,
    %317 = arith.truncf %288 : vector<8x512xf32> to vector<8x512xbf16>
    %c32_225 = arith.constant 32 : index
    %c0_226 = arith.constant 0 : index
    %318 = vector.load %arg13[%c32_225, %c0_226] : memref<216x512xbf16, #tpu.memory_space<vmem>>, vector<8x512xbf16>
    tpu.vector_store %arg13[%c32_225, %c0_226], %317 {strides = array<i32>} : memref<216x512xbf16, #tpu.memory_space<vmem>>, vector<8x512xbf16>,
    %c511_i32_227 = arith.constant 511 : i32
    %319 = tpu.dynamic_rotate %288 by %c511_i32_227 dim 1 : vector<8x512xf32>, i32 -> vector<8x512xf32>
    %c5_228 = arith.constant 5 : index
    %c0_229 = arith.constant 0 : index
    %c0_230 = arith.constant 0 : index
    %320 = vector.load %arg1[%c5_228, %c0_229, %c0_230] : memref<9x1x512xf32, #tpu.memory_space<vmem>>, vector<1x1x512xf32>
    %321 = vector.shape_cast %320 : vector<1x1x512xf32> to vector<1x512xf32>
    %322 = vector.broadcast %321 : vector<1x512xf32> to vector<8x512xf32>
    %323 = arith.mulf %319, %322 : vector<8x512xf32>
    %324 = arith.truncf %323 : vector<8x512xf32> to vector<8x512xbf16>
    %c40_231 = arith.constant 40 : index
    %c0_232 = arith.constant 0 : index
    %325 = vector.load %arg13[%c40_231, %c0_232] : memref<216x512xbf16, #tpu.memory_space<vmem>>, vector<8x512xbf16>
    tpu.vector_store %arg13[%c40_231, %c0_232], %324 {strides = array<i32>} : memref<216x512xbf16, #tpu.memory_space<vmem>>, vector<8x512xbf16>,
    %c497_i32_233 = arith.constant 497 : i32
    %326 = tpu.dynamic_rotate %288 by %c497_i32_233 dim 1 : vector<8x512xf32>, i32 -> vector<8x512xf32>
    %c6_234 = arith.constant 6 : index
    %c0_235 = arith.constant 0 : index
    %c0_236 = arith.constant 0 : index
    %327 = vector.load %arg1[%c6_234, %c0_235, %c0_236] : memref<9x1x512xf32, #tpu.memory_space<vmem>>, vector<1x1x512xf32>
    %328 = vector.shape_cast %327 : vector<1x1x512xf32> to vector<1x512xf32>
    %329 = vector.broadcast %328 : vector<1x512xf32> to vector<8x512xf32>
    %330 = arith.mulf %326, %329 : vector<8x512xf32>
    %331 = arith.truncf %330 : vector<8x512xf32> to vector<8x512xbf16>
    %c48_237 = arith.constant 48 : index
    %c0_238 = arith.constant 0 : index
    %332 = vector.load %arg13[%c48_237, %c0_238] : memref<216x512xbf16, #tpu.memory_space<vmem>>, vector<8x512xbf16>
    tpu.vector_store %arg13[%c48_237, %c0_238], %331 {strides = array<i32>} : memref<216x512xbf16, #tpu.memory_space<vmem>>, vector<8x512xbf16>,
    %c496_i32_239 = arith.constant 496 : i32
    %333 = tpu.dynamic_rotate %288 by %c496_i32_239 dim 1 : vector<8x512xf32>, i32 -> vector<8x512xf32>
    %c7_240 = arith.constant 7 : index
    %c0_241 = arith.constant 0 : index
    %c0_242 = arith.constant 0 : index
    %334 = vector.load %arg1[%c7_240, %c0_241, %c0_242] : memref<9x1x512xf32, #tpu.memory_space<vmem>>, vector<1x1x512xf32>
    %335 = vector.shape_cast %334 : vector<1x1x512xf32> to vector<1x512xf32>
    %336 = vector.broadcast %335 : vector<1x512xf32> to vector<8x512xf32>
    %337 = arith.mulf %333, %336 : vector<8x512xf32>
    %338 = arith.truncf %337 : vector<8x512xf32> to vector<8x512xbf16>
    %c56_243 = arith.constant 56 : index
    %c0_244 = arith.constant 0 : index
    %339 = vector.load %arg13[%c56_243, %c0_244] : memref<216x512xbf16, #tpu.memory_space<vmem>>, vector<8x512xbf16>
    tpu.vector_store %arg13[%c56_243, %c0_244], %338 {strides = array<i32>} : memref<216x512xbf16, #tpu.memory_space<vmem>>, vector<8x512xbf16>,
    %c495_i32_245 = arith.constant 495 : i32
    %340 = tpu.dynamic_rotate %288 by %c495_i32_245 dim 1 : vector<8x512xf32>, i32 -> vector<8x512xf32>
    %c8_246 = arith.constant 8 : index
    %c0_247 = arith.constant 0 : index
    %c0_248 = arith.constant 0 : index
    %341 = vector.load %arg1[%c8_246, %c0_247, %c0_248] : memref<9x1x512xf32, #tpu.memory_space<vmem>>, vector<1x1x512xf32>
    %342 = vector.shape_cast %341 : vector<1x1x512xf32> to vector<1x512xf32>
    %343 = vector.broadcast %342 : vector<1x512xf32> to vector<8x512xf32>
    %344 = arith.mulf %340, %343 : vector<8x512xf32>
    %345 = arith.truncf %344 : vector<8x512xf32> to vector<8x512xbf16>
    %c64_249 = arith.constant 64 : index
    %c0_250 = arith.constant 0 : index
    %346 = vector.load %arg13[%c64_249, %c0_250] : memref<216x512xbf16, #tpu.memory_space<vmem>>, vector<8x512xbf16>
    tpu.vector_store %arg13[%c64_249, %c0_250], %345 {strides = array<i32>} : memref<216x512xbf16, #tpu.memory_space<vmem>>, vector<8x512xbf16>,
    %c0_251 = arith.constant 0 : index
    %c0_252 = arith.constant 0 : index
    %c0_253 = arith.constant 0 : index
    %347 = vector.load %arg12[%c0_251, %c0_252, %c0_253] : memref<2x8x512xf32, #tpu.memory_space<vmem>>, vector<1x8x512xf32>
    %348 = vector.shape_cast %347 : vector<1x8x512xf32> to vector<8x512xf32>
    %c8_254 = arith.constant 8 : index
    %c0_255 = arith.constant 0 : index
    %349 = vector.load %arg14[%c8_254, %c0_255] : memref<24x1xf32, #tpu.memory_space<vmem>>, vector<8x1xf32>
    %c8_256 = arith.constant 8 : index
    %c0_257 = arith.constant 0 : index
    %350 = vector.load %arg15[%c8_256, %c0_257] : memref<24x1xf32, #tpu.memory_space<vmem>>, vector<8x1xf32>
    %c8_258 = arith.constant 8 : index
    %c0_259 = arith.constant 0 : index
    %351 = vector.load %arg8[%c8_258, %c0_259] : memref<24x1xf32, #tpu.memory_space<vmem>>, vector<8x1xf32>
    %352 = arith.mulf %351, %350 : vector<8x1xf32>
    %c8_260 = arith.constant 8 : index
    %c0_261 = arith.constant 0 : index
    %353 = vector.load %arg9[%c8_260, %c0_261] : memref<24x1xf32, #tpu.memory_space<vmem>>, vector<8x1xf32>
    %354 = arith.mulf %349, %352 : vector<8x1xf32>
    %355 = arith.subf %353, %354 : vector<8x1xf32>
    %356 = vector.broadcast %352 : vector<8x1xf32> to vector<8x512xf32>
    %357 = arith.mulf %348, %356 : vector<8x512xf32>
    %358 = vector.broadcast %355 : vector<8x1xf32> to vector<8x512xf32>
    %359 = arith.addf %357, %358 : vector<8x512xf32>
    %cst_262 = arith.constant 0.000000e+00 : f32
    %360 = vector.broadcast %cst_262 : f32 to vector<8x512xf32>
    %361 = arith.maximumf %359, %360 : vector<8x512xf32>
    %c17_i32_263 = arith.constant 17 : i32
    %362 = tpu.dynamic_rotate %361 by %c17_i32_263 dim 1 : vector<8x512xf32>, i32 -> vector<8x512xf32>
    %c0_264 = arith.constant 0 : index
    %c0_265 = arith.constant 0 : index
    %c0_266 = arith.constant 0 : index
    %363 = vector.load %arg1[%c0_264, %c0_265, %c0_266] : memref<9x1x512xf32, #tpu.memory_space<vmem>>, vector<1x1x512xf32>
    %364 = vector.shape_cast %363 : vector<1x1x512xf32> to vector<1x512xf32>
    %365 = vector.broadcast %364 : vector<1x512xf32> to vector<8x512xf32>
    %366 = arith.mulf %362, %365 : vector<8x512xf32>
    %367 = arith.truncf %366 : vector<8x512xf32> to vector<8x512xbf16>
    %c72_267 = arith.constant 72 : index
    %c0_268 = arith.constant 0 : index
    %368 = vector.load %arg13[%c72_267, %c0_268] : memref<216x512xbf16, #tpu.memory_space<vmem>>, vector<8x512xbf16>
    tpu.vector_store %arg13[%c72_267, %c0_268], %367 {strides = array<i32>} : memref<216x512xbf16, #tpu.memory_space<vmem>>, vector<8x512xbf16>,
    %c16_i32_269 = arith.constant 16 : i32
    %369 = tpu.dynamic_rotate %361 by %c16_i32_269 dim 1 : vector<8x512xf32>, i32 -> vector<8x512xf32>
    %c1_270 = arith.constant 1 : index
    %c0_271 = arith.constant 0 : index
    %c0_272 = arith.constant 0 : index
    %370 = vector.load %arg1[%c1_270, %c0_271, %c0_272] : memref<9x1x512xf32, #tpu.memory_space<vmem>>, vector<1x1x512xf32>
    %371 = vector.shape_cast %370 : vector<1x1x512xf32> to vector<1x512xf32>
    %372 = vector.broadcast %371 : vector<1x512xf32> to vector<8x512xf32>
    %373 = arith.mulf %369, %372 : vector<8x512xf32>
    %374 = arith.truncf %373 : vector<8x512xf32> to vector<8x512xbf16>
    %c80_273 = arith.constant 80 : index
    %c0_274 = arith.constant 0 : index
    %375 = vector.load %arg13[%c80_273, %c0_274] : memref<216x512xbf16, #tpu.memory_space<vmem>>, vector<8x512xbf16>
    tpu.vector_store %arg13[%c80_273, %c0_274], %374 {strides = array<i32>} : memref<216x512xbf16, #tpu.memory_space<vmem>>, vector<8x512xbf16>,
    %c15_i32_275 = arith.constant 15 : i32
    %376 = tpu.dynamic_rotate %361 by %c15_i32_275 dim 1 : vector<8x512xf32>, i32 -> vector<8x512xf32>
    %c2_276 = arith.constant 2 : index
    %c0_277 = arith.constant 0 : index
    %c0_278 = arith.constant 0 : index
    %377 = vector.load %arg1[%c2_276, %c0_277, %c0_278] : memref<9x1x512xf32, #tpu.memory_space<vmem>>, vector<1x1x512xf32>
    %378 = vector.shape_cast %377 : vector<1x1x512xf32> to vector<1x512xf32>
    %379 = vector.broadcast %378 : vector<1x512xf32> to vector<8x512xf32>
    %380 = arith.mulf %376, %379 : vector<8x512xf32>
    %381 = arith.truncf %380 : vector<8x512xf32> to vector<8x512xbf16>
    %c88_279 = arith.constant 88 : index
    %c0_280 = arith.constant 0 : index
    %382 = vector.load %arg13[%c88_279, %c0_280] : memref<216x512xbf16, #tpu.memory_space<vmem>>, vector<8x512xbf16>
    tpu.vector_store %arg13[%c88_279, %c0_280], %381 {strides = array<i32>} : memref<216x512xbf16, #tpu.memory_space<vmem>>, vector<8x512xbf16>,
    %c1_i32_281 = arith.constant 1 : i32
    %383 = tpu.dynamic_rotate %361 by %c1_i32_281 dim 1 : vector<8x512xf32>, i32 -> vector<8x512xf32>
    %c3_282 = arith.constant 3 : index
    %c0_283 = arith.constant 0 : index
    %c0_284 = arith.constant 0 : index
    %384 = vector.load %arg1[%c3_282, %c0_283, %c0_284] : memref<9x1x512xf32, #tpu.memory_space<vmem>>, vector<1x1x512xf32>
    %385 = vector.shape_cast %384 : vector<1x1x512xf32> to vector<1x512xf32>
    %386 = vector.broadcast %385 : vector<1x512xf32> to vector<8x512xf32>
    %387 = arith.mulf %383, %386 : vector<8x512xf32>
    %388 = arith.truncf %387 : vector<8x512xf32> to vector<8x512xbf16>
    %c96_285 = arith.constant 96 : index
    %c0_286 = arith.constant 0 : index
    %389 = vector.load %arg13[%c96_285, %c0_286] : memref<216x512xbf16, #tpu.memory_space<vmem>>, vector<8x512xbf16>
    tpu.vector_store %arg13[%c96_285, %c0_286], %388 {strides = array<i32>} : memref<216x512xbf16, #tpu.memory_space<vmem>>, vector<8x512xbf16>,
    %390 = arith.truncf %361 : vector<8x512xf32> to vector<8x512xbf16>
    %c104_287 = arith.constant 104 : index
    %c0_288 = arith.constant 0 : index
    %391 = vector.load %arg13[%c104_287, %c0_288] : memref<216x512xbf16, #tpu.memory_space<vmem>>, vector<8x512xbf16>
    tpu.vector_store %arg13[%c104_287, %c0_288], %390 {strides = array<i32>} : memref<216x512xbf16, #tpu.memory_space<vmem>>, vector<8x512xbf16>,
    %c511_i32_289 = arith.constant 511 : i32
    %392 = tpu.dynamic_rotate %361 by %c511_i32_289 dim 1 : vector<8x512xf32>, i32 -> vector<8x512xf32>
    %c5_290 = arith.constant 5 : index
    %c0_291 = arith.constant 0 : index
    %c0_292 = arith.constant 0 : index
    %393 = vector.load %arg1[%c5_290, %c0_291, %c0_292] : memref<9x1x512xf32, #tpu.memory_space<vmem>>, vector<1x1x512xf32>
    %394 = vector.shape_cast %393 : vector<1x1x512xf32> to vector<1x512xf32>
    %395 = vector.broadcast %394 : vector<1x512xf32> to vector<8x512xf32>
    %396 = arith.mulf %392, %395 : vector<8x512xf32>
    %397 = arith.truncf %396 : vector<8x512xf32> to vector<8x512xbf16>
    %c112_293 = arith.constant 112 : index
    %c0_294 = arith.constant 0 : index
    %398 = vector.load %arg13[%c112_293, %c0_294] : memref<216x512xbf16, #tpu.memory_space<vmem>>, vector<8x512xbf16>
    tpu.vector_store %arg13[%c112_293, %c0_294], %397 {strides = array<i32>} : memref<216x512xbf16, #tpu.memory_space<vmem>>, vector<8x512xbf16>,
    %c497_i32_295 = arith.constant 497 : i32
    %399 = tpu.dynamic_rotate %361 by %c497_i32_295 dim 1 : vector<8x512xf32>, i32 -> vector<8x512xf32>
    %c6_296 = arith.constant 6 : index
    %c0_297 = arith.constant 0 : index
    %c0_298 = arith.constant 0 : index
    %400 = vector.load %arg1[%c6_296, %c0_297, %c0_298] : memref<9x1x512xf32, #tpu.memory_space<vmem>>, vector<1x1x512xf32>
    %401 = vector.shape_cast %400 : vector<1x1x512xf32> to vector<1x512xf32>
    %402 = vector.broadcast %401 : vector<1x512xf32> to vector<8x512xf32>
    %403 = arith.mulf %399, %402 : vector<8x512xf32>
    %404 = arith.truncf %403 : vector<8x512xf32> to vector<8x512xbf16>
    %c120_299 = arith.constant 120 : index
    %c0_300 = arith.constant 0 : index
    %405 = vector.load %arg13[%c120_299, %c0_300] : memref<216x512xbf16, #tpu.memory_space<vmem>>, vector<8x512xbf16>
    tpu.vector_store %arg13[%c120_299, %c0_300], %404 {strides = array<i32>} : memref<216x512xbf16, #tpu.memory_space<vmem>>, vector<8x512xbf16>,
    %c496_i32_301 = arith.constant 496 : i32
    %406 = tpu.dynamic_rotate %361 by %c496_i32_301 dim 1 : vector<8x512xf32>, i32 -> vector<8x512xf32>
    %c7_302 = arith.constant 7 : index
    %c0_303 = arith.constant 0 : index
    %c0_304 = arith.constant 0 : index
    %407 = vector.load %arg1[%c7_302, %c0_303, %c0_304] : memref<9x1x512xf32, #tpu.memory_space<vmem>>, vector<1x1x512xf32>
    %408 = vector.shape_cast %407 : vector<1x1x512xf32> to vector<1x512xf32>
    %409 = vector.broadcast %408 : vector<1x512xf32> to vector<8x512xf32>
    %410 = arith.mulf %406, %409 : vector<8x512xf32>
    %411 = arith.truncf %410 : vector<8x512xf32> to vector<8x512xbf16>
    %c128_305 = arith.constant 128 : index
    %c0_306 = arith.constant 0 : index
    %412 = vector.load %arg13[%c128_305, %c0_306] : memref<216x512xbf16, #tpu.memory_space<vmem>>, vector<8x512xbf16>
    tpu.vector_store %arg13[%c128_305, %c0_306], %411 {strides = array<i32>} : memref<216x512xbf16, #tpu.memory_space<vmem>>, vector<8x512xbf16>,
    %c495_i32_307 = arith.constant 495 : i32
    %413 = tpu.dynamic_rotate %361 by %c495_i32_307 dim 1 : vector<8x512xf32>, i32 -> vector<8x512xf32>
    %c8_308 = arith.constant 8 : index
    %c0_309 = arith.constant 0 : index
    %c0_310 = arith.constant 0 : index
    %414 = vector.load %arg1[%c8_308, %c0_309, %c0_310] : memref<9x1x512xf32, #tpu.memory_space<vmem>>, vector<1x1x512xf32>
    %415 = vector.shape_cast %414 : vector<1x1x512xf32> to vector<1x512xf32>
    %416 = vector.broadcast %415 : vector<1x512xf32> to vector<8x512xf32>
    %417 = arith.mulf %413, %416 : vector<8x512xf32>
    %418 = arith.truncf %417 : vector<8x512xf32> to vector<8x512xbf16>
    %c136_311 = arith.constant 136 : index
    %c0_312 = arith.constant 0 : index
    %419 = vector.load %arg13[%c136_311, %c0_312] : memref<216x512xbf16, #tpu.memory_space<vmem>>, vector<8x512xbf16>
    tpu.vector_store %arg13[%c136_311, %c0_312], %418 {strides = array<i32>} : memref<216x512xbf16, #tpu.memory_space<vmem>>, vector<8x512xbf16>,
    %c1_313 = arith.constant 1 : index
    %c0_314 = arith.constant 0 : index
    %c0_315 = arith.constant 0 : index
    %420 = vector.load %arg12[%c1_313, %c0_314, %c0_315] : memref<2x8x512xf32, #tpu.memory_space<vmem>>, vector<1x8x512xf32>
    %421 = vector.shape_cast %420 : vector<1x8x512xf32> to vector<8x512xf32>
    %c16_316 = arith.constant 16 : index
    %c0_317 = arith.constant 0 : index
    %422 = vector.load %arg14[%c16_316, %c0_317] : memref<24x1xf32, #tpu.memory_space<vmem>>, vector<8x1xf32>
    %c16_318 = arith.constant 16 : index
    %c0_319 = arith.constant 0 : index
    %423 = vector.load %arg15[%c16_318, %c0_319] : memref<24x1xf32, #tpu.memory_space<vmem>>, vector<8x1xf32>
    %c16_320 = arith.constant 16 : index
    %c0_321 = arith.constant 0 : index
    %424 = vector.load %arg8[%c16_320, %c0_321] : memref<24x1xf32, #tpu.memory_space<vmem>>, vector<8x1xf32>
    %425 = arith.mulf %424, %423 : vector<8x1xf32>
    %c16_322 = arith.constant 16 : index
    %c0_323 = arith.constant 0 : index
    %426 = vector.load %arg9[%c16_322, %c0_323] : memref<24x1xf32, #tpu.memory_space<vmem>>, vector<8x1xf32>
    %427 = arith.mulf %422, %425 : vector<8x1xf32>
    %428 = arith.subf %426, %427 : vector<8x1xf32>
    %429 = vector.broadcast %425 : vector<8x1xf32> to vector<8x512xf32>
    %430 = arith.mulf %421, %429 : vector<8x512xf32>
    %431 = vector.broadcast %428 : vector<8x1xf32> to vector<8x512xf32>
    %432 = arith.addf %430, %431 : vector<8x512xf32>
    %cst_324 = arith.constant 0.000000e+00 : f32
    %433 = vector.broadcast %cst_324 : f32 to vector<8x512xf32>
    %434 = arith.maximumf %432, %433 : vector<8x512xf32>
    %c17_i32_325 = arith.constant 17 : i32
    %435 = tpu.dynamic_rotate %434 by %c17_i32_325 dim 1 : vector<8x512xf32>, i32 -> vector<8x512xf32>
    %c0_326 = arith.constant 0 : index
    %c0_327 = arith.constant 0 : index
    %c0_328 = arith.constant 0 : index
    %436 = vector.load %arg1[%c0_326, %c0_327, %c0_328] : memref<9x1x512xf32, #tpu.memory_space<vmem>>, vector<1x1x512xf32>
    %437 = vector.shape_cast %436 : vector<1x1x512xf32> to vector<1x512xf32>
    %438 = vector.broadcast %437 : vector<1x512xf32> to vector<8x512xf32>
    %439 = arith.mulf %435, %438 : vector<8x512xf32>
    %440 = arith.truncf %439 : vector<8x512xf32> to vector<8x512xbf16>
    %c144 = arith.constant 144 : index
    %c0_329 = arith.constant 0 : index
    %441 = vector.load %arg13[%c144, %c0_329] : memref<216x512xbf16, #tpu.memory_space<vmem>>, vector<8x512xbf16>
    tpu.vector_store %arg13[%c144, %c0_329], %440 {strides = array<i32>} : memref<216x512xbf16, #tpu.memory_space<vmem>>, vector<8x512xbf16>,
    %c16_i32_330 = arith.constant 16 : i32
    %442 = tpu.dynamic_rotate %434 by %c16_i32_330 dim 1 : vector<8x512xf32>, i32 -> vector<8x512xf32>
    %c1_331 = arith.constant 1 : index
    %c0_332 = arith.constant 0 : index
    %c0_333 = arith.constant 0 : index
    %443 = vector.load %arg1[%c1_331, %c0_332, %c0_333] : memref<9x1x512xf32, #tpu.memory_space<vmem>>, vector<1x1x512xf32>
    %444 = vector.shape_cast %443 : vector<1x1x512xf32> to vector<1x512xf32>
    %445 = vector.broadcast %444 : vector<1x512xf32> to vector<8x512xf32>
    %446 = arith.mulf %442, %445 : vector<8x512xf32>
    %447 = arith.truncf %446 : vector<8x512xf32> to vector<8x512xbf16>
    %c152 = arith.constant 152 : index
    %c0_334 = arith.constant 0 : index
    %448 = vector.load %arg13[%c152, %c0_334] : memref<216x512xbf16, #tpu.memory_space<vmem>>, vector<8x512xbf16>
    tpu.vector_store %arg13[%c152, %c0_334], %447 {strides = array<i32>} : memref<216x512xbf16, #tpu.memory_space<vmem>>, vector<8x512xbf16>,
    %c15_i32_335 = arith.constant 15 : i32
    %449 = tpu.dynamic_rotate %434 by %c15_i32_335 dim 1 : vector<8x512xf32>, i32 -> vector<8x512xf32>
    %c2_336 = arith.constant 2 : index
    %c0_337 = arith.constant 0 : index
    %c0_338 = arith.constant 0 : index
    %450 = vector.load %arg1[%c2_336, %c0_337, %c0_338] : memref<9x1x512xf32, #tpu.memory_space<vmem>>, vector<1x1x512xf32>
    %451 = vector.shape_cast %450 : vector<1x1x512xf32> to vector<1x512xf32>
    %452 = vector.broadcast %451 : vector<1x512xf32> to vector<8x512xf32>
    %453 = arith.mulf %449, %452 : vector<8x512xf32>
    %454 = arith.truncf %453 : vector<8x512xf32> to vector<8x512xbf16>
    %c160 = arith.constant 160 : index
    %c0_339 = arith.constant 0 : index
    %455 = vector.load %arg13[%c160, %c0_339] : memref<216x512xbf16, #tpu.memory_space<vmem>>, vector<8x512xbf16>
    tpu.vector_store %arg13[%c160, %c0_339], %454 {strides = array<i32>} : memref<216x512xbf16, #tpu.memory_space<vmem>>, vector<8x512xbf16>,
    %c1_i32_340 = arith.constant 1 : i32
    %456 = tpu.dynamic_rotate %434 by %c1_i32_340 dim 1 : vector<8x512xf32>, i32 -> vector<8x512xf32>
    %c3_341 = arith.constant 3 : index
    %c0_342 = arith.constant 0 : index
    %c0_343 = arith.constant 0 : index
    %457 = vector.load %arg1[%c3_341, %c0_342, %c0_343] : memref<9x1x512xf32, #tpu.memory_space<vmem>>, vector<1x1x512xf32>
    %458 = vector.shape_cast %457 : vector<1x1x512xf32> to vector<1x512xf32>
    %459 = vector.broadcast %458 : vector<1x512xf32> to vector<8x512xf32>
    %460 = arith.mulf %456, %459 : vector<8x512xf32>
    %461 = arith.truncf %460 : vector<8x512xf32> to vector<8x512xbf16>
    %c168 = arith.constant 168 : index
    %c0_344 = arith.constant 0 : index
    %462 = vector.load %arg13[%c168, %c0_344] : memref<216x512xbf16, #tpu.memory_space<vmem>>, vector<8x512xbf16>
    tpu.vector_store %arg13[%c168, %c0_344], %461 {strides = array<i32>} : memref<216x512xbf16, #tpu.memory_space<vmem>>, vector<8x512xbf16>,
    %463 = arith.truncf %434 : vector<8x512xf32> to vector<8x512xbf16>
    %c176 = arith.constant 176 : index
    %c0_345 = arith.constant 0 : index
    %464 = vector.load %arg13[%c176, %c0_345] : memref<216x512xbf16, #tpu.memory_space<vmem>>, vector<8x512xbf16>
    tpu.vector_store %arg13[%c176, %c0_345], %463 {strides = array<i32>} : memref<216x512xbf16, #tpu.memory_space<vmem>>, vector<8x512xbf16>,
    %c511_i32_346 = arith.constant 511 : i32
    %465 = tpu.dynamic_rotate %434 by %c511_i32_346 dim 1 : vector<8x512xf32>, i32 -> vector<8x512xf32>
    %c5_347 = arith.constant 5 : index
    %c0_348 = arith.constant 0 : index
    %c0_349 = arith.constant 0 : index
    %466 = vector.load %arg1[%c5_347, %c0_348, %c0_349] : memref<9x1x512xf32, #tpu.memory_space<vmem>>, vector<1x1x512xf32>
    %467 = vector.shape_cast %466 : vector<1x1x512xf32> to vector<1x512xf32>
    %468 = vector.broadcast %467 : vector<1x512xf32> to vector<8x512xf32>
    %469 = arith.mulf %465, %468 : vector<8x512xf32>
    %470 = arith.truncf %469 : vector<8x512xf32> to vector<8x512xbf16>
    %c184 = arith.constant 184 : index
    %c0_350 = arith.constant 0 : index
    %471 = vector.load %arg13[%c184, %c0_350] : memref<216x512xbf16, #tpu.memory_space<vmem>>, vector<8x512xbf16>
    tpu.vector_store %arg13[%c184, %c0_350], %470 {strides = array<i32>} : memref<216x512xbf16, #tpu.memory_space<vmem>>, vector<8x512xbf16>,
    %c497_i32_351 = arith.constant 497 : i32
    %472 = tpu.dynamic_rotate %434 by %c497_i32_351 dim 1 : vector<8x512xf32>, i32 -> vector<8x512xf32>
    %c6_352 = arith.constant 6 : index
    %c0_353 = arith.constant 0 : index
    %c0_354 = arith.constant 0 : index
    %473 = vector.load %arg1[%c6_352, %c0_353, %c0_354] : memref<9x1x512xf32, #tpu.memory_space<vmem>>, vector<1x1x512xf32>
    %474 = vector.shape_cast %473 : vector<1x1x512xf32> to vector<1x512xf32>
    %475 = vector.broadcast %474 : vector<1x512xf32> to vector<8x512xf32>
    %476 = arith.mulf %472, %475 : vector<8x512xf32>
    %477 = arith.truncf %476 : vector<8x512xf32> to vector<8x512xbf16>
    %c192 = arith.constant 192 : index
    %c0_355 = arith.constant 0 : index
    %478 = vector.load %arg13[%c192, %c0_355] : memref<216x512xbf16, #tpu.memory_space<vmem>>, vector<8x512xbf16>
    tpu.vector_store %arg13[%c192, %c0_355], %477 {strides = array<i32>} : memref<216x512xbf16, #tpu.memory_space<vmem>>, vector<8x512xbf16>,
    %c496_i32_356 = arith.constant 496 : i32
    %479 = tpu.dynamic_rotate %434 by %c496_i32_356 dim 1 : vector<8x512xf32>, i32 -> vector<8x512xf32>
    %c7_357 = arith.constant 7 : index
    %c0_358 = arith.constant 0 : index
    %c0_359 = arith.constant 0 : index
    %480 = vector.load %arg1[%c7_357, %c0_358, %c0_359] : memref<9x1x512xf32, #tpu.memory_space<vmem>>, vector<1x1x512xf32>
    %481 = vector.shape_cast %480 : vector<1x1x512xf32> to vector<1x512xf32>
    %482 = vector.broadcast %481 : vector<1x512xf32> to vector<8x512xf32>
    %483 = arith.mulf %479, %482 : vector<8x512xf32>
    %484 = arith.truncf %483 : vector<8x512xf32> to vector<8x512xbf16>
    %c200 = arith.constant 200 : index
    %c0_360 = arith.constant 0 : index
    %485 = vector.load %arg13[%c200, %c0_360] : memref<216x512xbf16, #tpu.memory_space<vmem>>, vector<8x512xbf16>
    tpu.vector_store %arg13[%c200, %c0_360], %484 {strides = array<i32>} : memref<216x512xbf16, #tpu.memory_space<vmem>>, vector<8x512xbf16>,
    %c495_i32_361 = arith.constant 495 : i32
    %486 = tpu.dynamic_rotate %434 by %c495_i32_361 dim 1 : vector<8x512xf32>, i32 -> vector<8x512xf32>
    %c8_362 = arith.constant 8 : index
    %c0_363 = arith.constant 0 : index
    %c0_364 = arith.constant 0 : index
    %487 = vector.load %arg1[%c8_362, %c0_363, %c0_364] : memref<9x1x512xf32, #tpu.memory_space<vmem>>, vector<1x1x512xf32>
    %488 = vector.shape_cast %487 : vector<1x1x512xf32> to vector<1x512xf32>
    %489 = vector.broadcast %488 : vector<1x512xf32> to vector<8x512xf32>
    %490 = arith.mulf %486, %489 : vector<8x512xf32>
    %491 = arith.truncf %490 : vector<8x512xf32> to vector<8x512xbf16>
    %c208 = arith.constant 208 : index
    %c0_365 = arith.constant 0 : index
    %492 = vector.load %arg13[%c208, %c0_365] : memref<216x512xbf16, #tpu.memory_space<vmem>>, vector<8x512xbf16>
    tpu.vector_store %arg13[%c208, %c0_365], %491 {strides = array<i32>} : memref<216x512xbf16, #tpu.memory_space<vmem>>, vector<8x512xbf16>,
    %c0_366 = arith.constant 0 : index
    %c0_367 = arith.constant 0 : index
    %493 = vector.load %arg10[%c0_366, %c0_367] : memref<8x216xbf16, #tpu.memory_space<vmem>>, vector<8x216xbf16>
    %c0_368 = arith.constant 0 : index
    %c0_369 = arith.constant 0 : index
    %494 = vector.load %arg13[%c0_368, %c0_369] : memref<216x512xbf16, #tpu.memory_space<vmem>>, vector<216x512xbf16>
    %cst_370 = arith.constant dense<0.000000e+00> : vector<8x512xf32>
    %495 = tpu.matmul %493, %494, %cst_370 {dimension_numbers = #tpu.dot_dimension_numbers<[1], [0], [0], [1], [0, 0, 1, 1], [], []>} : vector<8x216xbf16>, vector<216x512xbf16>, vector<8x512xf32> -> vector<8x512xf32>
    %c0_371 = arith.constant 0 : index
    %c0_372 = arith.constant 0 : index
    %496 = vector.load %arg11[%c0_371, %c0_372] : memref<8x512xf32, #tpu.memory_space<vmem>>, vector<8x512xf32>
    tpu.vector_store %arg11[%c0_371, %c0_372], %495 {strides = array<i32>} : memref<8x512xf32, #tpu.memory_space<vmem>>, vector<8x512xf32>,
    return
  }
}

</mosaic_0001>

<llo_original>
// kernel: tpu_custom_call.1
$region0: #{tpu_custom_call.1}
  #allocation0 [shape = 'u32[]', space=smem, size = 0x4, offset = 0x4, fixed_abs, tag = 'smem constant byte address 0x4 - core index']
  #allocation1 [shape = 'u32[144,128]{1,0:T(1,128)}', space=vmem, size = 0x12000, scoped, tag = 'internal scratch']
  #allocation2 [shape = 'f32[2,8,512]{2,1,0:T(8,128)}', space=vmem, size = 0x8000, scoped, tag = 'scratch operand']
  #allocation3 [shape = 'bf16[216,512]{1,0:T(8,128)(2,1)}', space=vmem, size = 0x36000, scoped, tag = 'scratch operand']
  #allocation4 [shape = 'f32[24,1]{1,0:T(8,128)}', space=vmem, size = 0x3000, scoped, tag = 'scratch operand']
  #allocation5 [shape = 'f32[24,1]{1,0:T(8,128)}', space=vmem, size = 0x3000, scoped, tag = 'scratch operand']
  %s0 = inlined_call_operand.vmem [shape: f32[8,512], index: 0, kind: input, shape index: {}]
  %s1 = inlined_call_operand.vmem [shape: f32[9,1,512], index: 1, kind: input, shape index: {}]
  %s2 = inlined_call_operand.vmem [shape: f32[8,1], index: 2, kind: input, shape index: {}]
  %s3 = inlined_call_operand.vmem [shape: f32[8,1], index: 3, kind: input, shape index: {}]
  %s4 = inlined_call_operand.vmem [shape: bf16[8,72], index: 4, kind: input, shape index: {}]
  %s5 = inlined_call_operand.vmem [shape: f32[16,1], index: 5, kind: input, shape index: {}]
  %s6 = inlined_call_operand.vmem [shape: f32[16,1], index: 6, kind: input, shape index: {}]
  %s7 = inlined_call_operand.vmem [shape: bf16[8,144], index: 7, kind: input, shape index: {}]
  %s8 = inlined_call_operand.vmem [shape: f32[24,1], index: 8, kind: input, shape index: {}]
  %s9 = inlined_call_operand.vmem [shape: f32[24,1], index: 9, kind: input, shape index: {}]
  %s10 = inlined_call_operand.vmem [shape: bf16[8,216], index: 10, kind: input, shape index: {}]
  %s11 = inlined_call_operand.hbm [shape: f32[8,512], index: 11, kind: output, shape index: {}]
  %s12 = sld [smem:[#allocation0]]
  $region54: #{tpu_custom_call.1} parent=0
    _
  %s14 = ssub.s32 1, %s12
  %s15 = scalar_select 0, %s14, %s12
  $region1: #{tpu_custom_call.1} parent=0
    #allocation6 [shape = 'u8[16384]{0}', space=vmem, size = 0x4000, scoped, tag = 'output window, operand 0, single buffered']
    #allocation7 [shape = 's32[1]{0}', space=sflag, size = 0x4, scoped, tag = 'scoped memory for tpu_custom_call.1']
    %16 = vsyncpa [#allocation7], 0
    // Predicated region
    $region2: #{tpu_custom_call.1} parent=1 // pred_check
      _
    $region3: #{tpu_custom_call.1} parent=1 // pred_check_branch
      %18 = sbr.rel (0) target = $region5
    $region4: #{tpu_custom_call.1} parent=1 // pred_region
      _
    $region5: #{tpu_custom_call.1} parent=1 // pred_fallthru
      _
    // Predicated region
    $region6: #{tpu_custom_call.1} parent=1 // pred_check
      _
    $region7: #{tpu_custom_call.1} parent=1 // pred_check_branch
      %20 = sbr.rel (0) target = $region9
    $region8: #{tpu_custom_call.1} parent=1 // pred_region
      _
    $region9: #{tpu_custom_call.1} parent=1 // pred_fallthru
      _
    // Predicated region
    $region10: #{tpu_custom_call.1} parent=1 // pred_check
      _
    $region11: #{tpu_custom_call.1} parent=1 // pred_check_branch
      %22 = sbr.rel (0) target = $region13
    $region12: #{tpu_custom_call.1} parent=1 // pred_region
      _
    $region13: #{tpu_custom_call.1} parent=1 // pred_fallthru
      _
    // Predicated region
    $region14: #{tpu_custom_call.1} parent=1 // pred_check
      _
    $region15: #{tpu_custom_call.1} parent=1 // pred_check_branch
      %24 = sbr.rel (0) target = $region17
    $region16: #{tpu_custom_call.1} parent=1 // pred_region
      _
    $region17: #{tpu_custom_call.1} parent=1 // pred_fallthru
      _
    // Predicated region
    $region18: #{tpu_custom_call.1} parent=1 // pred_check
      _
    $region19: #{tpu_custom_call.1} parent=1 // pred_check_branch
      %26 = sbr.rel (0) target = $region21
    $region20: #{tpu_custom_call.1} parent=1 // pred_region
      _
    $region21: #{tpu_custom_call.1} parent=1 // pred_fallthru
      _
    // Predicated region
    $region22: #{tpu_custom_call.1} parent=1 // pred_check
      _
    $region23: #{tpu_custom_call.1} parent=1 // pred_check_branch
      %28 = sbr.rel (0) target = $region25
    $region24: #{tpu_custom_call.1} parent=1 // pred_region
      _
    $region25: #{tpu_custom_call.1} parent=1 // pred_fallthru
      _
    // Predicated region
    $region26: #{tpu_custom_call.1} parent=1 // pred_check
      _
    $region27: #{tpu_custom_call.1} parent=1 // pred_check_branch
      %30 = sbr.rel (0) target = $region29
    $region28: #{tpu_custom_call.1} parent=1 // pred_region
      _
    $region29: #{tpu_custom_call.1} parent=1 // pred_fallthru
      _
    // Predicated region
    $region30: #{tpu_custom_call.1} parent=1 // pred_check
      _
    $region31: #{tpu_custom_call.1} parent=1 // pred_check_branch
      %32 = sbr.rel (0) target = $region33
    $region32: #{tpu_custom_call.1} parent=1 // pred_region
      _
    $region33: #{tpu_custom_call.1} parent=1 // pred_fallthru
      _
    // Predicated region
    $region34: #{tpu_custom_call.1} parent=1 // pred_check
      _
    $region35: #{tpu_custom_call.1} parent=1 // pred_check_branch
      %34 = sbr.rel (0) target = $region37
    $region36: #{tpu_custom_call.1} parent=1 // pred_region
      _
    $region37: #{tpu_custom_call.1} parent=1 // pred_fallthru
      _
    // Predicated region
    $region38: #{tpu_custom_call.1} parent=1 // pred_check
      _
    $region39: #{tpu_custom_call.1} parent=1 // pred_check_branch
      %36 = sbr.rel (0) target = $region41
    $region40: #{tpu_custom_call.1} parent=1 // pred_region
      _
    $region41: #{tpu_custom_call.1} parent=1 // pred_fallthru
      _
    // Predicated region
    $region42: #{tpu_custom_call.1} parent=1 // pred_check
      _
    $region43: #{tpu_custom_call.1} parent=1 // pred_check_branch
      %38 = sbr.rel (0) target = $region45
    $region44: #{tpu_custom_call.1} parent=1 // pred_region
      _
    $region45: #{tpu_custom_call.1} parent=1 // pred_fallthru
      _
    %v40 = vld [vmem:[%s0] sm:$0xff]
    %v41 = vld [vmem:[%s0 + $0x8] sm:$0xff]
    %v42 = vld [vmem:[%s0 + $0x10] sm:$0xff]
    %v43 = vld [vmem:[%s0 + $0x18] sm:$0xff]
    %v44 = vadd.f32 %v40, %v41
    %v45 = vadd.f32 %v44, %v42
    %v46 = vadd.f32 %v45, %v43
    %47 = vadd.xlane.f32.xlu0 %v46
    %v48 = vpop.xlane.xlu0 %47
    %v49 = vmul.f32 %v48, 0.001953125
    %v50 = vsub.f32 %v40, %v49
    %v51 = vsub.f32 %v41, %v49
    %v52 = vsub.f32 %v42, %v49
    %v53 = vsub.f32 %v43, %v49
    %v54 = vmul.f32 %v50, %v50
    %v55 = vmul.f32 %v51, %v51
    %v56 = vmul.f32 %v52, %v52
    %v57 = vmul.f32 %v53, %v53
    %v58 = vadd.f32 %v54, %v55
    %v59 = vadd.f32 %v58, %v56
    %v60 = vadd.f32 %v59, %v57
    %61 = vadd.xlane.f32.xlu0 %v60
    %v62 = vpop.xlane.xlu0 %61
    %v63 = vmul.f32 %v62, 0.001953125
    %v64 = vadd.f32 %v63, 1e-05
    %v65 = vrsqrt.pop %v64
    %vm66 = vcmask 7168
    %67 = vst.msk [vmem:[#allocation4] sm:$0xff] %vm66, %v49
    %68 = vst.msk [vmem:[#allocation5] sm:$0xff] %vm66, %v65
    %v69 = vld [vmem:[%s2] sm:$0xff]
    %v70 = vmul.f32 %v69, %v65
    %v71 = vld [vmem:[%s3] sm:$0xff]
    %v72 = vmul.f32 %v49, %v70
    %v73 = vsub.f32 %v71, %v72
    %75 = vset.pattern.permute.xlu0 0
    %76 = vperm.xlu0 %75, %v70
    %v77 = vpop.permute.xlu0 %76
    %v79 = vmul.f32 %v40, %v77
    %v80 = vmul.f32 %v41, %v77
    %v81 = vmul.f32 %v42, %v77
    %v82 = vmul.f32 %v43, %v77
    %84 = vset.pattern.permute.xlu0 0
    %85 = vperm.xlu0 %84, %v73
    %v86 = vpop.permute.xlu0 %85
    %v88 = vadd.f32 %v79, %v86
    %v89 = vadd.f32 %v80, %v86
    %v90 = vadd.f32 %v81, %v86
    %v91 = vadd.f32 %v82, %v86
    %v92 = vmax.f32 %v88, 0.0
    %v93 = vmax.f32 %v89, 0.0
    %v94 = vmax.f32 %v90, 0.0
    %v95 = vmax.f32 %v91, 0.0
    %96 = vrot.lane.b32.xlu0 %v92, 17
    %v97 = vpop.permute.xlu0 %96
    %98 = vrot.lane.b32.xlu0 %v93, 17
    %v99 = vpop.permute.xlu0 %98
    %100 = vrot.lane.b32.xlu0 %v94, 17
    %v101 = vpop.permute.xlu0 %100
    %102 = vrot.lane.b32.xlu0 %v95, 17
    %v103 = vpop.permute.xlu0 %102
    %v104 = vlaneseq
    %v105 = vand.u32 %v104, 127
    %vm106 = vcmp.lt.s32.totalorder %v105, 17
    %v107 = vsel %vm106, %v101, %v103
    %v108 = vsel %vm106, %v99, %v101
    %v109 = vsel %vm106, %v97, %v99
    %v110 = vsel %vm106, %v103, %v97
    %v111 = vld [vmem:[%s1] sm:$0xf]
    %v113 = vlaneseq
    %v114 = vshrl.u32 %v113, 7
    %v115 = vsub.s32 0, %v114
    %v116 = vrot.slane %v111, %v115
    %v117 = vlaneseq
    %v118 = vshrl.u32 %v117, 7
    %v119 = vsub.s32 1, %v118
    %v120 = vrot.slane %v111, %v119
    %v121 = vlaneseq
    %v122 = vshrl.u32 %v121, 7
    %v123 = vsub.s32 2, %v122
    %v124 = vrot.slane %v111, %v123
    %v125 = vlaneseq
    %v126 = vshrl.u32 %v125, 7
    %v127 = vsub.s32 3, %v126
    %v128 = vrot.slane %v111, %v127
    %v133 = vmul.f32 %v110, %v116
    %v134 = vmul.f32 %v109, %v120
    %v135 = vmul.f32 %v108, %v124
    %v136 = vmul.f32 %v107, %v128
    %v137 = vpack.c.bf16 %v133, %v133
    %v138 = vpack.c.bf16 %v134, %v134
    %v139 = vpack.c.bf16 %v135, %v135
    %v140 = vpack.c.bf16 %v136, %v136
    %v145 = vunpack.c.l.b16 %v137
    %v146 = vunpack.c.l.b16 %v138
    %v147 = vunpack.c.l.b16 %v139
    %v148 = vunpack.c.l.b16 %v140
    %v149 = vpack.c.b16 %v146, %v145
    %v150 = vpack.c.b16 %v148, %v147
    %153 = vst [vmem:[#allocation3] sm:$0xff] %v149
    %154 = vst [vmem:[#allocation3 + $0x8] sm:$0xff] %v150
    %155 = vrot.lane.b32.xlu0 %v92, 16
    %v156 = vpop.permute.xlu0 %155
    %157 = vrot.lane.b32.xlu0 %v93, 16
    %v158 = vpop.permute.xlu0 %157
    %159 = vrot.lane.b32.xlu0 %v94, 16
    %v160 = vpop.permute.xlu0 %159
    %161 = vrot.lane.b32.xlu0 %v95, 16
    %v162 = vpop.permute.xlu0 %161
    %vm163 = vcmp.lt.s32.totalorder %v105, 16
    %v164 = vsel %vm163, %v160, %v162
    %v165 = vsel %vm163, %v158, %v160
    %v166 = vsel %vm163, %v156, %v158
    %v167 = vsel %vm163, %v162, %v156
    %s168 = scalar_lea.vmem %s1, 4
    %v169 = vld [vmem:[%s168] sm:$0xf]
    %v171 = vlaneseq
    %v172 = vshrl.u32 %v171, 7
    %v173 = vsub.s32 0, %v172
    %v174 = vrot.slane %v169, %v173
    %v175 = vlaneseq
    %v176 = vshrl.u32 %v175, 7
    %v177 = vsub.s32 1, %v176
    %v178 = vrot.slane %v169, %v177
    %v179 = vlaneseq
    %v180 = vshrl.u32 %v179, 7
    %v181 = vsub.s32 2, %v180
    %v182 = vrot.slane %v169, %v181
    %v183 = vlaneseq
    %v184 = vshrl.u32 %v183, 7
    %v185 = vsub.s32 3, %v184
    %v186 = vrot.slane %v169, %v185
    %v191 = vmul.f32 %v167, %v174
    %v192 = vmul.f32 %v166, %v178
    %v193 = vmul.f32 %v165, %v182
    %v194 = vmul.f32 %v164, %v186
    %v195 = vpack.c.bf16 %v191, %v191
    %v196 = vpack.c.bf16 %v192, %v192
    %v197 = vpack.c.bf16 %v193, %v193
    %v198 = vpack.c.bf16 %v194, %v194
    %v203 = vunpack.c.l.b16 %v195
    %v204 = vunpack.c.l.b16 %v196
    %v205 = vunpack.c.l.b16 %v197
    %v206 = vunpack.c.l.b16 %v198
    %v207 = vpack.c.b16 %v204, %v203
    %v208 = vpack.c.b16 %v206, %v205
    %211 = vst [vmem:[#allocation3 + $0x10] sm:$0xff] %v207
    %212 = vst [vmem:[#allocation3 + $0x18] sm:$0xff] %v208
    %213 = vrot.lane.b32.xlu0 %v92, 15
    %v214 = vpop.permute.xlu0 %213
    %215 = vrot.lane.b32.xlu0 %v93, 15
    %v216 = vpop.permute.xlu0 %215
    %217 = vrot.lane.b32.xlu0 %v94, 15
    %v218 = vpop.permute.xlu0 %217
    %219 = vrot.lane.b32.xlu0 %v95, 15
    %v220 = vpop.permute.xlu0 %219
    %vm221 = vcmp.lt.s32.totalorder %v105, 15
    %v222 = vsel %vm221, %v218, %v220
    %v223 = vsel %vm221, %v216, %v218
    %v224 = vsel %vm221, %v214, %v216
    %v225 = vsel %vm221, %v220, %v214
    %s226 = scalar_lea.vmem %s1, 8
    %v227 = vld [vmem:[%s226] sm:$0xf]
    %v229 = vlaneseq
    %v230 = vshrl.u32 %v229, 7
    %v231 = vsub.s32 0, %v230
    %v232 = vrot.slane %v227, %v231
    %v233 = vlaneseq
    %v234 = vshrl.u32 %v233, 7
    %v235 = vsub.s32 1, %v234
    %v236 = vrot.slane %v227, %v235
    %v237 = vlaneseq
    %v238 = vshrl.u32 %v237, 7
    %v239 = vsub.s32 2, %v238
    %v240 = vrot.slane %v227, %v239
    %v241 = vlaneseq
    %v242 = vshrl.u32 %v241, 7
    %v243 = vsub.s32 3, %v242
    %v244 = vrot.slane %v227, %v243
    %v249 = vmul.f32 %v225, %v232
    %v250 = vmul.f32 %v224, %v236
    %v251 = vmul.f32 %v223, %v240
    %v252 = vmul.f32 %v222, %v244
    %v253 = vpack.c.bf16 %v249, %v249
    %v254 = vpack.c.bf16 %v250, %v250
    %v255 = vpack.c.bf16 %v251, %v251
    %v256 = vpack.c.bf16 %v252, %v252
    %v261 = vunpack.c.l.b16 %v253
    %v262 = vunpack.c.l.b16 %v254
    %v263 = vunpack.c.l.b16 %v255
    %v264 = vunpack.c.l.b16 %v256
    %v265 = vpack.c.b16 %v262, %v261
    %v266 = vpack.c.b16 %v264, %v263
    %269 = vst [vmem:[#allocation3 + $0x20] sm:$0xff] %v265
    %270 = vst [vmem:[#allocation3 + $0x28] sm:$0xff] %v266
    %271 = vrot.lane.b32.xlu0 %v92, 1
    %v272 = vpop.permute.xlu0 %271
    %273 = vrot.lane.b32.xlu0 %v93, 1
    %v274 = vpop.permute.xlu0 %273
    %275 = vrot.lane.b32.xlu0 %v94, 1
    %v276 = vpop.permute.xlu0 %275
    %277 = vrot.lane.b32.xlu0 %v95, 1
    %v278 = vpop.permute.xlu0 %277
    %vm279 = vcmp.lt.s32.totalorder %v105, 1
    %v280 = vsel %vm279, %v276, %v278
    %v281 = vsel %vm279, %v274, %v276
    %v282 = vsel %vm279, %v272, %v274
    %v283 = vsel %vm279, %v278, %v272
    %s284 = scalar_lea.vmem %s1, 12
    %v285 = vld [vmem:[%s284] sm:$0xf]
    %v287 = vlaneseq
    %v288 = vshrl.u32 %v287, 7
    %v289 = vsub.s32 0, %v288
    %v290 = vrot.slane %v285, %v289
    %v291 = vlaneseq
    %v292 = vshrl.u32 %v291, 7
    %v293 = vsub.s32 1, %v292
    %v294 = vrot.slane %v285, %v293
    %v295 = vlaneseq
    %v296 = vshrl.u32 %v295, 7
    %v297 = vsub.s32 2, %v296
    %v298 = vrot.slane %v285, %v297
    %v299 = vlaneseq
    %v300 = vshrl.u32 %v299, 7
    %v301 = vsub.s32 3, %v300
    %v302 = vrot.slane %v285, %v301
    %v307 = vmul.f32 %v283, %v290
    %v308 = vmul.f32 %v282, %v294
    %v309 = vmul.f32 %v281, %v298
    %v310 = vmul.f32 %v280, %v302
    %v311 = vpack.c.bf16 %v307, %v307
    %v312 = vpack.c.bf16 %v308, %v308
    %v313 = vpack.c.bf16 %v309, %v309
    %v314 = vpack.c.bf16 %v310, %v310
    %v319 = vunpack.c.l.b16 %v311
    %v320 = vunpack.c.l.b16 %v312
    %v321 = vunpack.c.l.b16 %v313
    %v322 = vunpack.c.l.b16 %v314
    %v323 = vpack.c.b16 %v320, %v319
    %v324 = vpack.c.b16 %v322, %v321
    %327 = vst [vmem:[#allocation3 + $0x30] sm:$0xff] %v323
    %328 = vst [vmem:[#allocation3 + $0x38] sm:$0xff] %v324
    %v329 = vpack.c.bf16 %v92, %v92
    %v330 = vpack.c.bf16 %v93, %v93
    %v331 = vpack.c.bf16 %v94, %v94
    %v332 = vpack.c.bf16 %v95, %v95
    %v337 = vunpack.c.l.b16 %v329
    %v338 = vunpack.c.l.b16 %v330
    %v339 = vunpack.c.l.b16 %v331
    %v340 = vunpack.c.l.b16 %v332
    %v341 = vpack.c.b16 %v338, %v337
    %v342 = vpack.c.b16 %v340, %v339
    %345 = vst [vmem:[#allocation3 + $0x40] sm:$0xff] %v341
    %346 = vst [vmem:[#allocation3 + $0x48] sm:$0xff] %v342
    %347 = vrot.lane.b32.xlu0 %v92, 127
    %v348 = vpop.permute.xlu0 %347
    %349 = vrot.lane.b32.xlu0 %v93, 127
    %v350 = vpop.permute.xlu0 %349
    %351 = vrot.lane.b32.xlu0 %v94, 127
    %v352 = vpop.permute.xlu0 %351
    %353 = vrot.lane.b32.xlu0 %v95, 127
    %v354 = vpop.permute.xlu0 %353
    %vm355 = vcmp.lt.s32.totalorder %v105, 127
    %v356 = vsel %vm355, %v352, %v354
    %v357 = vsel %vm355, %v350, %v352
    %v358 = vsel %vm355, %v348, %v350
    %v359 = vsel %vm355, %v354, %v348
    %s360 = scalar_lea.vmem %s1, 20
    %v361 = vld [vmem:[%s360] sm:$0xf]
    %v363 = vlaneseq
    %v364 = vshrl.u32 %v363, 7
    %v365 = vsub.s32 0, %v364
    %v366 = vrot.slane %v361, %v365
    %v367 = vlaneseq
    %v368 = vshrl.u32 %v367, 7
    %v369 = vsub.s32 1, %v368
    %v370 = vrot.slane %v361, %v369
    %v371 = vlaneseq
    %v372 = vshrl.u32 %v371, 7
    %v373 = vsub.s32 2, %v372
    %v374 = vrot.slane %v361, %v373
    %v375 = vlaneseq
    %v376 = vshrl.u32 %v375, 7
    %v377 = vsub.s32 3, %v376
    %v378 = vrot.slane %v361, %v377
    %v383 = vmul.f32 %v358, %v366
    %v384 = vmul.f32 %v357, %v370
    %v385 = vmul.f32 %v356, %v374
    %v386 = vmul.f32 %v359, %v378
    %v387 = vpack.c.bf16 %v383, %v383
    %v388 = vpack.c.bf16 %v384, %v384
    %v389 = vpack.c.bf16 %v385, %v385
    %v390 = vpack.c.bf16 %v386, %v386
    %v395 = vunpack.c.l.b16 %v387
    %v396 = vunpack.c.l.b16 %v388
    %v397 = vunpack.c.l.b16 %v389
    %v398 = vunpack.c.l.b16 %v390
    %v399 = vpack.c.b16 %v396, %v395
    %v400 = vpack.c.b16 %v398, %v397
    %403 = vst [vmem:[#allocation3 + $0x50] sm:$0xff] %v399
    %404 = vst [vmem:[#allocation3 + $0x58] sm:$0xff] %v400
    %405 = vrot.lane.b32.xlu0 %v92, 113
    %v406 = vpop.permute.xlu0 %405
    %407 = vrot.lane.b32.xlu0 %v93, 113
    %v408 = vpop.permute.xlu0 %407
    %409 = vrot.lane.b32.xlu0 %v94, 113
    %v410 = vpop.permute.xlu0 %409
    %411 = vrot.lane.b32.xlu0 %v95, 113
    %v412 = vpop.permute.xlu0 %411
    %vm413 = vcmp.lt.s32.totalorder %v105, 113
    %v414 = vsel %vm413, %v410, %v412
    %v415 = vsel %vm413, %v408, %v410
    %v416 = vsel %vm413, %v406, %v408
    %v417 = vsel %vm413, %v412, %v406
    %s418 = scalar_lea.vmem %s1, 24
    %v419 = vld [vmem:[%s418] sm:$0xf]
    %v421 = vlaneseq
    %v422 = vshrl.u32 %v421, 7
    %v423 = vsub.s32 0, %v422
    %v424 = vrot.slane %v419, %v423
    %v425 = vlaneseq
    %v426 = vshrl.u32 %v425, 7
    %v427 = vsub.s32 1, %v426
    %v428 = vrot.slane %v419, %v427
    %v429 = vlaneseq
    %v430 = vshrl.u32 %v429, 7
    %v431 = vsub.s32 2, %v430
    %v432 = vrot.slane %v419, %v431
    %v433 = vlaneseq
    %v434 = vshrl.u32 %v433, 7
    %v435 = vsub.s32 3, %v434
    %v436 = vrot.slane %v419, %v435
    %v441 = vmul.f32 %v416, %v424
    %v442 = vmul.f32 %v415, %v428
    %v443 = vmul.f32 %v414, %v432
    %v444 = vmul.f32 %v417, %v436
    %v445 = vpack.c.bf16 %v441, %v441
    %v446 = vpack.c.bf16 %v442, %v442
    %v447 = vpack.c.bf16 %v443, %v443
    %v448 = vpack.c.bf16 %v444, %v444
    %v453 = vunpack.c.l.b16 %v445
    %v454 = vunpack.c.l.b16 %v446
    %v455 = vunpack.c.l.b16 %v447
    %v456 = vunpack.c.l.b16 %v448
    %v457 = vpack.c.b16 %v454, %v453
    %v458 = vpack.c.b16 %v456, %v455
    %461 = vst [vmem:[#allocation3 + $0x60] sm:$0xff] %v457
    %462 = vst [vmem:[#allocation3 + $0x68] sm:$0xff] %v458
    %463 = vrot.lane.b32.xlu0 %v92, 112
    %v464 = vpop.permute.xlu0 %463
    %465 = vrot.lane.b32.xlu0 %v93, 112
    %v466 = vpop.permute.xlu0 %465
    %467 = vrot.lane.b32.xlu0 %v94, 112
    %v468 = vpop.permute.xlu0 %467
    %469 = vrot.lane.b32.xlu0 %v95, 112
    %v470 = vpop.permute.xlu0 %469
    %vm471 = vcmp.lt.s32.totalorder %v105, 112
    %v472 = vsel %vm471, %v468, %v470
    %v473 = vsel %vm471, %v466, %v468
    %v474 = vsel %vm471, %v464, %v466
    %v475 = vsel %vm471, %v470, %v464
    %s476 = scalar_lea.vmem %s1, 28
    %v477 = vld [vmem:[%s476] sm:$0xf]
    %v479 = vlaneseq
    %v480 = vshrl.u32 %v479, 7
    %v481 = vsub.s32 0, %v480
    %v482 = vrot.slane %v477, %v481
    %v483 = vlaneseq
    %v484 = vshrl.u32 %v483, 7
    %v485 = vsub.s32 1, %v484
    %v486 = vrot.slane %v477, %v485
    %v487 = vlaneseq
    %v488 = vshrl.u32 %v487, 7
    %v489 = vsub.s32 2, %v488
    %v490 = vrot.slane %v477, %v489
    %v491 = vlaneseq
    %v492 = vshrl.u32 %v491, 7
    %v493 = vsub.s32 3, %v492
    %v494 = vrot.slane %v477, %v493
    %v499 = vmul.f32 %v474, %v482
    %v500 = vmul.f32 %v473, %v486
    %v501 = vmul.f32 %v472, %v490
    %v502 = vmul.f32 %v475, %v494
    %v503 = vpack.c.bf16 %v499, %v499
    %v504 = vpack.c.bf16 %v500, %v500
    %v505 = vpack.c.bf16 %v501, %v501
    %v506 = vpack.c.bf16 %v502, %v502
    %v511 = vunpack.c.l.b16 %v503
    %v512 = vunpack.c.l.b16 %v504
    %v513 = vunpack.c.l.b16 %v505
    %v514 = vunpack.c.l.b16 %v506
    %v515 = vpack.c.b16 %v512, %v511
    %v516 = vpack.c.b16 %v514, %v513
    %519 = vst [vmem:[#allocation3 + $0x70] sm:$0xff] %v515
    %520 = vst [vmem:[#allocation3 + $0x78] sm:$0xff] %v516
    %521 = vrot.lane.b32.xlu0 %v92, 111
    %v522 = vpop.permute.xlu0 %521
    %523 = vrot.lane.b32.xlu0 %v93, 111
    %v524 = vpop.permute.xlu0 %523
    %525 = vrot.lane.b32.xlu0 %v94, 111
    %v526 = vpop.permute.xlu0 %525
    %527 = vrot.lane.b32.xlu0 %v95, 111
    %v528 = vpop.permute.xlu0 %527
    %vm529 = vcmp.lt.s32.totalorder %v105, 111
    %v530 = vsel %vm529, %v526, %v528
    %v531 = vsel %vm529, %v524, %v526
    %v532 = vsel %vm529, %v522, %v524
    %v533 = vsel %vm529, %v528, %v522
    %s534 = scalar_lea.vmem %s1, 32
    %v535 = vld [vmem:[%s534] sm:$0xf]
    %v537 = vlaneseq
    %v538 = vshrl.u32 %v537, 7
    %v539 = vsub.s32 0, %v538
    %v540 = vrot.slane %v535, %v539
    %v541 = vlaneseq
    %v542 = vshrl.u32 %v541, 7
    %v543 = vsub.s32 1, %v542
    %v544 = vrot.slane %v535, %v543
    %v545 = vlaneseq
    %v546 = vshrl.u32 %v545, 7
    %v547 = vsub.s32 2, %v546
    %v548 = vrot.slane %v535, %v547
    %v549 = vlaneseq
    %v550 = vshrl.u32 %v549, 7
    %v551 = vsub.s32 3, %v550
    %v552 = vrot.slane %v535, %v551
    %v557 = vmul.f32 %v532, %v540
    %v558 = vmul.f32 %v531, %v544
    %v559 = vmul.f32 %v530, %v548
    %v560 = vmul.f32 %v533, %v552
    %v561 = vpack.c.bf16 %v557, %v557
    %v562 = vpack.c.bf16 %v558, %v558
    %v563 = vpack.c.bf16 %v559, %v559
    %v564 = vpack.c.bf16 %v560, %v560
    %v569 = vunpack.c.l.b16 %v561
    %v570 = vunpack.c.l.b16 %v562
    %v571 = vunpack.c.l.b16 %v563
    %v572 = vunpack.c.l.b16 %v564
    %v573 = vpack.c.b16 %v570, %v569
    %v574 = vpack.c.b16 %v572, %v571
    %577 = vst [vmem:[#allocation3 + $0x80] sm:$0xff] %v573
    %578 = vst [vmem:[#allocation3 + $0x88] sm:$0xff] %v574
    %v579 = vld [vmem:[%s4] sm:$0xf]
    %v580 = vld [vmem:[#allocation3] sm:$0xff]
    %v581 = vld [vmem:[#allocation3 + $0x8] sm:$0xff]
    %v582 = vld [vmem:[#allocation3 + $0x10] sm:$0xff]
    %v583 = vld [vmem:[#allocation3 + $0x18] sm:$0xff]
    %v584 = vld [vmem:[#allocation3 + $0x20] sm:$0xff]
    %v585 = vld [vmem:[#allocation3 + $0x28] sm:$0xff]
    %v586 = vld [vmem:[#allocation3 + $0x30] sm:$0xff]
    %v587 = vld [vmem:[#allocation3 + $0x38] sm:$0xff]
    %v588 = vld [vmem:[#allocation3 + $0x40] sm:$0xff]
    %v589 = vld [vmem:[#allocation3 + $0x48] sm:$0xff]
    %v590 = vld [vmem:[#allocation3 + $0x50] sm:$0xff]
    %v591 = vld [vmem:[#allocation3 + $0x58] sm:$0xff]
    %v592 = vld [vmem:[#allocation3 + $0x60] sm:$0xff]
    %v593 = vld [vmem:[#allocation3 + $0x68] sm:$0xff]
    %v594 = vld [vmem:[#allocation3 + $0x70] sm:$0xff]
    %v595 = vld [vmem:[#allocation3 + $0x78] sm:$0xff]
    %v596 = vld [vmem:[#allocation3 + $0x80] sm:$0xff]
    %v597 = vld [vmem:[#allocation3 + $0x88] sm:$0xff]
    %v616 = vunpack.c.l.b16 %v580
    %v617 = vunpack.c.h.b16 %v580
    %v618 = vunpack.c.l.b16 %v581
    %v619 = vunpack.c.h.b16 %v581
    %v620 = vunpack.c.l.b16 %v582
    %v621 = vunpack.c.h.b16 %v582
    %v622 = vunpack.c.l.b16 %v583
    %v623 = vunpack.c.h.b16 %v583
    %v624 = vunpack.c.l.b16 %v584
    %v625 = vunpack.c.h.b16 %v584
    %v626 = vunpack.c.l.b16 %v585
    %v627 = vunpack.c.h.b16 %v585
    %v628 = vunpack.c.l.b16 %v586
    %v629 = vunpack.c.h.b16 %v586
    %v630 = vunpack.c.l.b16 %v587
    %v631 = vunpack.c.h.b16 %v587
    %v632 = vunpack.c.l.b16 %v588
    %v633 = vunpack.c.h.b16 %v588
    %v634 = vunpack.c.l.b16 %v589
    %v635 = vunpack.c.h.b16 %v589
    %v636 = vunpack.c.l.b16 %v590
    %v637 = vunpack.c.h.b16 %v590
    %v638 = vunpack.c.l.b16 %v591
    %v639 = vunpack.c.h.b16 %v591
    %v640 = vunpack.c.l.b16 %v592
    %v641 = vunpack.c.h.b16 %v592
    %v642 = vunpack.c.l.b16 %v593
    %v643 = vunpack.c.h.b16 %v593
    %v644 = vunpack.c.l.b16 %v594
    %v645 = vunpack.c.h.b16 %v594
    %v646 = vunpack.c.l.b16 %v595
    %v647 = vunpack.c.h.b16 %v595
    %v648 = vunpack.c.l.b16 %v596
    %v649 = vunpack.c.h.b16 %v596
    %v650 = vunpack.c.l.b16 %v597
    %v651 = vunpack.c.h.b16 %v597
    %v652 = vpack.c.b16 %v620, %v616
    %v653 = vpack.c.b16 %v621, %v617
    %v654 = vpack.c.b16 %v622, %v618
    %v655 = vpack.c.b16 %v623, %v619
    %v656 = vpack.c.b16 %v628, %v624
    %v657 = vpack.c.b16 %v629, %v625
    %v658 = vpack.c.b16 %v630, %v626
    %v659 = vpack.c.b16 %v631, %v627
    %v660 = vpack.c.b16 %v636, %v632
    %v661 = vpack.c.b16 %v637, %v633
    %v662 = vpack.c.b16 %v638, %v634
    %v663 = vpack.c.b16 %v639, %v635
    %v664 = vpack.c.b16 %v644, %v640
    %v665 = vpack.c.b16 %v645, %v641
    %v666 = vpack.c.b16 %v646, %v642
    %v667 = vpack.c.b16 %v647, %v643
    %v668 = vpack.c.b16 %v648, %v648
    %v669 = vpack.c.b16 %v649, %v649
    %v670 = vpack.c.b16 %v650, %v650
    %v671 = vpack.c.b16 %v651, %v651
    %vm688 = vcmask 588800
    %v690 = vsel %vm688, %v579, 0
    %vm692 = vcmask 1043456
    %v694 = vsel %vm692, %v668, 0
    %v697 = vsel %vm692, %v669, 0
    %v700 = vsel %vm692, %v670, 0
    %v703 = vsel %vm692, %v671, 0
    %705 = vmatprep.subr.bf16.mxu0 %v653
    %706 = vmatpush1.bf16.msra.mxu0 %v652
    %707 = vmatprep.subr.bf16.mxu0 %v657
    %708 = vmatpush1.bf16.msra.mxu0 %v656
    %709 = vmatprep.subr.bf16.mxu0 %v661
    %710 = vmatpush1.bf16.msra.mxu0 %v660
    %711 = vmatprep.subr.bf16.mxu0 %v665
    %712 = vmatpush1.bf16.msra.mxu0 %v664
    %713 = vmatprep.subr.bf16.mxu0 %v697
    %714 = vmatpush1.bf16.msra.mxu0 %v694
    %715 = vmatprep.subr.bf16.mxu0 0
    %716 = vmatpush1.bf16.msra.mxu0 0
    %717 = vmatprep.subr.bf16.mxu0 0
    %718 = vmatpush1.bf16.msra.mxu0 0
    %719 = vmatprep.subr.bf16.mxu0 0
    %720 = vmatpush1.bf16.msra.mxu0 0
    %721 = vmatprep.subr.bf16.mxu0 0
    %722 = vmatpush1.bf16.msra.mxu0 0
    %723 = vmatprep.subr.bf16.mxu0 0
    %724 = vmatpush1.bf16.msra.mxu0 0
    %725 = vmatprep.subr.bf16.mxu0 0
    %726 = vmatpush1.bf16.msra.mxu0 0
    %727 = vmatprep.subr.bf16.mxu0 0
    %728 = vmatpush1.bf16.msra.mxu0 0
    %729 = vmatprep.subr.bf16.mxu0 0
    %730 = vmatpush1.bf16.msra.mxu0 0
    %731 = vmatprep.subr.bf16.mxu0 0
    %732 = vmatpush1.bf16.msra.mxu0 0
    %733 = vmatprep.subr.bf16.mxu0 0
    %734 = vmatpush1.bf16.msra.mxu0 0
    %735 = vmatprep.subr.bf16.mxu0 0
    %736 = vmatpush1.bf16.msra.mxu0 0
    %737 = vmatprep.mubr.bf16.mxu0 0
    %738 = vmatmul.mubr.bf16.gmra.mrb[0].mxu0 %v690
    %v739 = vpop.f32.mrb[0].mxu0
    %v740 = vadd.f32 0.0, %v739
    %v741 = vpop.f32.mrb[0].mxu0
    %v742 = vadd.f32 0.0, %v741
    %v743 = vpop.f32.mrb[0].mxu0
    %v744 = vpop.f32.mrb[0].mxu0
    %745 = vdwg.mxu0
    %746 = vmatprep.subr.bf16.mxu0 %v655
    %747 = vmatpush1.bf16.msra.mxu0 %v654
    %748 = vmatprep.subr.bf16.mxu0 %v659
    %749 = vmatpush1.bf16.msra.mxu0 %v658
    %750 = vmatprep.subr.bf16.mxu0 %v663
    %751 = vmatpush1.bf16.msra.mxu0 %v662
    %752 = vmatprep.subr.bf16.mxu0 %v667
    %753 = vmatpush1.bf16.msra.mxu0 %v666
    %754 = vmatprep.subr.bf16.mxu0 %v703
    %755 = vmatpush1.bf16.msra.mxu0 %v700
    %756 = vmatprep.subr.bf16.mxu0 0
    %757 = vmatpush1.bf16.msra.mxu0 0
    %758 = vmatprep.subr.bf16.mxu0 0
    %759 = vmatpush1.bf16.msra.mxu0 0
    %760 = vmatprep.subr.bf16.mxu0 0
    %761 = vmatpush1.bf16.msra.mxu0 0
    %762 = vmatprep.subr.bf16.mxu0 0
    %763 = vmatpush1.bf16.msra.mxu0 0
    %764 = vmatprep.subr.bf16.mxu0 0
    %765 = vmatpush1.bf16.msra.mxu0 0
    %766 = vmatprep.subr.bf16.mxu0 0
    %767 = vmatpush1.bf16.msra.mxu0 0
    %768 = vmatprep.subr.bf16.mxu0 0
    %769 = vmatpush1.bf16.msra.mxu0 0
    %770 = vmatprep.subr.bf16.mxu0 0
    %771 = vmatpush1.bf16.msra.mxu0 0
    %772 = vmatprep.subr.bf16.mxu0 0
    %773 = vmatpush1.bf16.msra.mxu0 0
    %774 = vmatprep.subr.bf16.mxu0 0
    %775 = vmatpush1.bf16.msra.mxu0 0
    %776 = vmatprep.subr.bf16.mxu0 0
    %777 = vmatpush1.bf16.msra.mxu0 0
    %778 = vmatprep.mubr.bf16.mxu0 0
    %779 = vmatmul.mubr.bf16.gmra.mrb[0].mxu0 %v690
    %v780 = vpop.f32.mrb[0].mxu0
    %v781 = vadd.f32 0.0, %v780
    %v782 = vpop.f32.mrb[0].mxu0
    %v783 = vadd.f32 0.0, %v782
    %v784 = vpop.f32.mrb[0].mxu0
    %v785 = vpop.f32.mrb[0].mxu0
    %786 = vdwg.mxu0
    %v787 = vadd.f32 %v740, %v742
    %v788 = vadd.f32 %v787, %v781
    %v789 = vadd.f32 %v788, %v783
    %790 = vadd.xlane.f32.xlu0 %v789
    %v791 = vpop.xlane.xlu0 %790
    %v792 = vmul.f32 %v791, 0.001953125
    %v793 = vsub.f32 %v740, %v792
    %v794 = vsub.f32 %v742, %v792
    %v795 = vsub.f32 %v781, %v792
    %v796 = vsub.f32 %v783, %v792
    %v797 = vmul.f32 %v793, %v793
    %v798 = vmul.f32 %v794, %v794
    %v799 = vmul.f32 %v795, %v795
    %v800 = vmul.f32 %v796, %v796
    %v801 = vadd.f32 %v797, %v798
    %v802 = vadd.f32 %v801, %v799
    %v803 = vadd.f32 %v802, %v800
    %804 = vadd.xlane.f32.xlu0 %v803
    %v805 = vpop.xlane.xlu0 %804
    %v806 = vmul.f32 %v805, 0.001953125
    %807 = vst.msk [vmem:[#allocation4 + $0x8] sm:$0xff] %vm66, %v792
    %v808 = vadd.f32 %v806, 1e-05
    %v809 = vrsqrt.pop %v808
    %810 = vst.msk [vmem:[#allocation5 + $0x8] sm:$0xff] %vm66, %v809
    %811 = vst [vmem:[#allocation2] sm:$0xff] %v740
    %812 = vst [vmem:[#allocation2 + $0x8] sm:$0xff] %v742
    %813 = vst [vmem:[#allocation2 + $0x10] sm:$0xff] %v781
    %814 = vst [vmem:[#allocation2 + $0x18] sm:$0xff] %v783
    %v815 = vld [vmem:[%s0] sm:$0xff]
    %v816 = vld [vmem:[%s0 + $0x8] sm:$0xff]
    %v817 = vld [vmem:[%s0 + $0x10] sm:$0xff]
    %v818 = vld [vmem:[%s0 + $0x18] sm:$0xff]
    %v819 = vld [vmem:[#allocation4] sm:$0xff]
    %v820 = vld [vmem:[#allocation5] sm:$0xff]
    %v821 = vld [vmem:[%s5] sm:$0xff]
    %v822 = vmul.f32 %v821, %v820
    %v823 = vld [vmem:[%s6] sm:$0xff]
    %v824 = vmul.f32 %v819, %v822
    %v825 = vsub.f32 %v823, %v824
    %827 = vset.pattern.permute.xlu0 0
    %828 = vperm.xlu0 %827, %v822
    %v829 = vpop.permute.xlu0 %828
    %v831 = vmul.f32 %v815, %v829
    %v832 = vmul.f32 %v816, %v829
    %v833 = vmul.f32 %v817, %v829
    %v834 = vmul.f32 %v818, %v829
    %836 = vset.pattern.permute.xlu0 0
    %837 = vperm.xlu0 %836, %v825
    %v838 = vpop.permute.xlu0 %837
    %v840 = vadd.f32 %v831, %v838
    %v841 = vadd.f32 %v832, %v838
    %v842 = vadd.f32 %v833, %v838
    %v843 = vadd.f32 %v834, %v838
    %v844 = vmax.f32 %v840, 0.0
    %v845 = vmax.f32 %v841, 0.0
    %v846 = vmax.f32 %v842, 0.0
    %v847 = vmax.f32 %v843, 0.0
    %848 = vrot.lane.b32.xlu0 %v844, 17
    %v849 = vpop.permute.xlu0 %848
    %850 = vrot.lane.b32.xlu0 %v845, 17
    %v851 = vpop.permute.xlu0 %850
    %852 = vrot.lane.b32.xlu0 %v846, 17
    %v853 = vpop.permute.xlu0 %852
    %854 = vrot.lane.b32.xlu0 %v847, 17
    %v855 = vpop.permute.xlu0 %854
    %v856 = vsel %vm106, %v853, %v855
    %v857 = vsel %vm106, %v851, %v853
    %v858 = vsel %vm106, %v849, %v851
    %v859 = vsel %vm106, %v855, %v849
    %v860 = vld [vmem:[%s1] sm:$0xf]
    %v862 = vlaneseq
    %v863 = vshrl.u32 %v862, 7
    %v864 = vsub.s32 0, %v863
    %v865 = vrot.slane %v860, %v864
    %v866 = vlaneseq
    %v867 = vshrl.u32 %v866, 7
    %v868 = vsub.s32 1, %v867
    %v869 = vrot.slane %v860, %v868
    %v870 = vlaneseq
    %v871 = vshrl.u32 %v870, 7
    %v872 = vsub.s32 2, %v871
    %v873 = vrot.slane %v860, %v872
    %v874 = vlaneseq
    %v875 = vshrl.u32 %v874, 7
    %v876 = vsub.s32 3, %v875
    %v877 = vrot.slane %v860, %v876
    %v882 = vmul.f32 %v859, %v865
    %v883 = vmul.f32 %v858, %v869
    %v884 = vmul.f32 %v857, %v873
    %v885 = vmul.f32 %v856, %v877
    %v886 = vpack.c.bf16 %v882, %v882
    %v887 = vpack.c.bf16 %v883, %v883
    %v888 = vpack.c.bf16 %v884, %v884
    %v889 = vpack.c.bf16 %v885, %v885
    %v894 = vunpack.c.l.b16 %v886
    %v895 = vunpack.c.l.b16 %v887
    %v896 = vunpack.c.l.b16 %v888
    %v897 = vunpack.c.l.b16 %v889
    %v898 = vpack.c.b16 %v895, %v894
    %v899 = vpack.c.b16 %v897, %v896
    %902 = vst [vmem:[#allocation3] sm:$0xff] %v898
    %903 = vst [vmem:[#allocation3 + $0x8] sm:$0xff] %v899
    %904 = vrot.lane.b32.xlu0 %v844, 16
    %v905 = vpop.permute.xlu0 %904
    %906 = vrot.lane.b32.xlu0 %v845, 16
    %v907 = vpop.permute.xlu0 %906
    %908 = vrot.lane.b32.xlu0 %v846, 16
    %v909 = vpop.permute.xlu0 %908
    %910 = vrot.lane.b32.xlu0 %v847, 16
    %v911 = vpop.permute.xlu0 %910
    %v912 = vsel %vm163, %v909, %v911
    %v913 = vsel %vm163, %v907, %v909
    %v914 = vsel %vm163, %v905, %v907
    %v915 = vsel %vm163, %v911, %v905
    %v916 = vld [vmem:[%s168] sm:$0xf]
    %v918 = vlaneseq
    %v919 = vshrl.u32 %v918, 7
    %v920 = vsub.s32 0, %v919
    %v921 = vrot.slane %v916, %v920
    %v922 = vlaneseq
    %v923 = vshrl.u32 %v922, 7
    %v924 = vsub.s32 1, %v923
    %v925 = vrot.slane %v916, %v924
    %v926 = vlaneseq
    %v927 = vshrl.u32 %v926, 7
    %v928 = vsub.s32 2, %v927
    %v929 = vrot.slane %v916, %v928
    %v930 = vlaneseq
    %v931 = vshrl.u32 %v930, 7
    %v932 = vsub.s32 3, %v931
    %v933 = vrot.slane %v916, %v932
    %v938 = vmul.f32 %v915, %v921
    %v939 = vmul.f32 %v914, %v925
    %v940 = vmul.f32 %v913, %v929
    %v941 = vmul.f32 %v912, %v933
    %v942 = vpack.c.bf16 %v938, %v938
    %v943 = vpack.c.bf16 %v939, %v939
    %v944 = vpack.c.bf16 %v940, %v940
    %v945 = vpack.c.bf16 %v941, %v941
    %v950 = vunpack.c.l.b16 %v942
    %v951 = vunpack.c.l.b16 %v943
    %v952 = vunpack.c.l.b16 %v944
    %v953 = vunpack.c.l.b16 %v945
    %v954 = vpack.c.b16 %v951, %v950
    %v955 = vpack.c.b16 %v953, %v952
    %958 = vst [vmem:[#allocation3 + $0x10] sm:$0xff] %v954
    %959 = vst [vmem:[#allocation3 + $0x18] sm:$0xff] %v955
    %960 = vrot.lane.b32.xlu0 %v844, 15
    %v961 = vpop.permute.xlu0 %960
    %962 = vrot.lane.b32.xlu0 %v845, 15
    %v963 = vpop.permute.xlu0 %962
    %964 = vrot.lane.b32.xlu0 %v846, 15
    %v965 = vpop.permute.xlu0 %964
    %966 = vrot.lane.b32.xlu0 %v847, 15
    %v967 = vpop.permute.xlu0 %966
    %v968 = vsel %vm221, %v965, %v967
    %v969 = vsel %vm221, %v963, %v965
    %v970 = vsel %vm221, %v961, %v963
    %v971 = vsel %vm221, %v967, %v961
    %v972 = vld [vmem:[%s226] sm:$0xf]
    %v974 = vlaneseq
    %v975 = vshrl.u32 %v974, 7
    %v976 = vsub.s32 0, %v975
    %v977 = vrot.slane %v972, %v976
    %v978 = vlaneseq
    %v979 = vshrl.u32 %v978, 7
    %v980 = vsub.s32 1, %v979
    %v981 = vrot.slane %v972, %v980
    %v982 = vlaneseq
    %v983 = vshrl.u32 %v982, 7
    %v984 = vsub.s32 2, %v983
    %v985 = vrot.slane %v972, %v984
    %v986 = vlaneseq
    %v987 = vshrl.u32 %v986, 7
    %v988 = vsub.s32 3, %v987
    %v989 = vrot.slane %v972, %v988
    %v994 = vmul.f32 %v971, %v977
    %v995 = vmul.f32 %v970, %v981
    %v996 = vmul.f32 %v969, %v985
    %v997 = vmul.f32 %v968, %v989
    %v998 = vpack.c.bf16 %v994, %v994
    %v999 = vpack.c.bf16 %v995, %v995
    %v1000 = vpack.c.bf16 %v996, %v996
    %v1001 = vpack.c.bf16 %v997, %v997
    %v1006 = vunpack.c.l.b16 %v998
    %v1007 = vunpack.c.l.b16 %v999
    %v1008 = vunpack.c.l.b16 %v1000
    %v1009 = vunpack.c.l.b16 %v1001
    %v1010 = vpack.c.b16 %v1007, %v1006
    %v1011 = vpack.c.b16 %v1009, %v1008
    %1014 = vst [vmem:[#allocation3 + $0x20] sm:$0xff] %v1010
    %1015 = vst [vmem:[#allocation3 + $0x28] sm:$0xff] %v1011
    %1016 = vrot.lane.b32.xlu0 %v844, 1
    %v1017 = vpop.permute.xlu0 %1016
    %1018 = vrot.lane.b32.xlu0 %v845, 1
    %v1019 = vpop.permute.xlu0 %1018
    %1020 = vrot.lane.b32.xlu0 %v846, 1
    %v1021 = vpop.permute.xlu0 %1020
    %1022 = vrot.lane.b32.xlu0 %v847, 1
    %v1023 = vpop.permute.xlu0 %1022
    %v1024 = vsel %vm279, %v1021, %v1023
    %v1025 = vsel %vm279, %v1019, %v1021
    %v1026 = vsel %vm279, %v1017, %v1019
    %v1027 = vsel %vm279, %v1023, %v1017
    %v1028 = vld [vmem:[%s284] sm:$0xf]
    %v1030 = vlaneseq
    %v1031 = vshrl.u32 %v1030, 7
    %v1032 = vsub.s32 0, %v1031
    %v1033 = vrot.slane %v1028, %v1032
    %v1034 = vlaneseq
    %v1035 = vshrl.u32 %v1034, 7
    %v1036 = vsub.s32 1, %v1035
    %v1037 = vrot.slane %v1028, %v1036
    %v1038 = vlaneseq
    %v1039 = vshrl.u32 %v1038, 7
    %v1040 = vsub.s32 2, %v1039
    %v1041 = vrot.slane %v1028, %v1040
    %v1042 = vlaneseq
    %v1043 = vshrl.u32 %v1042, 7
    %v1044 = vsub.s32 3, %v1043
    %v1045 = vrot.slane %v1028, %v1044
    %v1050 = vmul.f32 %v1027, %v1033
    %v1051 = vmul.f32 %v1026, %v1037
    %v1052 = vmul.f32 %v1025, %v1041
    %v1053 = vmul.f32 %v1024, %v1045
    %v1054 = vpack.c.bf16 %v1050, %v1050
    %v1055 = vpack.c.bf16 %v1051, %v1051
    %v1056 = vpack.c.bf16 %v1052, %v1052
    %v1057 = vpack.c.bf16 %v1053, %v1053
    %v1062 = vunpack.c.l.b16 %v1054
    %v1063 = vunpack.c.l.b16 %v1055
    %v1064 = vunpack.c.l.b16 %v1056
    %v1065 = vunpack.c.l.b16 %v1057
    %v1066 = vpack.c.b16 %v1063, %v1062
    %v1067 = vpack.c.b16 %v1065, %v1064
    %1070 = vst [vmem:[#allocation3 + $0x30] sm:$0xff] %v1066
    %1071 = vst [vmem:[#allocation3 + $0x38] sm:$0xff] %v1067
    %v1072 = vpack.c.bf16 %v844, %v844
    %v1073 = vpack.c.bf16 %v845, %v845
    %v1074 = vpack.c.bf16 %v846, %v846
    %v1075 = vpack.c.bf16 %v847, %v847
    %v1080 = vunpack.c.l.b16 %v1072
    %v1081 = vunpack.c.l.b16 %v1073
    %v1082 = vunpack.c.l.b16 %v1074
    %v1083 = vunpack.c.l.b16 %v1075
    %v1084 = vpack.c.b16 %v1081, %v1080
    %v1085 = vpack.c.b16 %v1083, %v1082
    %1088 = vst [vmem:[#allocation3 + $0x40] sm:$0xff] %v1084
    %1089 = vst [vmem:[#allocation3 + $0x48] sm:$0xff] %v1085
    %1090 = vrot.lane.b32.xlu0 %v844, 127
    %v1091 = vpop.permute.xlu0 %1090
    %1092 = vrot.lane.b32.xlu0 %v845, 127
    %v1093 = vpop.permute.xlu0 %1092
    %1094 = vrot.lane.b32.xlu0 %v846, 127
    %v1095 = vpop.permute.xlu0 %1094
    %1096 = vrot.lane.b32.xlu0 %v847, 127
    %v1097 = vpop.permute.xlu0 %1096
    %v1098 = vsel %vm355, %v1095, %v1097
    %v1099 = vsel %vm355, %v1093, %v1095
    %v1100 = vsel %vm355, %v1091, %v1093
    %v1101 = vsel %vm355, %v1097, %v1091
    %v1102 = vld [vmem:[%s360] sm:$0xf]
    %v1104 = vlaneseq
    %v1105 = vshrl.u32 %v1104, 7
    %v1106 = vsub.s32 0, %v1105
    %v1107 = vrot.slane %v1102, %v1106
    %v1108 = vlaneseq
    %v1109 = vshrl.u32 %v1108, 7
    %v1110 = vsub.s32 1, %v1109
    %v1111 = vrot.slane %v1102, %v1110
    %v1112 = vlaneseq
    %v1113 = vshrl.u32 %v1112, 7
    %v1114 = vsub.s32 2, %v1113
    %v1115 = vrot.slane %v1102, %v1114
    %v1116 = vlaneseq
    %v1117 = vshrl.u32 %v1116, 7
    %v1118 = vsub.s32 3, %v1117
    %v1119 = vrot.slane %v1102, %v1118
    %v1124 = vmul.f32 %v1100, %v1107
    %v1125 = vmul.f32 %v1099, %v1111
    %v1126 = vmul.f32 %v1098, %v1115
    %v1127 = vmul.f32 %v1101, %v1119
    %v1128 = vpack.c.bf16 %v1124, %v1124
    %v1129 = vpack.c.bf16 %v1125, %v1125
    %v1130 = vpack.c.bf16 %v1126, %v1126
    %v1131 = vpack.c.bf16 %v1127, %v1127
    %v1136 = vunpack.c.l.b16 %v1128
    %v1137 = vunpack.c.l.b16 %v1129
    %v1138 = vunpack.c.l.b16 %v1130
    %v1139 = vunpack.c.l.b16 %v1131
    %v1140 = vpack.c.b16 %v1137, %v1136
    %v1141 = vpack.c.b16 %v1139, %v1138
    %1144 = vst [vmem:[#allocation3 + $0x50] sm:$0xff] %v1140
    %1145 = vst [vmem:[#allocation3 + $0x58] sm:$0xff] %v1141
    %1146 = vrot.lane.b32.xlu0 %v844, 113
    %v1147 = vpop.permute.xlu0 %1146
    %1148 = vrot.lane.b32.xlu0 %v845, 113
    %v1149 = vpop.permute.xlu0 %1148
    %1150 = vrot.lane.b32.xlu0 %v846, 113
    %v1151 = vpop.permute.xlu0 %1150
    %1152 = vrot.lane.b32.xlu0 %v847, 113
    %v1153 = vpop.permute.xlu0 %1152
    %v1154 = vsel %vm413, %v1151, %v1153
    %v1155 = vsel %vm413, %v1149, %v1151
    %v1156 = vsel %vm413, %v1147, %v1149
    %v1157 = vsel %vm413, %v1153, %v1147
    %v1158 = vld [vmem:[%s418] sm:$0xf]
    %v1160 = vlaneseq
    %v1161 = vshrl.u32 %v1160, 7
    %v1162 = vsub.s32 0, %v1161
    %v1163 = vrot.slane %v1158, %v1162
    %v1164 = vlaneseq
    %v1165 = vshrl.u32 %v1164, 7
    %v1166 = vsub.s32 1, %v1165
    %v1167 = vrot.slane %v1158, %v1166
    %v1168 = vlaneseq
    %v1169 = vshrl.u32 %v1168, 7
    %v1170 = vsub.s32 2, %v1169
    %v1171 = vrot.slane %v1158, %v1170
    %v1172 = vlaneseq
    %v1173 = vshrl.u32 %v1172, 7
    %v1174 = vsub.s32 3, %v1173
    %v1175 = vrot.slane %v1158, %v1174
    %v1180 = vmul.f32 %v1156, %v1163
    %v1181 = vmul.f32 %v1155, %v1167
    %v1182 = vmul.f32 %v1154, %v1171
    %v1183 = vmul.f32 %v1157, %v1175
    %v1184 = vpack.c.bf16 %v1180, %v1180
    %v1185 = vpack.c.bf16 %v1181, %v1181
    %v1186 = vpack.c.bf16 %v1182, %v1182
    %v1187 = vpack.c.bf16 %v1183, %v1183
    %v1192 = vunpack.c.l.b16 %v1184
    %v1193 = vunpack.c.l.b16 %v1185
    %v1194 = vunpack.c.l.b16 %v1186
    %v1195 = vunpack.c.l.b16 %v1187
    %v1196 = vpack.c.b16 %v1193, %v1192
    %v1197 = vpack.c.b16 %v1195, %v1194
    %1200 = vst [vmem:[#allocation3 + $0x60] sm:$0xff] %v1196
    %1201 = vst [vmem:[#allocation3 + $0x68] sm:$0xff] %v1197
    %1202 = vrot.lane.b32.xlu0 %v844, 112
    %v1203 = vpop.permute.xlu0 %1202
    %1204 = vrot.lane.b32.xlu0 %v845, 112
    %v1205 = vpop.permute.xlu0 %1204
    %1206 = vrot.lane.b32.xlu0 %v846, 112
    %v1207 = vpop.permute.xlu0 %1206
    %1208 = vrot.lane.b32.xlu0 %v847, 112
    %v1209 = vpop.permute.xlu0 %1208
    %v1210 = vsel %vm471, %v1207, %v1209
    %v1211 = vsel %vm471, %v1205, %v1207
    %v1212 = vsel %vm471, %v1203, %v1205
    %v1213 = vsel %vm471, %v1209, %v1203
    %v1214 = vld [vmem:[%s476] sm:$0xf]
    %v1216 = vlaneseq
    %v1217 = vshrl.u32 %v1216, 7
    %v1218 = vsub.s32 0, %v1217
    %v1219 = vrot.slane %v1214, %v1218
    %v1220 = vlaneseq
    %v1221 = vshrl.u32 %v1220, 7
    %v1222 = vsub.s32 1, %v1221
    %v1223 = vrot.slane %v1214, %v1222
    %v1224 = vlaneseq
    %v1225 = vshrl.u32 %v1224, 7
    %v1226 = vsub.s32 2, %v1225
    %v1227 = vrot.slane %v1214, %v1226
    %v1228 = vlaneseq
    %v1229 = vshrl.u32 %v1228, 7
    %v1230 = vsub.s32 3, %v1229
    %v1231 = vrot.slane %v1214, %v1230
    %v1236 = vmul.f32 %v1212, %v1219
    %v1237 = vmul.f32 %v1211, %v1223
    %v1238 = vmul.f32 %v1210, %v1227
    %v1239 = vmul.f32 %v1213, %v1231
    %v1240 = vpack.c.bf16 %v1236, %v1236
    %v1241 = vpack.c.bf16 %v1237, %v1237
    %v1242 = vpack.c.bf16 %v1238, %v1238
    %v1243 = vpack.c.bf16 %v1239, %v1239
    %v1248 = vunpack.c.l.b16 %v1240
    %v1249 = vunpack.c.l.b16 %v1241
    %v1250 = vunpack.c.l.b16 %v1242
    %v1251 = vunpack.c.l.b16 %v1243
    %v1252 = vpack.c.b16 %v1249, %v1248
    %v1253 = vpack.c.b16 %v1251, %v1250
    %1256 = vst [vmem:[#allocation3 + $0x70] sm:$0xff] %v1252
    %1257 = vst [vmem:[#allocation3 + $0x78] sm:$0xff] %v1253
    %1258 = vrot.lane.b32.xlu0 %v844, 111
    %v1259 = vpop.permute.xlu0 %1258
    %1260 = vrot.lane.b32.xlu0 %v845, 111
    %v1261 = vpop.permute.xlu0 %1260
    %1262 = vrot.lane.b32.xlu0 %v846, 111
    %v1263 = vpop.permute.xlu0 %1262
    %1264 = vrot.lane.b32.xlu0 %v847, 111
    %v1265 = vpop.permute.xlu0 %1264
    %v1266 = vsel %vm529, %v1263, %v1265
    %v1267 = vsel %vm529, %v1261, %v1263
    %v1268 = vsel %vm529, %v1259, %v1261
    %v1269 = vsel %vm529, %v1265, %v1259
    %v1270 = vld [vmem:[%s534] sm:$0xf]
    %v1272 = vlaneseq
    %v1273 = vshrl.u32 %v1272, 7
    %v1274 = vsub.s32 0, %v1273
    %v1275 = vrot.slane %v1270, %v1274
    %v1276 = vlaneseq
    %v1277 = vshrl.u32 %v1276, 7
    %v1278 = vsub.s32 1, %v1277
    %v1279 = vrot.slane %v1270, %v1278
    %v1280 = vlaneseq
    %v1281 = vshrl.u32 %v1280, 7
    %v1282 = vsub.s32 2, %v1281
    %v1283 = vrot.slane %v1270, %v1282
    %v1284 = vlaneseq
    %v1285 = vshrl.u32 %v1284, 7
    %v1286 = vsub.s32 3, %v1285
    %v1287 = vrot.slane %v1270, %v1286
    %v1292 = vmul.f32 %v1268, %v1275
    %v1293 = vmul.f32 %v1267, %v1279
    %v1294 = vmul.f32 %v1266, %v1283
    %v1295 = vmul.f32 %v1269, %v1287
    %v1296 = vpack.c.bf16 %v1292, %v1292
    %v1297 = vpack.c.bf16 %v1293, %v1293
    %v1298 = vpack.c.bf16 %v1294, %v1294
    %v1299 = vpack.c.bf16 %v1295, %v1295
    %v1304 = vunpack.c.l.b16 %v1296
    %v1305 = vunpack.c.l.b16 %v1297
    %v1306 = vunpack.c.l.b16 %v1298
    %v1307 = vunpack.c.l.b16 %v1299
    %v1308 = vpack.c.b16 %v1305, %v1304
    %v1309 = vpack.c.b16 %v1307, %v1306
    %1312 = vst [vmem:[#allocation3 + $0x80] sm:$0xff] %v1308
    %1313 = vst [vmem:[#allocation3 + $0x88] sm:$0xff] %v1309
    %v1314 = vld [vmem:[#allocation2] sm:$0xff]
    %v1315 = vld [vmem:[#allocation2 + $0x8] sm:$0xff]
    %v1316 = vld [vmem:[#allocation2 + $0x10] sm:$0xff]
    %v1317 = vld [vmem:[#allocation2 + $0x18] sm:$0xff]
    %v1318 = vld [vmem:[#allocation4 + $0x8] sm:$0xff]
    %v1319 = vld [vmem:[#allocation5 + $0x8] sm:$0xff]
    %v1320 = vld [vmem:[%s5 + $0x8] sm:$0xff]
    %v1321 = vmul.f32 %v1320, %v1319
    %v1322 = vld [vmem:[%s6 + $0x8] sm:$0xff]
    %v1323 = vmul.f32 %v1318, %v1321
    %v1324 = vsub.f32 %v1322, %v1323
    %1326 = vset.pattern.permute.xlu0 0
    %1327 = vperm.xlu0 %1326, %v1321
    %v1328 = vpop.permute.xlu0 %1327
    %v1330 = vmul.f32 %v1314, %v1328
    %v1331 = vmul.f32 %v1315, %v1328
    %v1332 = vmul.f32 %v1316, %v1328
    %v1333 = vmul.f32 %v1317, %v1328
    %1335 = vset.pattern.permute.xlu0 0
    %1336 = vperm.xlu0 %1335, %v1324
    %v1337 = vpop.permute.xlu0 %1336
    %v1339 = vadd.f32 %v1330, %v1337
    %v1340 = vadd.f32 %v1331, %v1337
    %v1341 = vadd.f32 %v1332, %v1337
    %v1342 = vadd.f32 %v1333, %v1337
    %v1343 = vmax.f32 %v1339, 0.0
    %v1344 = vmax.f32 %v1340, 0.0
    %v1345 = vmax.f32 %v1341, 0.0
    %v1346 = vmax.f32 %v1342, 0.0
    %1347 = vrot.lane.b32.xlu0 %v1343, 17
    %v1348 = vpop.permute.xlu0 %1347
    %1349 = vrot.lane.b32.xlu0 %v1344, 17
    %v1350 = vpop.permute.xlu0 %1349
    %1351 = vrot.lane.b32.xlu0 %v1345, 17
    %v1352 = vpop.permute.xlu0 %1351
    %1353 = vrot.lane.b32.xlu0 %v1346, 17
    %v1354 = vpop.permute.xlu0 %1353
    %v1355 = vsel %vm106, %v1352, %v1354
    %v1356 = vsel %vm106, %v1350, %v1352
    %v1357 = vsel %vm106, %v1348, %v1350
    %v1358 = vsel %vm106, %v1354, %v1348
    %v1359 = vld [vmem:[%s1] sm:$0xf]
    %v1361 = vlaneseq
    %v1362 = vshrl.u32 %v1361, 7
    %v1363 = vsub.s32 0, %v1362
    %v1364 = vrot.slane %v1359, %v1363
    %v1365 = vlaneseq
    %v1366 = vshrl.u32 %v1365, 7
    %v1367 = vsub.s32 1, %v1366
    %v1368 = vrot.slane %v1359, %v1367
    %v1369 = vlaneseq
    %v1370 = vshrl.u32 %v1369, 7
    %v1371 = vsub.s32 2, %v1370
    %v1372 = vrot.slane %v1359, %v1371
    %v1373 = vlaneseq
    %v1374 = vshrl.u32 %v1373, 7
    %v1375 = vsub.s32 3, %v1374
    %v1376 = vrot.slane %v1359, %v1375
    %v1381 = vmul.f32 %v1358, %v1364
    %v1382 = vmul.f32 %v1357, %v1368
    %v1383 = vmul.f32 %v1356, %v1372
    %v1384 = vmul.f32 %v1355, %v1376
    %v1385 = vpack.c.bf16 %v1381, %v1381
    %v1386 = vpack.c.bf16 %v1382, %v1382
    %v1387 = vpack.c.bf16 %v1383, %v1383
    %v1388 = vpack.c.bf16 %v1384, %v1384
    %v1393 = vunpack.c.l.b16 %v1385
    %v1394 = vunpack.c.l.b16 %v1386
    %v1395 = vunpack.c.l.b16 %v1387
    %v1396 = vunpack.c.l.b16 %v1388
    %v1397 = vpack.c.b16 %v1394, %v1393
    %v1398 = vpack.c.b16 %v1396, %v1395
    %1401 = vst [vmem:[#allocation3 + $0x90] sm:$0xff] %v1397
    %1402 = vst [vmem:[#allocation3 + $0x98] sm:$0xff] %v1398
    %1403 = vrot.lane.b32.xlu0 %v1343, 16
    %v1404 = vpop.permute.xlu0 %1403
    %1405 = vrot.lane.b32.xlu0 %v1344, 16
    %v1406 = vpop.permute.xlu0 %1405
    %1407 = vrot.lane.b32.xlu0 %v1345, 16
    %v1408 = vpop.permute.xlu0 %1407
    %1409 = vrot.lane.b32.xlu0 %v1346, 16
    %v1410 = vpop.permute.xlu0 %1409
    %v1411 = vsel %vm163, %v1408, %v1410
    %v1412 = vsel %vm163, %v1406, %v1408
    %v1413 = vsel %vm163, %v1404, %v1406
    %v1414 = vsel %vm163, %v1410, %v1404
    %v1415 = vld [vmem:[%s168] sm:$0xf]
    %v1417 = vlaneseq
    %v1418 = vshrl.u32 %v1417, 7
    %v1419 = vsub.s32 0, %v1418
    %v1420 = vrot.slane %v1415, %v1419
    %v1421 = vlaneseq
    %v1422 = vshrl.u32 %v1421, 7
    %v1423 = vsub.s32 1, %v1422
    %v1424 = vrot.slane %v1415, %v1423
    %v1425 = vlaneseq
    %v1426 = vshrl.u32 %v1425, 7
    %v1427 = vsub.s32 2, %v1426
    %v1428 = vrot.slane %v1415, %v1427
    %v1429 = vlaneseq
    %v1430 = vshrl.u32 %v1429, 7
    %v1431 = vsub.s32 3, %v1430
    %v1432 = vrot.slane %v1415, %v1431
    %v1437 = vmul.f32 %v1414, %v1420
    %v1438 = vmul.f32 %v1413, %v1424
    %v1439 = vmul.f32 %v1412, %v1428
    %v1440 = vmul.f32 %v1411, %v1432
    %v1441 = vpack.c.bf16 %v1437, %v1437
    %v1442 = vpack.c.bf16 %v1438, %v1438
    %v1443 = vpack.c.bf16 %v1439, %v1439
    %v1444 = vpack.c.bf16 %v1440, %v1440
    %v1449 = vunpack.c.l.b16 %v1441
    %v1450 = vunpack.c.l.b16 %v1442
    %v1451 = vunpack.c.l.b16 %v1443
    %v1452 = vunpack.c.l.b16 %v1444
    %v1453 = vpack.c.b16 %v1450, %v1449
    %v1454 = vpack.c.b16 %v1452, %v1451
    %1457 = vst [vmem:[#allocation3 + $0xa0] sm:$0xff] %v1453
    %1458 = vst [vmem:[#allocation3 + $0xa8] sm:$0xff] %v1454
    %1459 = vrot.lane.b32.xlu0 %v1343, 15
    %v1460 = vpop.permute.xlu0 %1459
    %1461 = vrot.lane.b32.xlu0 %v1344, 15
    %v1462 = vpop.permute.xlu0 %1461
    %1463 = vrot.lane.b32.xlu0 %v1345, 15
    %v1464 = vpop.permute.xlu0 %1463
    %1465 = vrot.lane.b32.xlu0 %v1346, 15
    %v1466 = vpop.permute.xlu0 %1465
    %v1467 = vsel %vm221, %v1464, %v1466
    %v1468 = vsel %vm221, %v1462, %v1464
    %v1469 = vsel %vm221, %v1460, %v1462
    %v1470 = vsel %vm221, %v1466, %v1460
    %v1471 = vld [vmem:[%s226] sm:$0xf]
    %v1473 = vlaneseq
    %v1474 = vshrl.u32 %v1473, 7
    %v1475 = vsub.s32 0, %v1474
    %v1476 = vrot.slane %v1471, %v1475
    %v1477 = vlaneseq
    %v1478 = vshrl.u32 %v1477, 7
    %v1479 = vsub.s32 1, %v1478
    %v1480 = vrot.slane %v1471, %v1479
    %v1481 = vlaneseq
    %v1482 = vshrl.u32 %v1481, 7
    %v1483 = vsub.s32 2, %v1482
    %v1484 = vrot.slane %v1471, %v1483
    %v1485 = vlaneseq
    %v1486 = vshrl.u32 %v1485, 7
    %v1487 = vsub.s32 3, %v1486
    %v1488 = vrot.slane %v1471, %v1487
    %v1493 = vmul.f32 %v1470, %v1476
    %v1494 = vmul.f32 %v1469, %v1480
    %v1495 = vmul.f32 %v1468, %v1484
    %v1496 = vmul.f32 %v1467, %v1488
    %v1497 = vpack.c.bf16 %v1493, %v1493
    %v1498 = vpack.c.bf16 %v1494, %v1494
    %v1499 = vpack.c.bf16 %v1495, %v1495
    %v1500 = vpack.c.bf16 %v1496, %v1496
    %v1505 = vunpack.c.l.b16 %v1497
    %v1506 = vunpack.c.l.b16 %v1498
    %v1507 = vunpack.c.l.b16 %v1499
    %v1508 = vunpack.c.l.b16 %v1500
    %v1509 = vpack.c.b16 %v1506, %v1505
    %v1510 = vpack.c.b16 %v1508, %v1507
    %1513 = vst [vmem:[#allocation3 + $0xb0] sm:$0xff] %v1509
    %1514 = vst [vmem:[#allocation3 + $0xb8] sm:$0xff] %v1510
    %1515 = vrot.lane.b32.xlu0 %v1343, 1
    %v1516 = vpop.permute.xlu0 %1515
    %1517 = vrot.lane.b32.xlu0 %v1344, 1
    %v1518 = vpop.permute.xlu0 %1517
    %1519 = vrot.lane.b32.xlu0 %v1345, 1
    %v1520 = vpop.permute.xlu0 %1519
    %1521 = vrot.lane.b32.xlu0 %v1346, 1
    %v1522 = vpop.permute.xlu0 %1521
    %v1523 = vsel %vm279, %v1520, %v1522
    %v1524 = vsel %vm279, %v1518, %v1520
    %v1525 = vsel %vm279, %v1516, %v1518
    %v1526 = vsel %vm279, %v1522, %v1516
    %v1527 = vld [vmem:[%s284] sm:$0xf]
    %v1529 = vlaneseq
    %v1530 = vshrl.u32 %v1529, 7
    %v1531 = vsub.s32 0, %v1530
    %v1532 = vrot.slane %v1527, %v1531
    %v1533 = vlaneseq
    %v1534 = vshrl.u32 %v1533, 7
    %v1535 = vsub.s32 1, %v1534
    %v1536 = vrot.slane %v1527, %v1535
    %v1537 = vlaneseq
    %v1538 = vshrl.u32 %v1537, 7
    %v1539 = vsub.s32 2, %v1538
    %v1540 = vrot.slane %v1527, %v1539
    %v1541 = vlaneseq
    %v1542 = vshrl.u32 %v1541, 7
    %v1543 = vsub.s32 3, %v1542
    %v1544 = vrot.slane %v1527, %v1543
    %v1549 = vmul.f32 %v1526, %v1532
    %v1550 = vmul.f32 %v1525, %v1536
    %v1551 = vmul.f32 %v1524, %v1540
    %v1552 = vmul.f32 %v1523, %v1544
    %v1553 = vpack.c.bf16 %v1549, %v1549
    %v1554 = vpack.c.bf16 %v1550, %v1550
    %v1555 = vpack.c.bf16 %v1551, %v1551
    %v1556 = vpack.c.bf16 %v1552, %v1552
    %v1561 = vunpack.c.l.b16 %v1553
    %v1562 = vunpack.c.l.b16 %v1554
    %v1563 = vunpack.c.l.b16 %v1555
    %v1564 = vunpack.c.l.b16 %v1556
    %v1565 = vpack.c.b16 %v1562, %v1561
    %v1566 = vpack.c.b16 %v1564, %v1563
    %1569 = vst [vmem:[#allocation3 + $0xc0] sm:$0xff] %v1565
    %1570 = vst [vmem:[#allocation3 + $0xc8] sm:$0xff] %v1566
    %v1571 = vpack.c.bf16 %v1343, %v1343
    %v1572 = vpack.c.bf16 %v1344, %v1344
    %v1573 = vpack.c.bf16 %v1345, %v1345
    %v1574 = vpack.c.bf16 %v1346, %v1346
    %v1579 = vunpack.c.l.b16 %v1571
    %v1580 = vunpack.c.l.b16 %v1572
    %v1581 = vunpack.c.l.b16 %v1573
    %v1582 = vunpack.c.l.b16 %v1574
    %v1583 = vpack.c.b16 %v1580, %v1579
    %v1584 = vpack.c.b16 %v1582, %v1581
    %1587 = vst [vmem:[#allocation3 + $0xd0] sm:$0xff] %v1583
    %1588 = vst [vmem:[#allocation3 + $0xd8] sm:$0xff] %v1584
    %1589 = vrot.lane.b32.xlu0 %v1343, 127
    %v1590 = vpop.permute.xlu0 %1589
    %1591 = vrot.lane.b32.xlu0 %v1344, 127
    %v1592 = vpop.permute.xlu0 %1591
    %1593 = vrot.lane.b32.xlu0 %v1345, 127
    %v1594 = vpop.permute.xlu0 %1593
    %1595 = vrot.lane.b32.xlu0 %v1346, 127
    %v1596 = vpop.permute.xlu0 %1595
    %v1597 = vsel %vm355, %v1594, %v1596
    %v1598 = vsel %vm355, %v1592, %v1594
    %v1599 = vsel %vm355, %v1590, %v1592
    %v1600 = vsel %vm355, %v1596, %v1590
    %v1601 = vld [vmem:[%s360] sm:$0xf]
    %v1603 = vlaneseq
    %v1604 = vshrl.u32 %v1603, 7
    %v1605 = vsub.s32 0, %v1604
    %v1606 = vrot.slane %v1601, %v1605
    %v1607 = vlaneseq
    %v1608 = vshrl.u32 %v1607, 7
    %v1609 = vsub.s32 1, %v1608
    %v1610 = vrot.slane %v1601, %v1609
    %v1611 = vlaneseq
    %v1612 = vshrl.u32 %v1611, 7
    %v1613 = vsub.s32 2, %v1612
    %v1614 = vrot.slane %v1601, %v1613
    %v1615 = vlaneseq
    %v1616 = vshrl.u32 %v1615, 7
    %v1617 = vsub.s32 3, %v1616
    %v1618 = vrot.slane %v1601, %v1617
    %v1623 = vmul.f32 %v1599, %v1606
    %v1624 = vmul.f32 %v1598, %v1610
    %v1625 = vmul.f32 %v1597, %v1614
    %v1626 = vmul.f32 %v1600, %v1618
    %v1627 = vpack.c.bf16 %v1623, %v1623
    %v1628 = vpack.c.bf16 %v1624, %v1624
    %v1629 = vpack.c.bf16 %v1625, %v1625
    %v1630 = vpack.c.bf16 %v1626, %v1626
    %v1635 = vunpack.c.l.b16 %v1627
    %v1636 = vunpack.c.l.b16 %v1628
    %v1637 = vunpack.c.l.b16 %v1629
    %v1638 = vunpack.c.l.b16 %v1630
    %v1639 = vpack.c.b16 %v1636, %v1635
    %v1640 = vpack.c.b16 %v1638, %v1637
    %1643 = vst [vmem:[#allocation3 + $0xe0] sm:$0xff] %v1639
    %1644 = vst [vmem:[#allocation3 + $0xe8] sm:$0xff] %v1640
    %1645 = vrot.lane.b32.xlu0 %v1343, 113
    %v1646 = vpop.permute.xlu0 %1645
    %1647 = vrot.lane.b32.xlu0 %v1344, 113
    %v1648 = vpop.permute.xlu0 %1647
    %1649 = vrot.lane.b32.xlu0 %v1345, 113
    %v1650 = vpop.permute.xlu0 %1649
    %1651 = vrot.lane.b32.xlu0 %v1346, 113
    %v1652 = vpop.permute.xlu0 %1651
    %v1653 = vsel %vm413, %v1650, %v1652
    %v1654 = vsel %vm413, %v1648, %v1650
    %v1655 = vsel %vm413, %v1646, %v1648
    %v1656 = vsel %vm413, %v1652, %v1646
    %v1657 = vld [vmem:[%s418] sm:$0xf]
    %v1659 = vlaneseq
    %v1660 = vshrl.u32 %v1659, 7
    %v1661 = vsub.s32 0, %v1660
    %v1662 = vrot.slane %v1657, %v1661
    %v1663 = vlaneseq
    %v1664 = vshrl.u32 %v1663, 7
    %v1665 = vsub.s32 1, %v1664
    %v1666 = vrot.slane %v1657, %v1665
    %v1667 = vlaneseq
    %v1668 = vshrl.u32 %v1667, 7
    %v1669 = vsub.s32 2, %v1668
    %v1670 = vrot.slane %v1657, %v1669
    %v1671 = vlaneseq
    %v1672 = vshrl.u32 %v1671, 7
    %v1673 = vsub.s32 3, %v1672
    %v1674 = vrot.slane %v1657, %v1673
    %v1679 = vmul.f32 %v1655, %v1662
    %v1680 = vmul.f32 %v1654, %v1666
    %v1681 = vmul.f32 %v1653, %v1670
    %v1682 = vmul.f32 %v1656, %v1674
    %v1683 = vpack.c.bf16 %v1679, %v1679
    %v1684 = vpack.c.bf16 %v1680, %v1680
    %v1685 = vpack.c.bf16 %v1681, %v1681
    %v1686 = vpack.c.bf16 %v1682, %v1682
    %v1691 = vunpack.c.l.b16 %v1683
    %v1692 = vunpack.c.l.b16 %v1684
    %v1693 = vunpack.c.l.b16 %v1685
    %v1694 = vunpack.c.l.b16 %v1686
    %v1695 = vpack.c.b16 %v1692, %v1691
    %v1696 = vpack.c.b16 %v1694, %v1693
    %1699 = vst [vmem:[#allocation3 + $0xf0] sm:$0xff] %v1695
    %1700 = vst [vmem:[#allocation3 + $0xf8] sm:$0xff] %v1696
    %1701 = vrot.lane.b32.xlu0 %v1343, 112
    %v1702 = vpop.permute.xlu0 %1701
    %1703 = vrot.lane.b32.xlu0 %v1344, 112
    %v1704 = vpop.permute.xlu0 %1703
    %1705 = vrot.lane.b32.xlu0 %v1345, 112
    %v1706 = vpop.permute.xlu0 %1705
    %1707 = vrot.lane.b32.xlu0 %v1346, 112
    %v1708 = vpop.permute.xlu0 %1707
    %v1709 = vsel %vm471, %v1706, %v1708
    %v1710 = vsel %vm471, %v1704, %v1706
    %v1711 = vsel %vm471, %v1702, %v1704
    %v1712 = vsel %vm471, %v1708, %v1702
    %v1713 = vld [vmem:[%s476] sm:$0xf]
    %v1715 = vlaneseq
    %v1716 = vshrl.u32 %v1715, 7
    %v1717 = vsub.s32 0, %v1716
    %v1718 = vrot.slane %v1713, %v1717
    %v1719 = vlaneseq
    %v1720 = vshrl.u32 %v1719, 7
    %v1721 = vsub.s32 1, %v1720
    %v1722 = vrot.slane %v1713, %v1721
    %v1723 = vlaneseq
    %v1724 = vshrl.u32 %v1723, 7
    %v1725 = vsub.s32 2, %v1724
    %v1726 = vrot.slane %v1713, %v1725
    %v1727 = vlaneseq
    %v1728 = vshrl.u32 %v1727, 7
    %v1729 = vsub.s32 3, %v1728
    %v1730 = vrot.slane %v1713, %v1729
    %v1735 = vmul.f32 %v1711, %v1718
    %v1736 = vmul.f32 %v1710, %v1722
    %v1737 = vmul.f32 %v1709, %v1726
    %v1738 = vmul.f32 %v1712, %v1730
    %v1739 = vpack.c.bf16 %v1735, %v1735
    %v1740 = vpack.c.bf16 %v1736, %v1736
    %v1741 = vpack.c.bf16 %v1737, %v1737
    %v1742 = vpack.c.bf16 %v1738, %v1738
    %v1747 = vunpack.c.l.b16 %v1739
    %v1748 = vunpack.c.l.b16 %v1740
    %v1749 = vunpack.c.l.b16 %v1741
    %v1750 = vunpack.c.l.b16 %v1742
    %v1751 = vpack.c.b16 %v1748, %v1747
    %v1752 = vpack.c.b16 %v1750, %v1749
    %1755 = vst [vmem:[#allocation3 + $0x100] sm:$0xff] %v1751
    %1756 = vst [vmem:[#allocation3 + $0x108] sm:$0xff] %v1752
    %1757 = vrot.lane.b32.xlu0 %v1343, 111
    %v1758 = vpop.permute.xlu0 %1757
    %1759 = vrot.lane.b32.xlu0 %v1344, 111
    %v1760 = vpop.permute.xlu0 %1759
    %1761 = vrot.lane.b32.xlu0 %v1345, 111
    %v1762 = vpop.permute.xlu0 %1761
    %1763 = vrot.lane.b32.xlu0 %v1346, 111
    %v1764 = vpop.permute.xlu0 %1763
    %v1765 = vsel %vm529, %v1762, %v1764
    %v1766 = vsel %vm529, %v1760, %v1762
    %v1767 = vsel %vm529, %v1758, %v1760
    %v1768 = vsel %vm529, %v1764, %v1758
    %v1769 = vld [vmem:[%s534] sm:$0xf]
    %v1771 = vlaneseq
    %v1772 = vshrl.u32 %v1771, 7
    %v1773 = vsub.s32 0, %v1772
    %v1774 = vrot.slane %v1769, %v1773
    %v1775 = vlaneseq
    %v1776 = vshrl.u32 %v1775, 7
    %v1777 = vsub.s32 1, %v1776
    %v1778 = vrot.slane %v1769, %v1777
    %v1779 = vlaneseq
    %v1780 = vshrl.u32 %v1779, 7
    %v1781 = vsub.s32 2, %v1780
    %v1782 = vrot.slane %v1769, %v1781
    %v1783 = vlaneseq
    %v1784 = vshrl.u32 %v1783, 7
    %v1785 = vsub.s32 3, %v1784
    %v1786 = vrot.slane %v1769, %v1785
    %v1791 = vmul.f32 %v1767, %v1774
    %v1792 = vmul.f32 %v1766, %v1778
    %v1793 = vmul.f32 %v1765, %v1782
    %v1794 = vmul.f32 %v1768, %v1786
    %v1795 = vpack.c.bf16 %v1791, %v1791
    %v1796 = vpack.c.bf16 %v1792, %v1792
    %v1797 = vpack.c.bf16 %v1793, %v1793
    %v1798 = vpack.c.bf16 %v1794, %v1794
    %v1803 = vunpack.c.l.b16 %v1795
    %v1804 = vunpack.c.l.b16 %v1796
    %v1805 = vunpack.c.l.b16 %v1797
    %v1806 = vunpack.c.l.b16 %v1798
    %v1807 = vpack.c.b16 %v1804, %v1803
    %v1808 = vpack.c.b16 %v1806, %v1805
    %1811 = vst [vmem:[#allocation3 + $0x110] sm:$0xff] %v1807
    %1812 = vst [vmem:[#allocation3 + $0x118] sm:$0xff] %v1808
    %v1813 = vld [vmem:[%s7] sm:$0xff]
    %v1814 = vld [vmem:[#allocation3] sm:$0xff]
    %v1815 = vld [vmem:[#allocation3 + $0x8] sm:$0xff]
    %v1816 = vld [vmem:[#allocation3 + $0x10] sm:$0xff]
    %v1817 = vld [vmem:[#allocation3 + $0x18] sm:$0xff]
    %v1818 = vld [vmem:[#allocation3 + $0x20] sm:$0xff]
    %v1819 = vld [vmem:[#allocation3 + $0x28] sm:$0xff]
    %v1820 = vld [vmem:[#allocation3 + $0x30] sm:$0xff]
    %v1821 = vld [vmem:[#allocation3 + $0x38] sm:$0xff]
    %v1822 = vld [vmem:[#allocation3 + $0x40] sm:$0xff]
    %v1823 = vld [vmem:[#allocation3 + $0x48] sm:$0xff]
    %v1824 = vld [vmem:[#allocation3 + $0x50] sm:$0xff]
    %v1825 = vld [vmem:[#allocation3 + $0x58] sm:$0xff]
    %v1826 = vld [vmem:[#allocation3 + $0x60] sm:$0xff]
    %v1827 = vld [vmem:[#allocation3 + $0x68] sm:$0xff]
    %v1828 = vld [vmem:[#allocation3 + $0x70] sm:$0xff]
    %v1829 = vld [vmem:[#allocation3 + $0x78] sm:$0xff]
    %v1830 = vld [vmem:[#allocation3 + $0x80] sm:$0xff]
    %v1831 = vld [vmem:[#allocation3 + $0x88] sm:$0xff]
    %v1832 = vld [vmem:[#allocation3 + $0x90] sm:$0xff]
    %v1833 = vld [vmem:[#allocation3 + $0x98] sm:$0xff]
    %v1834 = vld [vmem:[#allocation3 + $0xa0] sm:$0xff]
    %v1835 = vld [vmem:[#allocation3 + $0xa8] sm:$0xff]
    %v1836 = vld [vmem:[#allocation3 + $0xb0] sm:$0xff]
    %v1837 = vld [vmem:[#allocation3 + $0xb8] sm:$0xff]
    %v1838 = vld [vmem:[#allocation3 + $0xc0] sm:$0xff]
    %v1839 = vld [vmem:[#allocation3 + $0xc8] sm:$0xff]
    %v1840 = vld [vmem:[#allocation3 + $0xd0] sm:$0xff]
    %v1841 = vld [vmem:[#allocation3 + $0xd8] sm:$0xff]
    %v1842 = vld [vmem:[#allocation3 + $0xe0] sm:$0xff]
    %v1843 = vld [vmem:[#allocation3 + $0xe8] sm:$0xff]
    %v1844 = vld [vmem:[#allocation3 + $0xf0] sm:$0xff]
    %v1845 = vld [vmem:[#allocation3 + $0xf8] sm:$0xff]
    %v1846 = vld [vmem:[#allocation3 + $0x100] sm:$0xff]
    %v1847 = vld [vmem:[#allocation3 + $0x108] sm:$0xff]
    %v1848 = vld [vmem:[#allocation3 + $0x110] sm:$0xff]
    %v1849 = vld [vmem:[#allocation3 + $0x118] sm:$0xff]
    %v1851 = vunpack.c.l.b16 %v1813
    %v1852 = vunpack.c.h.b16 %v1813
    %v1853 = vpack.c.b16 %v1851, %v1851
    %v1854 = vpack.c.b16 %v1852, %v1852
    %v1892 = vunpack.c.l.b16 %v1814
    %v1893 = vunpack.c.h.b16 %v1814
    %v1894 = vunpack.c.l.b16 %v1815
    %v1895 = vunpack.c.h.b16 %v1815
    %v1896 = vunpack.c.l.b16 %v1816
    %v1897 = vunpack.c.h.b16 %v1816
    %v1898 = vunpack.c.l.b16 %v1817
    %v1899 = vunpack.c.h.b16 %v1817
    %v1900 = vunpack.c.l.b16 %v1818
    %v1901 = vunpack.c.h.b16 %v1818
    %v1902 = vunpack.c.l.b16 %v1819
    %v1903 = vunpack.c.h.b16 %v1819
    %v1904 = vunpack.c.l.b16 %v1820
    %v1905 = vunpack.c.h.b16 %v1820
    %v1906 = vunpack.c.l.b16 %v1821
    %v1907 = vunpack.c.h.b16 %v1821
    %v1908 = vunpack.c.l.b16 %v1822
    %v1909 = vunpack.c.h.b16 %v1822
    %v1910 = vunpack.c.l.b16 %v1823
    %v1911 = vunpack.c.h.b16 %v1823
    %v1912 = vunpack.c.l.b16 %v1824
    %v1913 = vunpack.c.h.b16 %v1824
    %v1914 = vunpack.c.l.b16 %v1825
    %v1915 = vunpack.c.h.b16 %v1825
    %v1916 = vunpack.c.l.b16 %v1826
    %v1917 = vunpack.c.h.b16 %v1826
    %v1918 = vunpack.c.l.b16 %v1827
    %v1919 = vunpack.c.h.b16 %v1827
    %v1920 = vunpack.c.l.b16 %v1828
    %v1921 = vunpack.c.h.b16 %v1828
    %v1922 = vunpack.c.l.b16 %v1829
    %v1923 = vunpack.c.h.b16 %v1829
    %v1924 = vunpack.c.l.b16 %v1830
    %v1925 = vunpack.c.h.b16 %v1830
    %v1926 = vunpack.c.l.b16 %v1831
    %v1927 = vunpack.c.h.b16 %v1831
    %v1928 = vunpack.c.l.b16 %v1832
    %v1929 = vunpack.c.h.b16 %v1832
    %v1930 = vunpack.c.l.b16 %v1833
    %v1931 = vunpack.c.h.b16 %v1833
    %v1932 = vunpack.c.l.b16 %v1834
    %v1933 = vunpack.c.h.b16 %v1834
    %v1934 = vunpack.c.l.b16 %v1835
    %v1935 = vunpack.c.h.b16 %v1835
    %v1936 = vunpack.c.l.b16 %v1836
    %v1937 = vunpack.c.h.b16 %v1836
    %v1938 = vunpack.c.l.b16 %v1837
    %v1939 = vunpack.c.h.b16 %v1837
    %v1940 = vunpack.c.l.b16 %v1838
    %v1941 = vunpack.c.h.b16 %v1838
    %v1942 = vunpack.c.l.b16 %v1839
    %v1943 = vunpack.c.h.b16 %v1839
    %v1944 = vunpack.c.l.b16 %v1840
    %v1945 = vunpack.c.h.b16 %v1840
    %v1946 = vunpack.c.l.b16 %v1841
    %v1947 = vunpack.c.h.b16 %v1841
    %v1948 = vunpack.c.l.b16 %v1842
    %v1949 = vunpack.c.h.b16 %v1842
    %v1950 = vunpack.c.l.b16 %v1843
    %v1951 = vunpack.c.h.b16 %v1843
    %v1952 = vunpack.c.l.b16 %v1844
    %v1953 = vunpack.c.h.b16 %v1844
    %v1954 = vunpack.c.l.b16 %v1845
    %v1955 = vunpack.c.h.b16 %v1845
    %v1956 = vunpack.c.l.b16 %v1846
    %v1957 = vunpack.c.h.b16 %v1846
    %v1958 = vunpack.c.l.b16 %v1847
    %v1959 = vunpack.c.h.b16 %v1847
    %v1960 = vunpack.c.l.b16 %v1848
    %v1961 = vunpack.c.h.b16 %v1848
    %v1962 = vunpack.c.l.b16 %v1849
    %v1963 = vunpack.c.h.b16 %v1849
    %v1964 = vpack.c.b16 %v1896, %v1892
    %v1965 = vpack.c.b16 %v1897, %v1893
    %v1966 = vpack.c.b16 %v1898, %v1894
    %v1967 = vpack.c.b16 %v1899, %v1895
    %v1968 = vpack.c.b16 %v1904, %v1900
    %v1969 = vpack.c.b16 %v1905, %v1901
    %v1970 = vpack.c.b16 %v1906, %v1902
    %v1971 = vpack.c.b16 %v1907, %v1903
    %v1972 = vpack.c.b16 %v1912, %v1908
    %v1973 = vpack.c.b16 %v1913, %v1909
    %v1974 = vpack.c.b16 %v1914, %v1910
    %v1975 = vpack.c.b16 %v1915, %v1911
    %v1976 = vpack.c.b16 %v1920, %v1916
    %v1977 = vpack.c.b16 %v1921, %v1917
    %v1978 = vpack.c.b16 %v1922, %v1918
    %v1979 = vpack.c.b16 %v1923, %v1919
    %v1980 = vpack.c.b16 %v1928, %v1924
    %v1981 = vpack.c.b16 %v1929, %v1925
    %v1982 = vpack.c.b16 %v1930, %v1926
    %v1983 = vpack.c.b16 %v1931, %v1927
    %v1984 = vpack.c.b16 %v1936, %v1932
    %v1985 = vpack.c.b16 %v1937, %v1933
    %v1986 = vpack.c.b16 %v1938, %v1934
    %v1987 = vpack.c.b16 %v1939, %v1935
    %v1988 = vpack.c.b16 %v1944, %v1940
    %v1989 = vpack.c.b16 %v1945, %v1941
    %v1990 = vpack.c.b16 %v1946, %v1942
    %v1991 = vpack.c.b16 %v1947, %v1943
    %v1992 = vpack.c.b16 %v1952, %v1948
    %v1993 = vpack.c.b16 %v1953, %v1949
    %v1994 = vpack.c.b16 %v1954, %v1950
    %v1995 = vpack.c.b16 %v1955, %v1951
    %v1996 = vpack.c.b16 %v1960, %v1956
    %v1997 = vpack.c.b16 %v1961, %v1957
    %v1998 = vpack.c.b16 %v1962, %v1958
    %v1999 = vpack.c.b16 %v1963, %v1959
    %vm2036 = vcmask 130048
    %v2038 = vsel %vm2036, %v1854, 0
    %2040 = vmatprep.subr.bf16.mxu0 %v1965
    %2041 = vmatpush1.bf16.msra.mxu0 %v1964
    %2042 = vmatprep.subr.bf16.mxu0 %v1969
    %2043 = vmatpush1.bf16.msra.mxu0 %v1968
    %2044 = vmatprep.subr.bf16.mxu0 %v1973
    %2045 = vmatpush1.bf16.msra.mxu0 %v1972
    %2046 = vmatprep.subr.bf16.mxu0 %v1977
    %2047 = vmatpush1.bf16.msra.mxu0 %v1976
    %2048 = vmatprep.subr.bf16.mxu0 %v1981
    %2049 = vmatpush1.bf16.msra.mxu0 %v1980
    %2050 = vmatprep.subr.bf16.mxu0 %v1985
    %2051 = vmatpush1.bf16.msra.mxu0 %v1984
    %2052 = vmatprep.subr.bf16.mxu0 %v1989
    %2053 = vmatpush1.bf16.msra.mxu0 %v1988
    %2054 = vmatprep.subr.bf16.mxu0 %v1993
    %2055 = vmatpush1.bf16.msra.mxu0 %v1992
    %2056 = vmatprep.subr.bf16.mxu0 %v1997
    %2057 = vmatpush1.bf16.msra.mxu0 %v1996
    %2058 = vmatprep.subr.bf16.mxu0 0
    %2059 = vmatpush1.bf16.msra.mxu0 0
    %2060 = vmatprep.subr.bf16.mxu0 0
    %2061 = vmatpush1.bf16.msra.mxu0 0
    %2062 = vmatprep.subr.bf16.mxu0 0
    %2063 = vmatpush1.bf16.msra.mxu0 0
    %2064 = vmatprep.subr.bf16.mxu0 0
    %2065 = vmatpush1.bf16.msra.mxu0 0
    %2066 = vmatprep.subr.bf16.mxu0 0
    %2067 = vmatpush1.bf16.msra.mxu0 0
    %2068 = vmatprep.subr.bf16.mxu0 0
    %2069 = vmatpush1.bf16.msra.mxu0 0
    %2070 = vmatprep.subr.bf16.mxu0 0
    %2071 = vmatpush1.bf16.msra.mxu0 0
    %2072 = vmatprep.mubr.bf16.mxu0 %v2038
    %2073 = vmatmul.mubr.bf16.gmra.mrb[0].mxu0 %v1853
    %v2074 = vpop.f32.mrb[0].mxu0
    %v2075 = vadd.f32 0.0, %v2074
    %v2076 = vpop.f32.mrb[0].mxu0
    %v2077 = vadd.f32 0.0, %v2076
    %v2078 = vpop.f32.mrb[0].mxu0
    %v2079 = vpop.f32.mrb[0].mxu0
    %2080 = vdwg.mxu0
    %2081 = vmatprep.subr.bf16.mxu0 %v1967
    %2082 = vmatpush1.bf16.msra.mxu0 %v1966
    %2083 = vmatprep.subr.bf16.mxu0 %v1971
    %2084 = vmatpush1.bf16.msra.mxu0 %v1970
    %2085 = vmatprep.subr.bf16.mxu0 %v1975
    %2086 = vmatpush1.bf16.msra.mxu0 %v1974
    %2087 = vmatprep.subr.bf16.mxu0 %v1979
    %2088 = vmatpush1.bf16.msra.mxu0 %v1978
    %2089 = vmatprep.subr.bf16.mxu0 %v1983
    %2090 = vmatpush1.bf16.msra.mxu0 %v1982
    %2091 = vmatprep.subr.bf16.mxu0 %v1987
    %2092 = vmatpush1.bf16.msra.mxu0 %v1986
    %2093 = vmatprep.subr.bf16.mxu0 %v1991
    %2094 = vmatpush1.bf16.msra.mxu0 %v1990
    %2095 = vmatprep.subr.bf16.mxu0 %v1995
    %2096 = vmatpush1.bf16.msra.mxu0 %v1994
    %2097 = vmatprep.subr.bf16.mxu0 %v1999
    %2098 = vmatpush1.bf16.msra.mxu0 %v1998
    %2099 = vmatprep.subr.bf16.mxu0 0
    %2100 = vmatpush1.bf16.msra.mxu0 0
    %2101 = vmatprep.subr.bf16.mxu0 0
    %2102 = vmatpush1.bf16.msra.mxu0 0
    %2103 = vmatprep.subr.bf16.mxu0 0
    %2104 = vmatpush1.bf16.msra.mxu0 0
    %2105 = vmatprep.subr.bf16.mxu0 0
    %2106 = vmatpush1.bf16.msra.mxu0 0
    %2107 = vmatprep.subr.bf16.mxu0 0
    %2108 = vmatpush1.bf16.msra.mxu0 0
    %2109 = vmatprep.subr.bf16.mxu0 0
    %2110 = vmatpush1.bf16.msra.mxu0 0
    %2111 = vmatprep.subr.bf16.mxu0 0
    %2112 = vmatpush1.bf16.msra.mxu0 0
    %2113 = vmatprep.mubr.bf16.mxu0 %v2038
    %2114 = vmatmul.mubr.bf16.gmra.mrb[0].mxu0 %v1853
    %v2115 = vpop.f32.mrb[0].mxu0
    %v2116 = vadd.f32 0.0, %v2115
    %v2117 = vpop.f32.mrb[0].mxu0
    %v2118 = vadd.f32 0.0, %v2117
    %v2119 = vpop.f32.mrb[0].mxu0
    %v2120 = vpop.f32.mrb[0].mxu0
    %2121 = vdwg.mxu0
    %v2122 = vadd.f32 %v2075, %v2077
    %v2123 = vadd.f32 %v2122, %v2116
    %v2124 = vadd.f32 %v2123, %v2118
    %2125 = vadd.xlane.f32.xlu0 %v2124
    %v2126 = vpop.xlane.xlu0 %2125
    %v2127 = vmul.f32 %v2126, 0.001953125
    %v2128 = vsub.f32 %v2075, %v2127
    %v2129 = vsub.f32 %v2077, %v2127
    %v2130 = vsub.f32 %v2116, %v2127
    %v2131 = vsub.f32 %v2118, %v2127
    %v2132 = vmul.f32 %v2128, %v2128
    %v2133 = vmul.f32 %v2129, %v2129
    %v2134 = vmul.f32 %v2130, %v2130
    %v2135 = vmul.f32 %v2131, %v2131
    %v2136 = vadd.f32 %v2132, %v2133
    %v2137 = vadd.f32 %v2136, %v2134
    %v2138 = vadd.f32 %v2137, %v2135
    %2139 = vadd.xlane.f32.xlu0 %v2138
    %v2140 = vpop.xlane.xlu0 %2139
    %v2141 = vmul.f32 %v2140, 0.001953125
    %2142 = vst.msk [vmem:[#allocation4 + $0x10] sm:$0xff] %vm66, %v2127
    %v2143 = vadd.f32 %v2141, 1e-05
    %v2144 = vrsqrt.pop %v2143
    %2145 = vst.msk [vmem:[#allocation5 + $0x10] sm:$0xff] %vm66, %v2144
    %s2146 = scalar_lea.vmem [#allocation2], 32
    %2147 = vst [vmem:[%s2146] sm:$0xff] %v2075
    %2148 = vst [vmem:[%s2146 + $0x8] sm:$0xff] %v2077
    %2149 = vst [vmem:[%s2146 + $0x10] sm:$0xff] %v2116
    %2150 = vst [vmem:[%s2146 + $0x18] sm:$0xff] %v2118
    %v2151 = vld [vmem:[%s0] sm:$0xff]
    %v2152 = vld [vmem:[%s0 + $0x8] sm:$0xff]
    %v2153 = vld [vmem:[%s0 + $0x10] sm:$0xff]
    %v2154 = vld [vmem:[%s0 + $0x18] sm:$0xff]
    %v2155 = vld [vmem:[#allocation4] sm:$0xff]
    %v2156 = vld [vmem:[#allocation5] sm:$0xff]
    %v2157 = vld [vmem:[%s8] sm:$0xff]
    %v2158 = vmul.f32 %v2157, %v2156
    %v2159 = vld [vmem:[%s9] sm:$0xff]
    %v2160 = vmul.f32 %v2155, %v2158
    %v2161 = vsub.f32 %v2159, %v2160
    %2163 = vset.pattern.permute.xlu0 0
    %2164 = vperm.xlu0 %2163, %v2158
    %v2165 = vpop.permute.xlu0 %2164
    %v2167 = vmul.f32 %v2151, %v2165
    %v2168 = vmul.f32 %v2152, %v2165
    %v2169 = vmul.f32 %v2153, %v2165
    %v2170 = vmul.f32 %v2154, %v2165
    %2172 = vset.pattern.permute.xlu0 0
    %2173 = vperm.xlu0 %2172, %v2161
    %v2174 = vpop.permute.xlu0 %2173
    %v2176 = vadd.f32 %v2167, %v2174
    %v2177 = vadd.f32 %v2168, %v2174
    %v2178 = vadd.f32 %v2169, %v2174
    %v2179 = vadd.f32 %v2170, %v2174
    %v2180 = vmax.f32 %v2176, 0.0
    %v2181 = vmax.f32 %v2177, 0.0
    %v2182 = vmax.f32 %v2178, 0.0
    %v2183 = vmax.f32 %v2179, 0.0
    %2184 = vrot.lane.b32.xlu0 %v2180, 17
    %v2185 = vpop.permute.xlu0 %2184
    %2186 = vrot.lane.b32.xlu0 %v2181, 17
    %v2187 = vpop.permute.xlu0 %2186
    %2188 = vrot.lane.b32.xlu0 %v2182, 17
    %v2189 = vpop.permute.xlu0 %2188
    %2190 = vrot.lane.b32.xlu0 %v2183, 17
    %v2191 = vpop.permute.xlu0 %2190
    %v2192 = vsel %vm106, %v2189, %v2191
    %v2193 = vsel %vm106, %v2187, %v2189
    %v2194 = vsel %vm106, %v2185, %v2187
    %v2195 = vsel %vm106, %v2191, %v2185
    %v2196 = vld [vmem:[%s1] sm:$0xf]
    %v2198 = vlaneseq
    %v2199 = vshrl.u32 %v2198, 7
    %v2200 = vsub.s32 0, %v2199
    %v2201 = vrot.slane %v2196, %v2200
    %v2202 = vlaneseq
    %v2203 = vshrl.u32 %v2202, 7
    %v2204 = vsub.s32 1, %v2203
    %v2205 = vrot.slane %v2196, %v2204
    %v2206 = vlaneseq
    %v2207 = vshrl.u32 %v2206, 7
    %v2208 = vsub.s32 2, %v2207
    %v2209 = vrot.slane %v2196, %v2208
    %v2210 = vlaneseq
    %v2211 = vshrl.u32 %v2210, 7
    %v2212 = vsub.s32 3, %v2211
    %v2213 = vrot.slane %v2196, %v2212
    %v2218 = vmul.f32 %v2195, %v2201
    %v2219 = vmul.f32 %v2194, %v2205
    %v2220 = vmul.f32 %v2193, %v2209
    %v2221 = vmul.f32 %v2192, %v2213
    %v2222 = vpack.c.bf16 %v2218, %v2218
    %v2223 = vpack.c.bf16 %v2219, %v2219
    %v2224 = vpack.c.bf16 %v2220, %v2220
    %v2225 = vpack.c.bf16 %v2221, %v2221
    %v2230 = vunpack.c.l.b16 %v2222
    %v2231 = vunpack.c.l.b16 %v2223
    %v2232 = vunpack.c.l.b16 %v2224
    %v2233 = vunpack.c.l.b16 %v2225
    %v2234 = vpack.c.b16 %v2231, %v2230
    %v2235 = vpack.c.b16 %v2233, %v2232
    %2238 = vst [vmem:[#allocation3] sm:$0xff] %v2234
    %2239 = vst [vmem:[#allocation3 + $0x8] sm:$0xff] %v2235
    %2240 = vrot.lane.b32.xlu0 %v2180, 16
    %v2241 = vpop.permute.xlu0 %2240
    %2242 = vrot.lane.b32.xlu0 %v2181, 16
    %v2243 = vpop.permute.xlu0 %2242
    %2244 = vrot.lane.b32.xlu0 %v2182, 16
    %v2245 = vpop.permute.xlu0 %2244
    %2246 = vrot.lane.b32.xlu0 %v2183, 16
    %v2247 = vpop.permute.xlu0 %2246
    %v2248 = vsel %vm163, %v2245, %v2247
    %v2249 = vsel %vm163, %v2243, %v2245
    %v2250 = vsel %vm163, %v2241, %v2243
    %v2251 = vsel %vm163, %v2247, %v2241
    %v2252 = vld [vmem:[%s168] sm:$0xf]
    %v2254 = vlaneseq
    %v2255 = vshrl.u32 %v2254, 7
    %v2256 = vsub.s32 0, %v2255
    %v2257 = vrot.slane %v2252, %v2256
    %v2258 = vlaneseq
    %v2259 = vshrl.u32 %v2258, 7
    %v2260 = vsub.s32 1, %v2259
    %v2261 = vrot.slane %v2252, %v2260
    %v2262 = vlaneseq
    %v2263 = vshrl.u32 %v2262, 7
    %v2264 = vsub.s32 2, %v2263
    %v2265 = vrot.slane %v2252, %v2264
    %v2266 = vlaneseq
    %v2267 = vshrl.u32 %v2266, 7
    %v2268 = vsub.s32 3, %v2267
    %v2269 = vrot.slane %v2252, %v2268
    %v2274 = vmul.f32 %v2251, %v2257
    %v2275 = vmul.f32 %v2250, %v2261
    %v2276 = vmul.f32 %v2249, %v2265
    %v2277 = vmul.f32 %v2248, %v2269
    %v2278 = vpack.c.bf16 %v2274, %v2274
    %v2279 = vpack.c.bf16 %v2275, %v2275
    %v2280 = vpack.c.bf16 %v2276, %v2276
    %v2281 = vpack.c.bf16 %v2277, %v2277
    %v2286 = vunpack.c.l.b16 %v2278
    %v2287 = vunpack.c.l.b16 %v2279
    %v2288 = vunpack.c.l.b16 %v2280
    %v2289 = vunpack.c.l.b16 %v2281
    %v2290 = vpack.c.b16 %v2287, %v2286
    %v2291 = vpack.c.b16 %v2289, %v2288
    %2294 = vst [vmem:[#allocation3 + $0x10] sm:$0xff] %v2290
    %2295 = vst [vmem:[#allocation3 + $0x18] sm:$0xff] %v2291
    %2296 = vrot.lane.b32.xlu0 %v2180, 15
    %v2297 = vpop.permute.xlu0 %2296
    %2298 = vrot.lane.b32.xlu0 %v2181, 15
    %v2299 = vpop.permute.xlu0 %2298
    %2300 = vrot.lane.b32.xlu0 %v2182, 15
    %v2301 = vpop.permute.xlu0 %2300
    %2302 = vrot.lane.b32.xlu0 %v2183, 15
    %v2303 = vpop.permute.xlu0 %2302
    %v2304 = vsel %vm221, %v2301, %v2303
    %v2305 = vsel %vm221, %v2299, %v2301
    %v2306 = vsel %vm221, %v2297, %v2299
    %v2307 = vsel %vm221, %v2303, %v2297
    %v2308 = vld [vmem:[%s226] sm:$0xf]
    %v2310 = vlaneseq
    %v2311 = vshrl.u32 %v2310, 7
    %v2312 = vsub.s32 0, %v2311
    %v2313 = vrot.slane %v2308, %v2312
    %v2314 = vlaneseq
    %v2315 = vshrl.u32 %v2314, 7
    %v2316 = vsub.s32 1, %v2315
    %v2317 = vrot.slane %v2308, %v2316
    %v2318 = vlaneseq
    %v2319 = vshrl.u32 %v2318, 7
    %v2320 = vsub.s32 2, %v2319
    %v2321 = vrot.slane %v2308, %v2320
    %v2322 = vlaneseq
    %v2323 = vshrl.u32 %v2322, 7
    %v2324 = vsub.s32 3, %v2323
    %v2325 = vrot.slane %v2308, %v2324
    %v2330 = vmul.f32 %v2307, %v2313
    %v2331 = vmul.f32 %v2306, %v2317
    %v2332 = vmul.f32 %v2305, %v2321
    %v2333 = vmul.f32 %v2304, %v2325
    %v2334 = vpack.c.bf16 %v2330, %v2330
    %v2335 = vpack.c.bf16 %v2331, %v2331
    %v2336 = vpack.c.bf16 %v2332, %v2332
    %v2337 = vpack.c.bf16 %v2333, %v2333
    %v2342 = vunpack.c.l.b16 %v2334
    %v2343 = vunpack.c.l.b16 %v2335
    %v2344 = vunpack.c.l.b16 %v2336
    %v2345 = vunpack.c.l.b16 %v2337
    %v2346 = vpack.c.b16 %v2343, %v2342
    %v2347 = vpack.c.b16 %v2345, %v2344
    %2350 = vst [vmem:[#allocation3 + $0x20] sm:$0xff] %v2346
    %2351 = vst [vmem:[#allocation3 + $0x28] sm:$0xff] %v2347
    %2352 = vrot.lane.b32.xlu0 %v2180, 1
    %v2353 = vpop.permute.xlu0 %2352
    %2354 = vrot.lane.b32.xlu0 %v2181, 1
    %v2355 = vpop.permute.xlu0 %2354
    %2356 = vrot.lane.b32.xlu0 %v2182, 1
    %v2357 = vpop.permute.xlu0 %2356
    %2358 = vrot.lane.b32.xlu0 %v2183, 1
    %v2359 = vpop.permute.xlu0 %2358
    %v2360 = vsel %vm279, %v2357, %v2359
    %v2361 = vsel %vm279, %v2355, %v2357
    %v2362 = vsel %vm279, %v2353, %v2355
    %v2363 = vsel %vm279, %v2359, %v2353
    %v2364 = vld [vmem:[%s284] sm:$0xf]
    %v2366 = vlaneseq
    %v2367 = vshrl.u32 %v2366, 7
    %v2368 = vsub.s32 0, %v2367
    %v2369 = vrot.slane %v2364, %v2368
    %v2370 = vlaneseq
    %v2371 = vshrl.u32 %v2370, 7
    %v2372 = vsub.s32 1, %v2371
    %v2373 = vrot.slane %v2364, %v2372
    %v2374 = vlaneseq
    %v2375 = vshrl.u32 %v2374, 7
    %v2376 = vsub.s32 2, %v2375
    %v2377 = vrot.slane %v2364, %v2376
    %v2378 = vlaneseq
    %v2379 = vshrl.u32 %v2378, 7
    %v2380 = vsub.s32 3, %v2379
    %v2381 = vrot.slane %v2364, %v2380
    %v2386 = vmul.f32 %v2363, %v2369
    %v2387 = vmul.f32 %v2362, %v2373
    %v2388 = vmul.f32 %v2361, %v2377
    %v2389 = vmul.f32 %v2360, %v2381
    %v2390 = vpack.c.bf16 %v2386, %v2386
    %v2391 = vpack.c.bf16 %v2387, %v2387
    %v2392 = vpack.c.bf16 %v2388, %v2388
    %v2393 = vpack.c.bf16 %v2389, %v2389
    %v2398 = vunpack.c.l.b16 %v2390
    %v2399 = vunpack.c.l.b16 %v2391
    %v2400 = vunpack.c.l.b16 %v2392
    %v2401 = vunpack.c.l.b16 %v2393
    %v2402 = vpack.c.b16 %v2399, %v2398
    %v2403 = vpack.c.b16 %v2401, %v2400
    %2406 = vst [vmem:[#allocation3 + $0x30] sm:$0xff] %v2402
    %2407 = vst [vmem:[#allocation3 + $0x38] sm:$0xff] %v2403
    %v2408 = vpack.c.bf16 %v2180, %v2180
    %v2409 = vpack.c.bf16 %v2181, %v2181
    %v2410 = vpack.c.bf16 %v2182, %v2182
    %v2411 = vpack.c.bf16 %v2183, %v2183
    %v2416 = vunpack.c.l.b16 %v2408
    %v2417 = vunpack.c.l.b16 %v2409
    %v2418 = vunpack.c.l.b16 %v2410
    %v2419 = vunpack.c.l.b16 %v2411
    %v2420 = vpack.c.b16 %v2417, %v2416
    %v2421 = vpack.c.b16 %v2419, %v2418
    %2424 = vst [vmem:[#allocation3 + $0x40] sm:$0xff] %v2420
    %2425 = vst [vmem:[#allocation3 + $0x48] sm:$0xff] %v2421
    %2426 = vrot.lane.b32.xlu0 %v2180, 127
    %v2427 = vpop.permute.xlu0 %2426
    %2428 = vrot.lane.b32.xlu0 %v2181, 127
    %v2429 = vpop.permute.xlu0 %2428
    %2430 = vrot.lane.b32.xlu0 %v2182, 127
    %v2431 = vpop.permute.xlu0 %2430
    %2432 = vrot.lane.b32.xlu0 %v2183, 127
    %v2433 = vpop.permute.xlu0 %2432
    %v2434 = vsel %vm355, %v2431, %v2433
    %v2435 = vsel %vm355, %v2429, %v2431
    %v2436 = vsel %vm355, %v2427, %v2429
    %v2437 = vsel %vm355, %v2433, %v2427
    %v2438 = vld [vmem:[%s360] sm:$0xf]
    %v2440 = vlaneseq
    %v2441 = vshrl.u32 %v2440, 7
    %v2442 = vsub.s32 0, %v2441
    %v2443 = vrot.slane %v2438, %v2442
    %v2444 = vlaneseq
    %v2445 = vshrl.u32 %v2444, 7
    %v2446 = vsub.s32 1, %v2445
    %v2447 = vrot.slane %v2438, %v2446
    %v2448 = vlaneseq
    %v2449 = vshrl.u32 %v2448, 7
    %v2450 = vsub.s32 2, %v2449
    %v2451 = vrot.slane %v2438, %v2450
    %v2452 = vlaneseq
    %v2453 = vshrl.u32 %v2452, 7
    %v2454 = vsub.s32 3, %v2453
    %v2455 = vrot.slane %v2438, %v2454
    %v2460 = vmul.f32 %v2436, %v2443
    %v2461 = vmul.f32 %v2435, %v2447
    %v2462 = vmul.f32 %v2434, %v2451
    %v2463 = vmul.f32 %v2437, %v2455
    %v2464 = vpack.c.bf16 %v2460, %v2460
    %v2465 = vpack.c.bf16 %v2461, %v2461
    %v2466 = vpack.c.bf16 %v2462, %v2462
    %v2467 = vpack.c.bf16 %v2463, %v2463
    %v2472 = vunpack.c.l.b16 %v2464
    %v2473 = vunpack.c.l.b16 %v2465
    %v2474 = vunpack.c.l.b16 %v2466
    %v2475 = vunpack.c.l.b16 %v2467
    %v2476 = vpack.c.b16 %v2473, %v2472
    %v2477 = vpack.c.b16 %v2475, %v2474
    %2480 = vst [vmem:[#allocation3 + $0x50] sm:$0xff] %v2476
    %2481 = vst [vmem:[#allocation3 + $0x58] sm:$0xff] %v2477
    %2482 = vrot.lane.b32.xlu0 %v2180, 113
    %v2483 = vpop.permute.xlu0 %2482
    %2484 = vrot.lane.b32.xlu0 %v2181, 113
    %v2485 = vpop.permute.xlu0 %2484
    %2486 = vrot.lane.b32.xlu0 %v2182, 113
    %v2487 = vpop.permute.xlu0 %2486
    %2488 = vrot.lane.b32.xlu0 %v2183, 113
    %v2489 = vpop.permute.xlu0 %2488
    %v2490 = vsel %vm413, %v2487, %v2489
    %v2491 = vsel %vm413, %v2485, %v2487
    %v2492 = vsel %vm413, %v2483, %v2485
    %v2493 = vsel %vm413, %v2489, %v2483
    %v2494 = vld [vmem:[%s418] sm:$0xf]
    %v2496 = vlaneseq
    %v2497 = vshrl.u32 %v2496, 7
    %v2498 = vsub.s32 0, %v2497
    %v2499 = vrot.slane %v2494, %v2498
    %v2500 = vlaneseq
    %v2501 = vshrl.u32 %v2500, 7
    %v2502 = vsub.s32 1, %v2501
    %v2503 = vrot.slane %v2494, %v2502
    %v2504 = vlaneseq
    %v2505 = vshrl.u32 %v2504, 7
    %v2506 = vsub.s32 2, %v2505
    %v2507 = vrot.slane %v2494, %v2506
    %v2508 = vlaneseq
    %v2509 = vshrl.u32 %v2508, 7
    %v2510 = vsub.s32 3, %v2509
    %v2511 = vrot.slane %v2494, %v2510
    %v2516 = vmul.f32 %v2492, %v2499
    %v2517 = vmul.f32 %v2491, %v2503
    %v2518 = vmul.f32 %v2490, %v2507
    %v2519 = vmul.f32 %v2493, %v2511
    %v2520 = vpack.c.bf16 %v2516, %v2516
    %v2521 = vpack.c.bf16 %v2517, %v2517
    %v2522 = vpack.c.bf16 %v2518, %v2518
    %v2523 = vpack.c.bf16 %v2519, %v2519
    %v2528 = vunpack.c.l.b16 %v2520
    %v2529 = vunpack.c.l.b16 %v2521
    %v2530 = vunpack.c.l.b16 %v2522
    %v2531 = vunpack.c.l.b16 %v2523
    %v2532 = vpack.c.b16 %v2529, %v2528
    %v2533 = vpack.c.b16 %v2531, %v2530
    %2536 = vst [vmem:[#allocation3 + $0x60] sm:$0xff] %v2532
    %2537 = vst [vmem:[#allocation3 + $0x68] sm:$0xff] %v2533
    %2538 = vrot.lane.b32.xlu0 %v2180, 112
    %v2539 = vpop.permute.xlu0 %2538
    %2540 = vrot.lane.b32.xlu0 %v2181, 112
    %v2541 = vpop.permute.xlu0 %2540
    %2542 = vrot.lane.b32.xlu0 %v2182, 112
    %v2543 = vpop.permute.xlu0 %2542
    %2544 = vrot.lane.b32.xlu0 %v2183, 112
    %v2545 = vpop.permute.xlu0 %2544
    %v2546 = vsel %vm471, %v2543, %v2545
    %v2547 = vsel %vm471, %v2541, %v2543
    %v2548 = vsel %vm471, %v2539, %v2541
    %v2549 = vsel %vm471, %v2545, %v2539
    %v2550 = vld [vmem:[%s476] sm:$0xf]
    %v2552 = vlaneseq
    %v2553 = vshrl.u32 %v2552, 7
    %v2554 = vsub.s32 0, %v2553
    %v2555 = vrot.slane %v2550, %v2554
    %v2556 = vlaneseq
    %v2557 = vshrl.u32 %v2556, 7
    %v2558 = vsub.s32 1, %v2557
    %v2559 = vrot.slane %v2550, %v2558
    %v2560 = vlaneseq
    %v2561 = vshrl.u32 %v2560, 7
    %v2562 = vsub.s32 2, %v2561
    %v2563 = vrot.slane %v2550, %v2562
    %v2564 = vlaneseq
    %v2565 = vshrl.u32 %v2564, 7
    %v2566 = vsub.s32 3, %v2565
    %v2567 = vrot.slane %v2550, %v2566
    %v2572 = vmul.f32 %v2548, %v2555
    %v2573 = vmul.f32 %v2547, %v2559
    %v2574 = vmul.f32 %v2546, %v2563
    %v2575 = vmul.f32 %v2549, %v2567
    %v2576 = vpack.c.bf16 %v2572, %v2572
    %v2577 = vpack.c.bf16 %v2573, %v2573
    %v2578 = vpack.c.bf16 %v2574, %v2574
    %v2579 = vpack.c.bf16 %v2575, %v2575
    %v2584 = vunpack.c.l.b16 %v2576
    %v2585 = vunpack.c.l.b16 %v2577
    %v2586 = vunpack.c.l.b16 %v2578
    %v2587 = vunpack.c.l.b16 %v2579
    %v2588 = vpack.c.b16 %v2585, %v2584
    %v2589 = vpack.c.b16 %v2587, %v2586
    %2592 = vst [vmem:[#allocation3 + $0x70] sm:$0xff] %v2588
    %2593 = vst [vmem:[#allocation3 + $0x78] sm:$0xff] %v2589
    %2594 = vrot.lane.b32.xlu0 %v2180, 111
    %v2595 = vpop.permute.xlu0 %2594
    %2596 = vrot.lane.b32.xlu0 %v2181, 111
    %v2597 = vpop.permute.xlu0 %2596
    %2598 = vrot.lane.b32.xlu0 %v2182, 111
    %v2599 = vpop.permute.xlu0 %2598
    %2600 = vrot.lane.b32.xlu0 %v2183, 111
    %v2601 = vpop.permute.xlu0 %2600
    %v2602 = vsel %vm529, %v2599, %v2601
    %v2603 = vsel %vm529, %v2597, %v2599
    %v2604 = vsel %vm529, %v2595, %v2597
    %v2605 = vsel %vm529, %v2601, %v2595
    %v2606 = vld [vmem:[%s534] sm:$0xf]
    %v2608 = vlaneseq
    %v2609 = vshrl.u32 %v2608, 7
    %v2610 = vsub.s32 0, %v2609
    %v2611 = vrot.slane %v2606, %v2610
    %v2612 = vlaneseq
    %v2613 = vshrl.u32 %v2612, 7
    %v2614 = vsub.s32 1, %v2613
    %v2615 = vrot.slane %v2606, %v2614
    %v2616 = vlaneseq
    %v2617 = vshrl.u32 %v2616, 7
    %v2618 = vsub.s32 2, %v2617
    %v2619 = vrot.slane %v2606, %v2618
    %v2620 = vlaneseq
    %v2621 = vshrl.u32 %v2620, 7
    %v2622 = vsub.s32 3, %v2621
    %v2623 = vrot.slane %v2606, %v2622
    %v2628 = vmul.f32 %v2604, %v2611
    %v2629 = vmul.f32 %v2603, %v2615
    %v2630 = vmul.f32 %v2602, %v2619
    %v2631 = vmul.f32 %v2605, %v2623
    %v2632 = vpack.c.bf16 %v2628, %v2628
    %v2633 = vpack.c.bf16 %v2629, %v2629
    %v2634 = vpack.c.bf16 %v2630, %v2630
    %v2635 = vpack.c.bf16 %v2631, %v2631
    %v2640 = vunpack.c.l.b16 %v2632
    %v2641 = vunpack.c.l.b16 %v2633
    %v2642 = vunpack.c.l.b16 %v2634
    %v2643 = vunpack.c.l.b16 %v2635
    %v2644 = vpack.c.b16 %v2641, %v2640
    %v2645 = vpack.c.b16 %v2643, %v2642
    %2648 = vst [vmem:[#allocation3 + $0x80] sm:$0xff] %v2644
    %2649 = vst [vmem:[#allocation3 + $0x88] sm:$0xff] %v2645
    %v2650 = vld [vmem:[#allocation2] sm:$0xff]
    %v2651 = vld [vmem:[#allocation2 + $0x8] sm:$0xff]
    %v2652 = vld [vmem:[#allocation2 + $0x10] sm:$0xff]
    %v2653 = vld [vmem:[#allocation2 + $0x18] sm:$0xff]
    %v2654 = vld [vmem:[#allocation4 + $0x8] sm:$0xff]
    %v2655 = vld [vmem:[#allocation5 + $0x8] sm:$0xff]
    %v2656 = vld [vmem:[%s8 + $0x8] sm:$0xff]
    %v2657 = vmul.f32 %v2656, %v2655
    %v2658 = vld [vmem:[%s9 + $0x8] sm:$0xff]
    %v2659 = vmul.f32 %v2654, %v2657
    %v2660 = vsub.f32 %v2658, %v2659
    %2662 = vset.pattern.permute.xlu0 0
    %2663 = vperm.xlu0 %2662, %v2657
    %v2664 = vpop.permute.xlu0 %2663
    %v2666 = vmul.f32 %v2650, %v2664
    %v2667 = vmul.f32 %v2651, %v2664
    %v2668 = vmul.f32 %v2652, %v2664
    %v2669 = vmul.f32 %v2653, %v2664
    %2671 = vset.pattern.permute.xlu0 0
    %2672 = vperm.xlu0 %2671, %v2660
    %v2673 = vpop.permute.xlu0 %2672
    %v2675 = vadd.f32 %v2666, %v2673
    %v2676 = vadd.f32 %v2667, %v2673
    %v2677 = vadd.f32 %v2668, %v2673
    %v2678 = vadd.f32 %v2669, %v2673
    %v2679 = vmax.f32 %v2675, 0.0
    %v2680 = vmax.f32 %v2676, 0.0
    %v2681 = vmax.f32 %v2677, 0.0
    %v2682 = vmax.f32 %v2678, 0.0
    %2683 = vrot.lane.b32.xlu0 %v2679, 17
    %v2684 = vpop.permute.xlu0 %2683
    %2685 = vrot.lane.b32.xlu0 %v2680, 17
    %v2686 = vpop.permute.xlu0 %2685
    %2687 = vrot.lane.b32.xlu0 %v2681, 17
    %v2688 = vpop.permute.xlu0 %2687
    %2689 = vrot.lane.b32.xlu0 %v2682, 17
    %v2690 = vpop.permute.xlu0 %2689
    %v2691 = vsel %vm106, %v2688, %v2690
    %v2692 = vsel %vm106, %v2686, %v2688
    %v2693 = vsel %vm106, %v2684, %v2686
    %v2694 = vsel %vm106, %v2690, %v2684
    %v2695 = vld [vmem:[%s1] sm:$0xf]
    %v2697 = vlaneseq
    %v2698 = vshrl.u32 %v2697, 7
    %v2699 = vsub.s32 0, %v2698
    %v2700 = vrot.slane %v2695, %v2699
    %v2701 = vlaneseq
    %v2702 = vshrl.u32 %v2701, 7
    %v2703 = vsub.s32 1, %v2702
    %v2704 = vrot.slane %v2695, %v2703
    %v2705 = vlaneseq
    %v2706 = vshrl.u32 %v2705, 7
    %v2707 = vsub.s32 2, %v2706
    %v2708 = vrot.slane %v2695, %v2707
    %v2709 = vlaneseq
    %v2710 = vshrl.u32 %v2709, 7
    %v2711 = vsub.s32 3, %v2710
    %v2712 = vrot.slane %v2695, %v2711
    %v2717 = vmul.f32 %v2694, %v2700
    %v2718 = vmul.f32 %v2693, %v2704
    %v2719 = vmul.f32 %v2692, %v2708
    %v2720 = vmul.f32 %v2691, %v2712
    %v2721 = vpack.c.bf16 %v2717, %v2717
    %v2722 = vpack.c.bf16 %v2718, %v2718
    %v2723 = vpack.c.bf16 %v2719, %v2719
    %v2724 = vpack.c.bf16 %v2720, %v2720
    %v2729 = vunpack.c.l.b16 %v2721
    %v2730 = vunpack.c.l.b16 %v2722
    %v2731 = vunpack.c.l.b16 %v2723
    %v2732 = vunpack.c.l.b16 %v2724
    %v2733 = vpack.c.b16 %v2730, %v2729
    %v2734 = vpack.c.b16 %v2732, %v2731
    %2737 = vst [vmem:[#allocation3 + $0x90] sm:$0xff] %v2733
    %2738 = vst [vmem:[#allocation3 + $0x98] sm:$0xff] %v2734
    %2739 = vrot.lane.b32.xlu0 %v2679, 16
    %v2740 = vpop.permute.xlu0 %2739
    %2741 = vrot.lane.b32.xlu0 %v2680, 16
    %v2742 = vpop.permute.xlu0 %2741
    %2743 = vrot.lane.b32.xlu0 %v2681, 16
    %v2744 = vpop.permute.xlu0 %2743
    %2745 = vrot.lane.b32.xlu0 %v2682, 16
    %v2746 = vpop.permute.xlu0 %2745
    %v2747 = vsel %vm163, %v2744, %v2746
    %v2748 = vsel %vm163, %v2742, %v2744
    %v2749 = vsel %vm163, %v2740, %v2742
    %v2750 = vsel %vm163, %v2746, %v2740
    %v2751 = vld [vmem:[%s168] sm:$0xf]
    %v2753 = vlaneseq
    %v2754 = vshrl.u32 %v2753, 7
    %v2755 = vsub.s32 0, %v2754
    %v2756 = vrot.slane %v2751, %v2755
    %v2757 = vlaneseq
    %v2758 = vshrl.u32 %v2757, 7
    %v2759 = vsub.s32 1, %v2758
    %v2760 = vrot.slane %v2751, %v2759
    %v2761 = vlaneseq
    %v2762 = vshrl.u32 %v2761, 7
    %v2763 = vsub.s32 2, %v2762
    %v2764 = vrot.slane %v2751, %v2763
    %v2765 = vlaneseq
    %v2766 = vshrl.u32 %v2765, 7
    %v2767 = vsub.s32 3, %v2766
    %v2768 = vrot.slane %v2751, %v2767
    %v2773 = vmul.f32 %v2750, %v2756
    %v2774 = vmul.f32 %v2749, %v2760
    %v2775 = vmul.f32 %v2748, %v2764
    %v2776 = vmul.f32 %v2747, %v2768
    %v2777 = vpack.c.bf16 %v2773, %v2773
    %v2778 = vpack.c.bf16 %v2774, %v2774
    %v2779 = vpack.c.bf16 %v2775, %v2775
    %v2780 = vpack.c.bf16 %v2776, %v2776
    %v2785 = vunpack.c.l.b16 %v2777
    %v2786 = vunpack.c.l.b16 %v2778
    %v2787 = vunpack.c.l.b16 %v2779
    %v2788 = vunpack.c.l.b16 %v2780
    %v2789 = vpack.c.b16 %v2786, %v2785
    %v2790 = vpack.c.b16 %v2788, %v2787
    %2793 = vst [vmem:[#allocation3 + $0xa0] sm:$0xff] %v2789
    %2794 = vst [vmem:[#allocation3 + $0xa8] sm:$0xff] %v2790
    %2795 = vrot.lane.b32.xlu0 %v2679, 15
    %v2796 = vpop.permute.xlu0 %2795
    %2797 = vrot.lane.b32.xlu0 %v2680, 15
    %v2798 = vpop.permute.xlu0 %2797
    %2799 = vrot.lane.b32.xlu0 %v2681, 15
    %v2800 = vpop.permute.xlu0 %2799
    %2801 = vrot.lane.b32.xlu0 %v2682, 15
    %v2802 = vpop.permute.xlu0 %2801
    %v2803 = vsel %vm221, %v2800, %v2802
    %v2804 = vsel %vm221, %v2798, %v2800
    %v2805 = vsel %vm221, %v2796, %v2798
    %v2806 = vsel %vm221, %v2802, %v2796
    %v2807 = vld [vmem:[%s226] sm:$0xf]
    %v2809 = vlaneseq
    %v2810 = vshrl.u32 %v2809, 7
    %v2811 = vsub.s32 0, %v2810
    %v2812 = vrot.slane %v2807, %v2811
    %v2813 = vlaneseq
    %v2814 = vshrl.u32 %v2813, 7
    %v2815 = vsub.s32 1, %v2814
    %v2816 = vrot.slane %v2807, %v2815
    %v2817 = vlaneseq
    %v2818 = vshrl.u32 %v2817, 7
    %v2819 = vsub.s32 2, %v2818
    %v2820 = vrot.slane %v2807, %v2819
    %v2821 = vlaneseq
    %v2822 = vshrl.u32 %v2821, 7
    %v2823 = vsub.s32 3, %v2822
    %v2824 = vrot.slane %v2807, %v2823
    %v2829 = vmul.f32 %v2806, %v2812
    %v2830 = vmul.f32 %v2805, %v2816
    %v2831 = vmul.f32 %v2804, %v2820
    %v2832 = vmul.f32 %v2803, %v2824
    %v2833 = vpack.c.bf16 %v2829, %v2829
    %v2834 = vpack.c.bf16 %v2830, %v2830
    %v2835 = vpack.c.bf16 %v2831, %v2831
    %v2836 = vpack.c.bf16 %v2832, %v2832
    %v2841 = vunpack.c.l.b16 %v2833
    %v2842 = vunpack.c.l.b16 %v2834
    %v2843 = vunpack.c.l.b16 %v2835
    %v2844 = vunpack.c.l.b16 %v2836
    %v2845 = vpack.c.b16 %v2842, %v2841
    %v2846 = vpack.c.b16 %v2844, %v2843
    %2849 = vst [vmem:[#allocation3 + $0xb0] sm:$0xff] %v2845
    %2850 = vst [vmem:[#allocation3 + $0xb8] sm:$0xff] %v2846
    %2851 = vrot.lane.b32.xlu0 %v2679, 1
    %v2852 = vpop.permute.xlu0 %2851
    %2853 = vrot.lane.b32.xlu0 %v2680, 1
    %v2854 = vpop.permute.xlu0 %2853
    %2855 = vrot.lane.b32.xlu0 %v2681, 1
    %v2856 = vpop.permute.xlu0 %2855
    %2857 = vrot.lane.b32.xlu0 %v2682, 1
    %v2858 = vpop.permute.xlu0 %2857
    %v2859 = vsel %vm279, %v2856, %v2858
    %v2860 = vsel %vm279, %v2854, %v2856
    %v2861 = vsel %vm279, %v2852, %v2854
    %v2862 = vsel %vm279, %v2858, %v2852
    %v2863 = vld [vmem:[%s284] sm:$0xf]
    %v2865 = vlaneseq
    %v2866 = vshrl.u32 %v2865, 7
    %v2867 = vsub.s32 0, %v2866
    %v2868 = vrot.slane %v2863, %v2867
    %v2869 = vlaneseq
    %v2870 = vshrl.u32 %v2869, 7
    %v2871 = vsub.s32 1, %v2870
    %v2872 = vrot.slane %v2863, %v2871
    %v2873 = vlaneseq
    %v2874 = vshrl.u32 %v2873, 7
    %v2875 = vsub.s32 2, %v2874
    %v2876 = vrot.slane %v2863, %v2875
    %v2877 = vlaneseq
    %v2878 = vshrl.u32 %v2877, 7
    %v2879 = vsub.s32 3, %v2878
    %v2880 = vrot.slane %v2863, %v2879
    %v2885 = vmul.f32 %v2862, %v2868
    %v2886 = vmul.f32 %v2861, %v2872
    %v2887 = vmul.f32 %v2860, %v2876
    %v2888 = vmul.f32 %v2859, %v2880
    %v2889 = vpack.c.bf16 %v2885, %v2885
    %v2890 = vpack.c.bf16 %v2886, %v2886
    %v2891 = vpack.c.bf16 %v2887, %v2887
    %v2892 = vpack.c.bf16 %v2888, %v2888
    %v2897 = vunpack.c.l.b16 %v2889
    %v2898 = vunpack.c.l.b16 %v2890
    %v2899 = vunpack.c.l.b16 %v2891
    %v2900 = vunpack.c.l.b16 %v2892
    %v2901 = vpack.c.b16 %v2898, %v2897
    %v2902 = vpack.c.b16 %v2900, %v2899
    %2905 = vst [vmem:[#allocation3 + $0xc0] sm:$0xff] %v2901
    %2906 = vst [vmem:[#allocation3 + $0xc8] sm:$0xff] %v2902
    %v2907 = vpack.c.bf16 %v2679, %v2679
    %v2908 = vpack.c.bf16 %v2680, %v2680
    %v2909 = vpack.c.bf16 %v2681, %v2681
    %v2910 = vpack.c.bf16 %v2682, %v2682
    %v2915 = vunpack.c.l.b16 %v2907
    %v2916 = vunpack.c.l.b16 %v2908
    %v2917 = vunpack.c.l.b16 %v2909
    %v2918 = vunpack.c.l.b16 %v2910
    %v2919 = vpack.c.b16 %v2916, %v2915
    %v2920 = vpack.c.b16 %v2918, %v2917
    %2923 = vst [vmem:[#allocation3 + $0xd0] sm:$0xff] %v2919
    %2924 = vst [vmem:[#allocation3 + $0xd8] sm:$0xff] %v2920
    %2925 = vrot.lane.b32.xlu0 %v2679, 127
    %v2926 = vpop.permute.xlu0 %2925
    %2927 = vrot.lane.b32.xlu0 %v2680, 127
    %v2928 = vpop.permute.xlu0 %2927
    %2929 = vrot.lane.b32.xlu0 %v2681, 127
    %v2930 = vpop.permute.xlu0 %2929
    %2931 = vrot.lane.b32.xlu0 %v2682, 127
    %v2932 = vpop.permute.xlu0 %2931
    %v2933 = vsel %vm355, %v2930, %v2932
    %v2934 = vsel %vm355, %v2928, %v2930
    %v2935 = vsel %vm355, %v2926, %v2928
    %v2936 = vsel %vm355, %v2932, %v2926
    %v2937 = vld [vmem:[%s360] sm:$0xf]
    %v2939 = vlaneseq
    %v2940 = vshrl.u32 %v2939, 7
    %v2941 = vsub.s32 0, %v2940
    %v2942 = vrot.slane %v2937, %v2941
    %v2943 = vlaneseq
    %v2944 = vshrl.u32 %v2943, 7
    %v2945 = vsub.s32 1, %v2944
    %v2946 = vrot.slane %v2937, %v2945
    %v2947 = vlaneseq
    %v2948 = vshrl.u32 %v2947, 7
    %v2949 = vsub.s32 2, %v2948
    %v2950 = vrot.slane %v2937, %v2949
    %v2951 = vlaneseq
    %v2952 = vshrl.u32 %v2951, 7
    %v2953 = vsub.s32 3, %v2952
    %v2954 = vrot.slane %v2937, %v2953
    %v2959 = vmul.f32 %v2935, %v2942
    %v2960 = vmul.f32 %v2934, %v2946
    %v2961 = vmul.f32 %v2933, %v2950
    %v2962 = vmul.f32 %v2936, %v2954
    %v2963 = vpack.c.bf16 %v2959, %v2959
    %v2964 = vpack.c.bf16 %v2960, %v2960
    %v2965 = vpack.c.bf16 %v2961, %v2961
    %v2966 = vpack.c.bf16 %v2962, %v2962
    %v2971 = vunpack.c.l.b16 %v2963
    %v2972 = vunpack.c.l.b16 %v2964
    %v2973 = vunpack.c.l.b16 %v2965
    %v2974 = vunpack.c.l.b16 %v2966
    %v2975 = vpack.c.b16 %v2972, %v2971
    %v2976 = vpack.c.b16 %v2974, %v2973
    %2979 = vst [vmem:[#allocation3 + $0xe0] sm:$0xff] %v2975
    %2980 = vst [vmem:[#allocation3 + $0xe8] sm:$0xff] %v2976
    %2981 = vrot.lane.b32.xlu0 %v2679, 113
    %v2982 = vpop.permute.xlu0 %2981
    %2983 = vrot.lane.b32.xlu0 %v2680, 113
    %v2984 = vpop.permute.xlu0 %2983
    %2985 = vrot.lane.b32.xlu0 %v2681, 113
    %v2986 = vpop.permute.xlu0 %2985
    %2987 = vrot.lane.b32.xlu0 %v2682, 113
    %v2988 = vpop.permute.xlu0 %2987
    %v2989 = vsel %vm413, %v2986, %v2988
    %v2990 = vsel %vm413, %v2984, %v2986
    %v2991 = vsel %vm413, %v2982, %v2984
    %v2992 = vsel %vm413, %v2988, %v2982
    %v2993 = vld [vmem:[%s418] sm:$0xf]
    %v2995 = vlaneseq
    %v2996 = vshrl.u32 %v2995, 7
    %v2997 = vsub.s32 0, %v2996
    %v2998 = vrot.slane %v2993, %v2997
    %v2999 = vlaneseq
    %v3000 = vshrl.u32 %v2999, 7
    %v3001 = vsub.s32 1, %v3000
    %v3002 = vrot.slane %v2993, %v3001
    %v3003 = vlaneseq
    %v3004 = vshrl.u32 %v3003, 7
    %v3005 = vsub.s32 2, %v3004
    %v3006 = vrot.slane %v2993, %v3005
    %v3007 = vlaneseq
    %v3008 = vshrl.u32 %v3007, 7
    %v3009 = vsub.s32 3, %v3008
    %v3010 = vrot.slane %v2993, %v3009
    %v3015 = vmul.f32 %v2991, %v2998
    %v3016 = vmul.f32 %v2990, %v3002
    %v3017 = vmul.f32 %v2989, %v3006
    %v3018 = vmul.f32 %v2992, %v3010
    %v3019 = vpack.c.bf16 %v3015, %v3015
    %v3020 = vpack.c.bf16 %v3016, %v3016
    %v3021 = vpack.c.bf16 %v3017, %v3017
    %v3022 = vpack.c.bf16 %v3018, %v3018
    %v3027 = vunpack.c.l.b16 %v3019
    %v3028 = vunpack.c.l.b16 %v3020
    %v3029 = vunpack.c.l.b16 %v3021
    %v3030 = vunpack.c.l.b16 %v3022
    %v3031 = vpack.c.b16 %v3028, %v3027
    %v3032 = vpack.c.b16 %v3030, %v3029
    %3035 = vst [vmem:[#allocation3 + $0xf0] sm:$0xff] %v3031
    %3036 = vst [vmem:[#allocation3 + $0xf8] sm:$0xff] %v3032
    %3037 = vrot.lane.b32.xlu0 %v2679, 112
    %v3038 = vpop.permute.xlu0 %3037
    %3039 = vrot.lane.b32.xlu0 %v2680, 112
    %v3040 = vpop.permute.xlu0 %3039
    %3041 = vrot.lane.b32.xlu0 %v2681, 112
    %v3042 = vpop.permute.xlu0 %3041
    %3043 = vrot.lane.b32.xlu0 %v2682, 112
    %v3044 = vpop.permute.xlu0 %3043
    %v3045 = vsel %vm471, %v3042, %v3044
    %v3046 = vsel %vm471, %v3040, %v3042
    %v3047 = vsel %vm471, %v3038, %v3040
    %v3048 = vsel %vm471, %v3044, %v3038
    %v3049 = vld [vmem:[%s476] sm:$0xf]
    %v3051 = vlaneseq
    %v3052 = vshrl.u32 %v3051, 7
    %v3053 = vsub.s32 0, %v3052
    %v3054 = vrot.slane %v3049, %v3053
    %v3055 = vlaneseq
    %v3056 = vshrl.u32 %v3055, 7
    %v3057 = vsub.s32 1, %v3056
    %v3058 = vrot.slane %v3049, %v3057
    %v3059 = vlaneseq
    %v3060 = vshrl.u32 %v3059, 7
    %v3061 = vsub.s32 2, %v3060
    %v3062 = vrot.slane %v3049, %v3061
    %v3063 = vlaneseq
    %v3064 = vshrl.u32 %v3063, 7
    %v3065 = vsub.s32 3, %v3064
    %v3066 = vrot.slane %v3049, %v3065
    %v3071 = vmul.f32 %v3047, %v3054
    %v3072 = vmul.f32 %v3046, %v3058
    %v3073 = vmul.f32 %v3045, %v3062
    %v3074 = vmul.f32 %v3048, %v3066
    %v3075 = vpack.c.bf16 %v3071, %v3071
    %v3076 = vpack.c.bf16 %v3072, %v3072
    %v3077 = vpack.c.bf16 %v3073, %v3073
    %v3078 = vpack.c.bf16 %v3074, %v3074
    %v3083 = vunpack.c.l.b16 %v3075
    %v3084 = vunpack.c.l.b16 %v3076
    %v3085 = vunpack.c.l.b16 %v3077
    %v3086 = vunpack.c.l.b16 %v3078
    %v3087 = vpack.c.b16 %v3084, %v3083
    %v3088 = vpack.c.b16 %v3086, %v3085
    %3091 = vst [vmem:[#allocation3 + $0x100] sm:$0xff] %v3087
    %3092 = vst [vmem:[#allocation3 + $0x108] sm:$0xff] %v3088
    %3093 = vrot.lane.b32.xlu0 %v2679, 111
    %v3094 = vpop.permute.xlu0 %3093
    %3095 = vrot.lane.b32.xlu0 %v2680, 111
    %v3096 = vpop.permute.xlu0 %3095
    %3097 = vrot.lane.b32.xlu0 %v2681, 111
    %v3098 = vpop.permute.xlu0 %3097
    %3099 = vrot.lane.b32.xlu0 %v2682, 111
    %v3100 = vpop.permute.xlu0 %3099
    %v3101 = vsel %vm529, %v3098, %v3100
    %v3102 = vsel %vm529, %v3096, %v3098
    %v3103 = vsel %vm529, %v3094, %v3096
    %v3104 = vsel %vm529, %v3100, %v3094
    %v3105 = vld [vmem:[%s534] sm:$0xf]
    %v3107 = vlaneseq
    %v3108 = vshrl.u32 %v3107, 7
    %v3109 = vsub.s32 0, %v3108
    %v3110 = vrot.slane %v3105, %v3109
    %v3111 = vlaneseq
    %v3112 = vshrl.u32 %v3111, 7
    %v3113 = vsub.s32 1, %v3112
    %v3114 = vrot.slane %v3105, %v3113
    %v3115 = vlaneseq
    %v3116 = vshrl.u32 %v3115, 7
    %v3117 = vsub.s32 2, %v3116
    %v3118 = vrot.slane %v3105, %v3117
    %v3119 = vlaneseq
    %v3120 = vshrl.u32 %v3119, 7
    %v3121 = vsub.s32 3, %v3120
    %v3122 = vrot.slane %v3105, %v3121
    %v3127 = vmul.f32 %v3103, %v3110
    %v3128 = vmul.f32 %v3102, %v3114
    %v3129 = vmul.f32 %v3101, %v3118
    %v3130 = vmul.f32 %v3104, %v3122
    %v3131 = vpack.c.bf16 %v3127, %v3127
    %v3132 = vpack.c.bf16 %v3128, %v3128
    %v3133 = vpack.c.bf16 %v3129, %v3129
    %v3134 = vpack.c.bf16 %v3130, %v3130
    %v3139 = vunpack.c.l.b16 %v3131
    %v3140 = vunpack.c.l.b16 %v3132
    %v3141 = vunpack.c.l.b16 %v3133
    %v3142 = vunpack.c.l.b16 %v3134
    %v3143 = vpack.c.b16 %v3140, %v3139
    %v3144 = vpack.c.b16 %v3142, %v3141
    %3147 = vst [vmem:[#allocation3 + $0x110] sm:$0xff] %v3143
    %3148 = vst [vmem:[#allocation3 + $0x118] sm:$0xff] %v3144
    %v3149 = vld [vmem:[%s2146] sm:$0xff]
    %v3150 = vld [vmem:[%s2146 + $0x8] sm:$0xff]
    %v3151 = vld [vmem:[%s2146 + $0x10] sm:$0xff]
    %v3152 = vld [vmem:[%s2146 + $0x18] sm:$0xff]
    %v3153 = vld [vmem:[#allocation4 + $0x10] sm:$0xff]
    %v3154 = vld [vmem:[#allocation5 + $0x10] sm:$0xff]
    %v3155 = vld [vmem:[%s8 + $0x10] sm:$0xff]
    %v3156 = vmul.f32 %v3155, %v3154
    %v3157 = vld [vmem:[%s9 + $0x10] sm:$0xff]
    %v3158 = vmul.f32 %v3153, %v3156
    %v3159 = vsub.f32 %v3157, %v3158
    %3161 = vset.pattern.permute.xlu0 0
    %3162 = vperm.xlu0 %3161, %v3156
    %v3163 = vpop.permute.xlu0 %3162
    %v3165 = vmul.f32 %v3149, %v3163
    %v3166 = vmul.f32 %v3150, %v3163
    %v3167 = vmul.f32 %v3151, %v3163
    %v3168 = vmul.f32 %v3152, %v3163
    %3170 = vset.pattern.permute.xlu0 0
    %3171 = vperm.xlu0 %3170, %v3159
    %v3172 = vpop.permute.xlu0 %3171
    %v3174 = vadd.f32 %v3165, %v3172
    %v3175 = vadd.f32 %v3166, %v3172
    %v3176 = vadd.f32 %v3167, %v3172
    %v3177 = vadd.f32 %v3168, %v3172
    %v3178 = vmax.f32 %v3174, 0.0
    %v3179 = vmax.f32 %v3175, 0.0
    %v3180 = vmax.f32 %v3176, 0.0
    %v3181 = vmax.f32 %v3177, 0.0
    %3182 = vrot.lane.b32.xlu0 %v3178, 17
    %v3183 = vpop.permute.xlu0 %3182
    %3184 = vrot.lane.b32.xlu0 %v3179, 17
    %v3185 = vpop.permute.xlu0 %3184
    %3186 = vrot.lane.b32.xlu0 %v3180, 17
    %v3187 = vpop.permute.xlu0 %3186
    %3188 = vrot.lane.b32.xlu0 %v3181, 17
    %v3189 = vpop.permute.xlu0 %3188
    %v3190 = vsel %vm106, %v3187, %v3189
    %v3191 = vsel %vm106, %v3185, %v3187
    %v3192 = vsel %vm106, %v3183, %v3185
    %v3193 = vsel %vm106, %v3189, %v3183
    %v3194 = vld [vmem:[%s1] sm:$0xf]
    %v3196 = vlaneseq
    %v3197 = vshrl.u32 %v3196, 7
    %v3198 = vsub.s32 0, %v3197
    %v3199 = vrot.slane %v3194, %v3198
    %v3200 = vlaneseq
    %v3201 = vshrl.u32 %v3200, 7
    %v3202 = vsub.s32 1, %v3201
    %v3203 = vrot.slane %v3194, %v3202
    %v3204 = vlaneseq
    %v3205 = vshrl.u32 %v3204, 7
    %v3206 = vsub.s32 2, %v3205
    %v3207 = vrot.slane %v3194, %v3206
    %v3208 = vlaneseq
    %v3209 = vshrl.u32 %v3208, 7
    %v3210 = vsub.s32 3, %v3209
    %v3211 = vrot.slane %v3194, %v3210
    %v3216 = vmul.f32 %v3193, %v3199
    %v3217 = vmul.f32 %v3192, %v3203
    %v3218 = vmul.f32 %v3191, %v3207
    %v3219 = vmul.f32 %v3190, %v3211
    %v3220 = vpack.c.bf16 %v3216, %v3216
    %v3221 = vpack.c.bf16 %v3217, %v3217
    %v3222 = vpack.c.bf16 %v3218, %v3218
    %v3223 = vpack.c.bf16 %v3219, %v3219
    %v3228 = vunpack.c.l.b16 %v3220
    %v3229 = vunpack.c.l.b16 %v3221
    %v3230 = vunpack.c.l.b16 %v3222
    %v3231 = vunpack.c.l.b16 %v3223
    %v3232 = vpack.c.b16 %v3229, %v3228
    %v3233 = vpack.c.b16 %v3231, %v3230
    %3236 = vst [vmem:[#allocation3 + $0x120] sm:$0xff] %v3232
    %3237 = vst [vmem:[#allocation3 + $0x128] sm:$0xff] %v3233
    %3238 = vrot.lane.b32.xlu0 %v3178, 16
    %v3239 = vpop.permute.xlu0 %3238
    %3240 = vrot.lane.b32.xlu0 %v3179, 16
    %v3241 = vpop.permute.xlu0 %3240
    %3242 = vrot.lane.b32.xlu0 %v3180, 16
    %v3243 = vpop.permute.xlu0 %3242
    %3244 = vrot.lane.b32.xlu0 %v3181, 16
    %v3245 = vpop.permute.xlu0 %3244
    %v3246 = vsel %vm163, %v3243, %v3245
    %v3247 = vsel %vm163, %v3241, %v3243
    %v3248 = vsel %vm163, %v3239, %v3241
    %v3249 = vsel %vm163, %v3245, %v3239
    %v3250 = vld [vmem:[%s168] sm:$0xf]
    %v3252 = vlaneseq
    %v3253 = vshrl.u32 %v3252, 7
    %v3254 = vsub.s32 0, %v3253
    %v3255 = vrot.slane %v3250, %v3254
    %v3256 = vlaneseq
    %v3257 = vshrl.u32 %v3256, 7
    %v3258 = vsub.s32 1, %v3257
    %v3259 = vrot.slane %v3250, %v3258
    %v3260 = vlaneseq
    %v3261 = vshrl.u32 %v3260, 7
    %v3262 = vsub.s32 2, %v3261
    %v3263 = vrot.slane %v3250, %v3262
    %v3264 = vlaneseq
    %v3265 = vshrl.u32 %v3264, 7
    %v3266 = vsub.s32 3, %v3265
    %v3267 = vrot.slane %v3250, %v3266
    %v3272 = vmul.f32 %v3249, %v3255
    %v3273 = vmul.f32 %v3248, %v3259
    %v3274 = vmul.f32 %v3247, %v3263
    %v3275 = vmul.f32 %v3246, %v3267
    %v3276 = vpack.c.bf16 %v3272, %v3272
    %v3277 = vpack.c.bf16 %v3273, %v3273
    %v3278 = vpack.c.bf16 %v3274, %v3274
    %v3279 = vpack.c.bf16 %v3275, %v3275
    %v3284 = vunpack.c.l.b16 %v3276
    %v3285 = vunpack.c.l.b16 %v3277
    %v3286 = vunpack.c.l.b16 %v3278
    %v3287 = vunpack.c.l.b16 %v3279
    %v3288 = vpack.c.b16 %v3285, %v3284
    %v3289 = vpack.c.b16 %v3287, %v3286
    %3292 = vst [vmem:[#allocation3 + $0x130] sm:$0xff] %v3288
    %3293 = vst [vmem:[#allocation3 + $0x138] sm:$0xff] %v3289
    %3294 = vrot.lane.b32.xlu0 %v3178, 15
    %v3295 = vpop.permute.xlu0 %3294
    %3296 = vrot.lane.b32.xlu0 %v3179, 15
    %v3297 = vpop.permute.xlu0 %3296
    %3298 = vrot.lane.b32.xlu0 %v3180, 15
    %v3299 = vpop.permute.xlu0 %3298
    %3300 = vrot.lane.b32.xlu0 %v3181, 15
    %v3301 = vpop.permute.xlu0 %3300
    %v3302 = vsel %vm221, %v3299, %v3301
    %v3303 = vsel %vm221, %v3297, %v3299
    %v3304 = vsel %vm221, %v3295, %v3297
    %v3305 = vsel %vm221, %v3301, %v3295
    %v3306 = vld [vmem:[%s226] sm:$0xf]
    %v3308 = vlaneseq
    %v3309 = vshrl.u32 %v3308, 7
    %v3310 = vsub.s32 0, %v3309
    %v3311 = vrot.slane %v3306, %v3310
    %v3312 = vlaneseq
    %v3313 = vshrl.u32 %v3312, 7
    %v3314 = vsub.s32 1, %v3313
    %v3315 = vrot.slane %v3306, %v3314
    %v3316 = vlaneseq
    %v3317 = vshrl.u32 %v3316, 7
    %v3318 = vsub.s32 2, %v3317
    %v3319 = vrot.slane %v3306, %v3318
    %v3320 = vlaneseq
    %v3321 = vshrl.u32 %v3320, 7
    %v3322 = vsub.s32 3, %v3321
    %v3323 = vrot.slane %v3306, %v3322
    %v3328 = vmul.f32 %v3305, %v3311
    %v3329 = vmul.f32 %v3304, %v3315
    %v3330 = vmul.f32 %v3303, %v3319
    %v3331 = vmul.f32 %v3302, %v3323
    %v3332 = vpack.c.bf16 %v3328, %v3328
    %v3333 = vpack.c.bf16 %v3329, %v3329
    %v3334 = vpack.c.bf16 %v3330, %v3330
    %v3335 = vpack.c.bf16 %v3331, %v3331
    %v3340 = vunpack.c.l.b16 %v3332
    %v3341 = vunpack.c.l.b16 %v3333
    %v3342 = vunpack.c.l.b16 %v3334
    %v3343 = vunpack.c.l.b16 %v3335
    %v3344 = vpack.c.b16 %v3341, %v3340
    %v3345 = vpack.c.b16 %v3343, %v3342
    %3348 = vst [vmem:[#allocation3 + $0x140] sm:$0xff] %v3344
    %3349 = vst [vmem:[#allocation3 + $0x148] sm:$0xff] %v3345
    %3350 = vrot.lane.b32.xlu0 %v3178, 1
    %v3351 = vpop.permute.xlu0 %3350
    %3352 = vrot.lane.b32.xlu0 %v3179, 1
    %v3353 = vpop.permute.xlu0 %3352
    %3354 = vrot.lane.b32.xlu0 %v3180, 1
    %v3355 = vpop.permute.xlu0 %3354
    %3356 = vrot.lane.b32.xlu0 %v3181, 1
    %v3357 = vpop.permute.xlu0 %3356
    %v3358 = vsel %vm279, %v3355, %v3357
    %v3359 = vsel %vm279, %v3353, %v3355
    %v3360 = vsel %vm279, %v3351, %v3353
    %v3361 = vsel %vm279, %v3357, %v3351
    %v3362 = vld [vmem:[%s284] sm:$0xf]
    %v3364 = vlaneseq
    %v3365 = vshrl.u32 %v3364, 7
    %v3366 = vsub.s32 0, %v3365
    %v3367 = vrot.slane %v3362, %v3366
    %v3368 = vlaneseq
    %v3369 = vshrl.u32 %v3368, 7
    %v3370 = vsub.s32 1, %v3369
    %v3371 = vrot.slane %v3362, %v3370
    %v3372 = vlaneseq
    %v3373 = vshrl.u32 %v3372, 7
    %v3374 = vsub.s32 2, %v3373
    %v3375 = vrot.slane %v3362, %v3374
    %v3376 = vlaneseq
    %v3377 = vshrl.u32 %v3376, 7
    %v3378 = vsub.s32 3, %v3377
    %v3379 = vrot.slane %v3362, %v3378
    %v3384 = vmul.f32 %v3361, %v3367
    %v3385 = vmul.f32 %v3360, %v3371
    %v3386 = vmul.f32 %v3359, %v3375
    %v3387 = vmul.f32 %v3358, %v3379
    %v3388 = vpack.c.bf16 %v3384, %v3384
    %v3389 = vpack.c.bf16 %v3385, %v3385
    %v3390 = vpack.c.bf16 %v3386, %v3386
    %v3391 = vpack.c.bf16 %v3387, %v3387
    %v3396 = vunpack.c.l.b16 %v3388
    %v3397 = vunpack.c.l.b16 %v3389
    %v3398 = vunpack.c.l.b16 %v3390
    %v3399 = vunpack.c.l.b16 %v3391
    %v3400 = vpack.c.b16 %v3397, %v3396
    %v3401 = vpack.c.b16 %v3399, %v3398
    %3404 = vst [vmem:[#allocation3 + $0x150] sm:$0xff] %v3400
    %3405 = vst [vmem:[#allocation3 + $0x158] sm:$0xff] %v3401
    %v3406 = vpack.c.bf16 %v3178, %v3178
    %v3407 = vpack.c.bf16 %v3179, %v3179
    %v3408 = vpack.c.bf16 %v3180, %v3180
    %v3409 = vpack.c.bf16 %v3181, %v3181
    %v3414 = vunpack.c.l.b16 %v3406
    %v3415 = vunpack.c.l.b16 %v3407
    %v3416 = vunpack.c.l.b16 %v3408
    %v3417 = vunpack.c.l.b16 %v3409
    %v3418 = vpack.c.b16 %v3415, %v3414
    %v3419 = vpack.c.b16 %v3417, %v3416
    %3422 = vst [vmem:[#allocation3 + $0x160] sm:$0xff] %v3418
    %3423 = vst [vmem:[#allocation3 + $0x168] sm:$0xff] %v3419
    %3424 = vrot.lane.b32.xlu0 %v3178, 127
    %v3425 = vpop.permute.xlu0 %3424
    %3426 = vrot.lane.b32.xlu0 %v3179, 127
    %v3427 = vpop.permute.xlu0 %3426
    %3428 = vrot.lane.b32.xlu0 %v3180, 127
    %v3429 = vpop.permute.xlu0 %3428
    %3430 = vrot.lane.b32.xlu0 %v3181, 127
    %v3431 = vpop.permute.xlu0 %3430
    %v3432 = vsel %vm355, %v3429, %v3431
    %v3433 = vsel %vm355, %v3427, %v3429
    %v3434 = vsel %vm355, %v3425, %v3427
    %v3435 = vsel %vm355, %v3431, %v3425
    %v3436 = vld [vmem:[%s360] sm:$0xf]
    %v3438 = vlaneseq
    %v3439 = vshrl.u32 %v3438, 7
    %v3440 = vsub.s32 0, %v3439
    %v3441 = vrot.slane %v3436, %v3440
    %v3442 = vlaneseq
    %v3443 = vshrl.u32 %v3442, 7
    %v3444 = vsub.s32 1, %v3443
    %v3445 = vrot.slane %v3436, %v3444
    %v3446 = vlaneseq
    %v3447 = vshrl.u32 %v3446, 7
    %v3448 = vsub.s32 2, %v3447
    %v3449 = vrot.slane %v3436, %v3448
    %v3450 = vlaneseq
    %v3451 = vshrl.u32 %v3450, 7
    %v3452 = vsub.s32 3, %v3451
    %v3453 = vrot.slane %v3436, %v3452
    %v3458 = vmul.f32 %v3434, %v3441
    %v3459 = vmul.f32 %v3433, %v3445
    %v3460 = vmul.f32 %v3432, %v3449
    %v3461 = vmul.f32 %v3435, %v3453
    %v3462 = vpack.c.bf16 %v3458, %v3458
    %v3463 = vpack.c.bf16 %v3459, %v3459
    %v3464 = vpack.c.bf16 %v3460, %v3460
    %v3465 = vpack.c.bf16 %v3461, %v3461
    %v3470 = vunpack.c.l.b16 %v3462
    %v3471 = vunpack.c.l.b16 %v3463
    %v3472 = vunpack.c.l.b16 %v3464
    %v3473 = vunpack.c.l.b16 %v3465
    %v3474 = vpack.c.b16 %v3471, %v3470
    %v3475 = vpack.c.b16 %v3473, %v3472
    %3478 = vst [vmem:[#allocation3 + $0x170] sm:$0xff] %v3474
    %3479 = vst [vmem:[#allocation3 + $0x178] sm:$0xff] %v3475
    %3480 = vrot.lane.b32.xlu0 %v3178, 113
    %v3481 = vpop.permute.xlu0 %3480
    %3482 = vrot.lane.b32.xlu0 %v3179, 113
    %v3483 = vpop.permute.xlu0 %3482
    %3484 = vrot.lane.b32.xlu0 %v3180, 113
    %v3485 = vpop.permute.xlu0 %3484
    %3486 = vrot.lane.b32.xlu0 %v3181, 113
    %v3487 = vpop.permute.xlu0 %3486
    %v3488 = vsel %vm413, %v3485, %v3487
    %v3489 = vsel %vm413, %v3483, %v3485
    %v3490 = vsel %vm413, %v3481, %v3483
    %v3491 = vsel %vm413, %v3487, %v3481
    %v3492 = vld [vmem:[%s418] sm:$0xf]
    %v3494 = vlaneseq
    %v3495 = vshrl.u32 %v3494, 7
    %v3496 = vsub.s32 0, %v3495
    %v3497 = vrot.slane %v3492, %v3496
    %v3498 = vlaneseq
    %v3499 = vshrl.u32 %v3498, 7
    %v3500 = vsub.s32 1, %v3499
    %v3501 = vrot.slane %v3492, %v3500
    %v3502 = vlaneseq
    %v3503 = vshrl.u32 %v3502, 7
    %v3504 = vsub.s32 2, %v3503
    %v3505 = vrot.slane %v3492, %v3504
    %v3506 = vlaneseq
    %v3507 = vshrl.u32 %v3506, 7
    %v3508 = vsub.s32 3, %v3507
    %v3509 = vrot.slane %v3492, %v3508
    %v3514 = vmul.f32 %v3490, %v3497
    %v3515 = vmul.f32 %v3489, %v3501
    %v3516 = vmul.f32 %v3488, %v3505
    %v3517 = vmul.f32 %v3491, %v3509
    %v3518 = vpack.c.bf16 %v3514, %v3514
    %v3519 = vpack.c.bf16 %v3515, %v3515
    %v3520 = vpack.c.bf16 %v3516, %v3516
    %v3521 = vpack.c.bf16 %v3517, %v3517
    %v3526 = vunpack.c.l.b16 %v3518
    %v3527 = vunpack.c.l.b16 %v3519
    %v3528 = vunpack.c.l.b16 %v3520
    %v3529 = vunpack.c.l.b16 %v3521
    %v3530 = vpack.c.b16 %v3527, %v3526
    %v3531 = vpack.c.b16 %v3529, %v3528
    %3534 = vst [vmem:[#allocation3 + $0x180] sm:$0xff] %v3530
    %3535 = vst [vmem:[#allocation3 + $0x188] sm:$0xff] %v3531
    %3536 = vrot.lane.b32.xlu0 %v3178, 112
    %v3537 = vpop.permute.xlu0 %3536
    %3538 = vrot.lane.b32.xlu0 %v3179, 112
    %v3539 = vpop.permute.xlu0 %3538
    %3540 = vrot.lane.b32.xlu0 %v3180, 112
    %v3541 = vpop.permute.xlu0 %3540
    %3542 = vrot.lane.b32.xlu0 %v3181, 112
    %v3543 = vpop.permute.xlu0 %3542
    %v3544 = vsel %vm471, %v3541, %v3543
    %v3545 = vsel %vm471, %v3539, %v3541
    %v3546 = vsel %vm471, %v3537, %v3539
    %v3547 = vsel %vm471, %v3543, %v3537
    %v3548 = vld [vmem:[%s476] sm:$0xf]
    %v3550 = vlaneseq
    %v3551 = vshrl.u32 %v3550, 7
    %v3552 = vsub.s32 0, %v3551
    %v3553 = vrot.slane %v3548, %v3552
    %v3554 = vlaneseq
    %v3555 = vshrl.u32 %v3554, 7
    %v3556 = vsub.s32 1, %v3555
    %v3557 = vrot.slane %v3548, %v3556
    %v3558 = vlaneseq
    %v3559 = vshrl.u32 %v3558, 7
    %v3560 = vsub.s32 2, %v3559
    %v3561 = vrot.slane %v3548, %v3560
    %v3562 = vlaneseq
    %v3563 = vshrl.u32 %v3562, 7
    %v3564 = vsub.s32 3, %v3563
    %v3565 = vrot.slane %v3548, %v3564
    %v3570 = vmul.f32 %v3546, %v3553
    %v3571 = vmul.f32 %v3545, %v3557
    %v3572 = vmul.f32 %v3544, %v3561
    %v3573 = vmul.f32 %v3547, %v3565
    %v3574 = vpack.c.bf16 %v3570, %v3570
    %v3575 = vpack.c.bf16 %v3571, %v3571
    %v3576 = vpack.c.bf16 %v3572, %v3572
    %v3577 = vpack.c.bf16 %v3573, %v3573
    %v3582 = vunpack.c.l.b16 %v3574
    %v3583 = vunpack.c.l.b16 %v3575
    %v3584 = vunpack.c.l.b16 %v3576
    %v3585 = vunpack.c.l.b16 %v3577
    %v3586 = vpack.c.b16 %v3583, %v3582
    %v3587 = vpack.c.b16 %v3585, %v3584
    %3590 = vst [vmem:[#allocation3 + $0x190] sm:$0xff] %v3586
    %3591 = vst [vmem:[#allocation3 + $0x198] sm:$0xff] %v3587
    %3592 = vrot.lane.b32.xlu0 %v3178, 111
    %v3593 = vpop.permute.xlu0 %3592
    %3594 = vrot.lane.b32.xlu0 %v3179, 111
    %v3595 = vpop.permute.xlu0 %3594
    %3596 = vrot.lane.b32.xlu0 %v3180, 111
    %v3597 = vpop.permute.xlu0 %3596
    %3598 = vrot.lane.b32.xlu0 %v3181, 111
    %v3599 = vpop.permute.xlu0 %3598
    %v3600 = vsel %vm529, %v3597, %v3599
    %v3601 = vsel %vm529, %v3595, %v3597
    %v3602 = vsel %vm529, %v3593, %v3595
    %v3603 = vsel %vm529, %v3599, %v3593
    %v3604 = vld [vmem:[%s534] sm:$0xf]
    %v3606 = vlaneseq
    %v3607 = vshrl.u32 %v3606, 7
    %v3608 = vsub.s32 0, %v3607
    %v3609 = vrot.slane %v3604, %v3608
    %v3610 = vlaneseq
    %v3611 = vshrl.u32 %v3610, 7
    %v3612 = vsub.s32 1, %v3611
    %v3613 = vrot.slane %v3604, %v3612
    %v3614 = vlaneseq
    %v3615 = vshrl.u32 %v3614, 7
    %v3616 = vsub.s32 2, %v3615
    %v3617 = vrot.slane %v3604, %v3616
    %v3618 = vlaneseq
    %v3619 = vshrl.u32 %v3618, 7
    %v3620 = vsub.s32 3, %v3619
    %v3621 = vrot.slane %v3604, %v3620
    %v3626 = vmul.f32 %v3602, %v3609
    %v3627 = vmul.f32 %v3601, %v3613
    %v3628 = vmul.f32 %v3600, %v3617
    %v3629 = vmul.f32 %v3603, %v3621
    %v3630 = vpack.c.bf16 %v3626, %v3626
    %v3631 = vpack.c.bf16 %v3627, %v3627
    %v3632 = vpack.c.bf16 %v3628, %v3628
    %v3633 = vpack.c.bf16 %v3629, %v3629
    %v3638 = vunpack.c.l.b16 %v3630
    %v3639 = vunpack.c.l.b16 %v3631
    %v3640 = vunpack.c.l.b16 %v3632
    %v3641 = vunpack.c.l.b16 %v3633
    %v3642 = vpack.c.b16 %v3639, %v3638
    %v3643 = vpack.c.b16 %v3641, %v3640
    %3646 = vst [vmem:[#allocation3 + $0x1a0] sm:$0xff] %v3642
    %3647 = vst [vmem:[#allocation3 + $0x1a8] sm:$0xff] %v3643
    %v3648 = vld [vmem:[%s10] sm:$0xff]
    %v3649 = vld [vmem:[#allocation3] sm:$0xff]
    %v3650 = vld [vmem:[#allocation3 + $0x8] sm:$0xff]
    %v3651 = vld [vmem:[#allocation3 + $0x10] sm:$0xff]
    %v3652 = vld [vmem:[#allocation3 + $0x18] sm:$0xff]
    %v3653 = vld [vmem:[#allocation3 + $0x20] sm:$0xff]
    %v3654 = vld [vmem:[#allocation3 + $0x28] sm:$0xff]
    %v3655 = vld [vmem:[#allocation3 + $0x30] sm:$0xff]
    %v3656 = vld [vmem:[#allocation3 + $0x38] sm:$0xff]
    %v3657 = vld [vmem:[#allocation3 + $0x40] sm:$0xff]
    %v3658 = vld [vmem:[#allocation3 + $0x48] sm:$0xff]
    %v3659 = vld [vmem:[#allocation3 + $0x50] sm:$0xff]
    %v3660 = vld [vmem:[#allocation3 + $0x58] sm:$0xff]
    %v3661 = vld [vmem:[#allocation3 + $0x60] sm:$0xff]
    %v3662 = vld [vmem:[#allocation3 + $0x68] sm:$0xff]
    %v3663 = vld [vmem:[#allocation3 + $0x70] sm:$0xff]
    %v3664 = vld [vmem:[#allocation3 + $0x78] sm:$0xff]
    %v3665 = vld [vmem:[#allocation3 + $0x80] sm:$0xff]
    %v3666 = vld [vmem:[#allocation3 + $0x88] sm:$0xff]
    %v3667 = vld [vmem:[#allocation3 + $0x90] sm:$0xff]
    %v3668 = vld [vmem:[#allocation3 + $0x98] sm:$0xff]
    %v3669 = vld [vmem:[#allocation3 + $0xa0] sm:$0xff]
    %v3670 = vld [vmem:[#allocation3 + $0xa8] sm:$0xff]
    %v3671 = vld [vmem:[#allocation3 + $0xb0] sm:$0xff]
    %v3672 = vld [vmem:[#allocation3 + $0xb8] sm:$0xff]
    %v3673 = vld [vmem:[#allocation3 + $0xc0] sm:$0xff]
    %v3674 = vld [vmem:[#allocation3 + $0xc8] sm:$0xff]
    %v3675 = vld [vmem:[#allocation3 + $0xd0] sm:$0xff]
    %v3676 = vld [vmem:[#allocation3 + $0xd8] sm:$0xff]
    %v3677 = vld [vmem:[#allocation3 + $0xe0] sm:$0xff]
    %v3678 = vld [vmem:[#allocation3 + $0xe8] sm:$0xff]
    %v3679 = vld [vmem:[#allocation3 + $0xf0] sm:$0xff]
    %v3680 = vld [vmem:[#allocation3 + $0xf8] sm:$0xff]
    %v3681 = vld [vmem:[#allocation3 + $0x100] sm:$0xff]
    %v3682 = vld [vmem:[#allocation3 + $0x108] sm:$0xff]
    %v3683 = vld [vmem:[#allocation3 + $0x110] sm:$0xff]
    %v3684 = vld [vmem:[#allocation3 + $0x118] sm:$0xff]
    %v3685 = vld [vmem:[#allocation3 + $0x120] sm:$0xff]
    %v3686 = vld [vmem:[#allocation3 + $0x128] sm:$0xff]
    %v3687 = vld [vmem:[#allocation3 + $0x130] sm:$0xff]
    %v3688 = vld [vmem:[#allocation3 + $0x138] sm:$0xff]
    %v3689 = vld [vmem:[#allocation3 + $0x140] sm:$0xff]
    %v3690 = vld [vmem:[#allocation3 + $0x148] sm:$0xff]
    %v3691 = vld [vmem:[#allocation3 + $0x150] sm:$0xff]
    %v3692 = vld [vmem:[#allocation3 + $0x158] sm:$0xff]
    %v3693 = vld [vmem:[#allocation3 + $0x160] sm:$0xff]
    %v3694 = vld [vmem:[#allocation3 + $0x168] sm:$0xff]
    %v3695 = vld [vmem:[#allocation3 + $0x170] sm:$0xff]
    %v3696 = vld [vmem:[#allocation3 + $0x178] sm:$0xff]
    %v3697 = vld [vmem:[#allocation3 + $0x180] sm:$0xff]
    %v3698 = vld [vmem:[#allocation3 + $0x188] sm:$0xff]
    %v3699 = vld [vmem:[#allocation3 + $0x190] sm:$0xff]
    %v3700 = vld [vmem:[#allocation3 + $0x198] sm:$0xff]
    %v3701 = vld [vmem:[#allocation3 + $0x1a0] sm:$0xff]
    %v3702 = vld [vmem:[#allocation3 + $0x1a8] sm:$0xff]
    %v3704 = vunpack.c.l.b16 %v3648
    %v3705 = vunpack.c.h.b16 %v3648
    %v3706 = vpack.c.b16 %v3704, %v3704
    %v3707 = vpack.c.b16 %v3705, %v3705
    %v3763 = vunpack.c.l.b16 %v3649
    %v3764 = vunpack.c.h.b16 %v3649
    %v3765 = vunpack.c.l.b16 %v3650
    %v3766 = vunpack.c.h.b16 %v3650
    %v3767 = vunpack.c.l.b16 %v3651
    %v3768 = vunpack.c.h.b16 %v3651
    %v3769 = vunpack.c.l.b16 %v3652
    %v3770 = vunpack.c.h.b16 %v3652
    %v3771 = vunpack.c.l.b16 %v3653
    %v3772 = vunpack.c.h.b16 %v3653
    %v3773 = vunpack.c.l.b16 %v3654
    %v3774 = vunpack.c.h.b16 %v3654
    %v3775 = vunpack.c.l.b16 %v3655
    %v3776 = vunpack.c.h.b16 %v3655
    %v3777 = vunpack.c.l.b16 %v3656
    %v3778 = vunpack.c.h.b16 %v3656
    %v3779 = vunpack.c.l.b16 %v3657
    %v3780 = vunpack.c.h.b16 %v3657
    %v3781 = vunpack.c.l.b16 %v3658
    %v3782 = vunpack.c.h.b16 %v3658
    %v3783 = vunpack.c.l.b16 %v3659
    %v3784 = vunpack.c.h.b16 %v3659
    %v3785 = vunpack.c.l.b16 %v3660
    %v3786 = vunpack.c.h.b16 %v3660
    %v3787 = vunpack.c.l.b16 %v3661
    %v3788 = vunpack.c.h.b16 %v3661
    %v3789 = vunpack.c.l.b16 %v3662
    %v3790 = vunpack.c.h.b16 %v3662
    %v3791 = vunpack.c.l.b16 %v3663
    %v3792 = vunpack.c.h.b16 %v3663
    %v3793 = vunpack.c.l.b16 %v3664
    %v3794 = vunpack.c.h.b16 %v3664
    %v3795 = vunpack.c.l.b16 %v3665
    %v3796 = vunpack.c.h.b16 %v3665
    %v3797 = vunpack.c.l.b16 %v3666
    %v3798 = vunpack.c.h.b16 %v3666
    %v3799 = vunpack.c.l.b16 %v3667
    %v3800 = vunpack.c.h.b16 %v3667
    %v3801 = vunpack.c.l.b16 %v3668
    %v3802 = vunpack.c.h.b16 %v3668
    %v3803 = vunpack.c.l.b16 %v3669
    %v3804 = vunpack.c.h.b16 %v3669
    %v3805 = vunpack.c.l.b16 %v3670
    %v3806 = vunpack.c.h.b16 %v3670
    %v3807 = vunpack.c.l.b16 %v3671
    %v3808 = vunpack.c.h.b16 %v3671
    %v3809 = vunpack.c.l.b16 %v3672
    %v3810 = vunpack.c.h.b16 %v3672
    %v3811 = vunpack.c.l.b16 %v3673
    %v3812 = vunpack.c.h.b16 %v3673
    %v3813 = vunpack.c.l.b16 %v3674
    %v3814 = vunpack.c.h.b16 %v3674
    %v3815 = vunpack.c.l.b16 %v3675
    %v3816 = vunpack.c.h.b16 %v3675
    %v3817 = vunpack.c.l.b16 %v3676
    %v3818 = vunpack.c.h.b16 %v3676
    %v3819 = vunpack.c.l.b16 %v3677
    %v3820 = vunpack.c.h.b16 %v3677
    %v3821 = vunpack.c.l.b16 %v3678
    %v3822 = vunpack.c.h.b16 %v3678
    %v3823 = vunpack.c.l.b16 %v3679
    %v3824 = vunpack.c.h.b16 %v3679
    %v3825 = vunpack.c.l.b16 %v3680
    %v3826 = vunpack.c.h.b16 %v3680
    %v3827 = vunpack.c.l.b16 %v3681
    %v3828 = vunpack.c.h.b16 %v3681
    %v3829 = vunpack.c.l.b16 %v3682
    %v3830 = vunpack.c.h.b16 %v3682
    %v3831 = vunpack.c.l.b16 %v3683
    %v3832 = vunpack.c.h.b16 %v3683
    %v3833 = vunpack.c.l.b16 %v3684
    %v3834 = vunpack.c.h.b16 %v3684
    %v3835 = vunpack.c.l.b16 %v3685
    %v3836 = vunpack.c.h.b16 %v3685
    %v3837 = vunpack.c.l.b16 %v3686
    %v3838 = vunpack.c.h.b16 %v3686
    %v3839 = vunpack.c.l.b16 %v3687
    %v3840 = vunpack.c.h.b16 %v3687
    %v3841 = vunpack.c.l.b16 %v3688
    %v3842 = vunpack.c.h.b16 %v3688
    %v3843 = vunpack.c.l.b16 %v3689
    %v3844 = vunpack.c.h.b16 %v3689
    %v3845 = vunpack.c.l.b16 %v3690
    %v3846 = vunpack.c.h.b16 %v3690
    %v3847 = vunpack.c.l.b16 %v3691
    %v3848 = vunpack.c.h.b16 %v3691
    %v3849 = vunpack.c.l.b16 %v3692
    %v3850 = vunpack.c.h.b16 %v3692
    %v3851 = vunpack.c.l.b16 %v3693
    %v3852 = vunpack.c.h.b16 %v3693
    %v3853 = vunpack.c.l.b16 %v3694
    %v3854 = vunpack.c.h.b16 %v3694
    %v3855 = vunpack.c.l.b16 %v3695
    %v3856 = vunpack.c.h.b16 %v3695
    %v3857 = vunpack.c.l.b16 %v3696
    %v3858 = vunpack.c.h.b16 %v3696
    %v3859 = vunpack.c.l.b16 %v3697
    %v3860 = vunpack.c.h.b16 %v3697
    %v3861 = vunpack.c.l.b16 %v3698
    %v3862 = vunpack.c.h.b16 %v3698
    %v3863 = vunpack.c.l.b16 %v3699
    %v3864 = vunpack.c.h.b16 %v3699
    %v3865 = vunpack.c.l.b16 %v3700
    %v3866 = vunpack.c.h.b16 %v3700
    %v3867 = vunpack.c.l.b16 %v3701
    %v3868 = vunpack.c.h.b16 %v3701
    %v3869 = vunpack.c.l.b16 %v3702
    %v3870 = vunpack.c.h.b16 %v3702
    %v3871 = vpack.c.b16 %v3767, %v3763
    %v3872 = vpack.c.b16 %v3768, %v3764
    %v3873 = vpack.c.b16 %v3769, %v3765
    %v3874 = vpack.c.b16 %v3770, %v3766
    %v3875 = vpack.c.b16 %v3775, %v3771
    %v3876 = vpack.c.b16 %v3776, %v3772
    %v3877 = vpack.c.b16 %v3777, %v3773
    %v3878 = vpack.c.b16 %v3778, %v3774
    %v3879 = vpack.c.b16 %v3783, %v3779
    %v3880 = vpack.c.b16 %v3784, %v3780
    %v3881 = vpack.c.b16 %v3785, %v3781
    %v3882 = vpack.c.b16 %v3786, %v3782
    %v3883 = vpack.c.b16 %v3791, %v3787
    %v3884 = vpack.c.b16 %v3792, %v3788
    %v3885 = vpack.c.b16 %v3793, %v3789
    %v3886 = vpack.c.b16 %v3794, %v3790
    %v3887 = vpack.c.b16 %v3799, %v3795
    %v3888 = vpack.c.b16 %v3800, %v3796
    %v3889 = vpack.c.b16 %v3801, %v3797
    %v3890 = vpack.c.b16 %v3802, %v3798
    %v3891 = vpack.c.b16 %v3807, %v3803
    %v3892 = vpack.c.b16 %v3808, %v3804
    %v3893 = vpack.c.b16 %v3809, %v3805
    %v3894 = vpack.c.b16 %v3810, %v3806
    %v3895 = vpack.c.b16 %v3815, %v3811
    %v3896 = vpack.c.b16 %v3816, %v3812
    %v3897 = vpack.c.b16 %v3817, %v3813
    %v3898 = vpack.c.b16 %v3818, %v3814
    %v3899 = vpack.c.b16 %v3823, %v3819
    %v3900 = vpack.c.b16 %v3824, %v3820
    %v3901 = vpack.c.b16 %v3825, %v3821
    %v3902 = vpack.c.b16 %v3826, %v3822
    %v3903 = vpack.c.b16 %v3831, %v3827
    %v3904 = vpack.c.b16 %v3832, %v3828
    %v3905 = vpack.c.b16 %v3833, %v3829
    %v3906 = vpack.c.b16 %v3834, %v3830
    %v3907 = vpack.c.b16 %v3839, %v3835
    %v3908 = vpack.c.b16 %v3840, %v3836
    %v3909 = vpack.c.b16 %v3841, %v3837
    %v3910 = vpack.c.b16 %v3842, %v3838
    %v3911 = vpack.c.b16 %v3847, %v3843
    %v3912 = vpack.c.b16 %v3848, %v3844
    %v3913 = vpack.c.b16 %v3849, %v3845
    %v3914 = vpack.c.b16 %v3850, %v3846
    %v3915 = vpack.c.b16 %v3855, %v3851
    %v3916 = vpack.c.b16 %v3856, %v3852
    %v3917 = vpack.c.b16 %v3857, %v3853
    %v3918 = vpack.c.b16 %v3858, %v3854
    %v3919 = vpack.c.b16 %v3863, %v3859
    %v3920 = vpack.c.b16 %v3864, %v3860
    %v3921 = vpack.c.b16 %v3865, %v3861
    %v3922 = vpack.c.b16 %v3866, %v3862
    %v3923 = vpack.c.b16 %v3867, %v3867
    %v3924 = vpack.c.b16 %v3868, %v3868
    %v3925 = vpack.c.b16 %v3869, %v3869
    %v3926 = vpack.c.b16 %v3870, %v3870
    %vm3979 = vcmask 719872
    %v3981 = vsel %vm3979, %v3707, 0
    %v3984 = vsel %vm692, %v3923, 0
    %v3987 = vsel %vm692, %v3924, 0
    %v3990 = vsel %vm692, %v3925, 0
    %v3993 = vsel %vm692, %v3926, 0
    %3995 = vmatprep.subr.bf16.mxu0 %v3872
    %3996 = vmatpush1.bf16.msra.mxu0 %v3871
    %3997 = vmatprep.subr.bf16.mxu0 %v3876
    %3998 = vmatpush1.bf16.msra.mxu0 %v3875
    %3999 = vmatprep.subr.bf16.mxu0 %v3880
    %4000 = vmatpush1.bf16.msra.mxu0 %v3879
    %4001 = vmatprep.subr.bf16.mxu0 %v3884
    %4002 = vmatpush1.bf16.msra.mxu0 %v3883
    %4003 = vmatprep.subr.bf16.mxu0 %v3888
    %4004 = vmatpush1.bf16.msra.mxu0 %v3887
    %4005 = vmatprep.subr.bf16.mxu0 %v3892
    %4006 = vmatpush1.bf16.msra.mxu0 %v3891
    %4007 = vmatprep.subr.bf16.mxu0 %v3896
    %4008 = vmatpush1.bf16.msra.mxu0 %v3895
    %4009 = vmatprep.subr.bf16.mxu0 %v3900
    %4010 = vmatpush1.bf16.msra.mxu0 %v3899
    %4011 = vmatprep.subr.bf16.mxu0 %v3904
    %4012 = vmatpush1.bf16.msra.mxu0 %v3903
    %4013 = vmatprep.subr.bf16.mxu0 %v3908
    %4014 = vmatpush1.bf16.msra.mxu0 %v3907
    %4015 = vmatprep.subr.bf16.mxu0 %v3912
    %4016 = vmatpush1.bf16.msra.mxu0 %v3911
    %4017 = vmatprep.subr.bf16.mxu0 %v3916
    %4018 = vmatpush1.bf16.msra.mxu0 %v3915
    %4019 = vmatprep.subr.bf16.mxu0 %v3920
    %4020 = vmatpush1.bf16.msra.mxu0 %v3919
    %4021 = vmatprep.subr.bf16.mxu0 %v3987
    %4022 = vmatpush1.bf16.msra.mxu0 %v3984
    %4023 = vmatprep.subr.bf16.mxu0 0
    %4024 = vmatpush1.bf16.msra.mxu0 0
    %4025 = vmatprep.subr.bf16.mxu0 0
    %4026 = vmatpush1.bf16.msra.mxu0 0
    %4027 = vmatprep.mubr.bf16.mxu0 %v3981
    %4028 = vmatmul.mubr.bf16.gmra.mrb[0].mxu0 %v3706
    %v4029 = vpop.f32.mrb[0].mxu0
    %v4030 = vadd.f32 0.0, %v4029
    %v4031 = vpop.f32.mrb[0].mxu0
    %v4032 = vadd.f32 0.0, %v4031
    %v4033 = vpop.f32.mrb[0].mxu0
    %v4034 = vpop.f32.mrb[0].mxu0
    %4035 = vdwg.mxu0
    %4036 = vmatprep.subr.bf16.mxu0 %v3874
    %4037 = vmatpush1.bf16.msra.mxu0 %v3873
    %4038 = vmatprep.subr.bf16.mxu0 %v3878
    %4039 = vmatpush1.bf16.msra.mxu0 %v3877
    %4040 = vmatprep.subr.bf16.mxu0 %v3882
    %4041 = vmatpush1.bf16.msra.mxu0 %v3881
    %4042 = vmatprep.subr.bf16.mxu0 %v3886
    %4043 = vmatpush1.bf16.msra.mxu0 %v3885
    %4044 = vmatprep.subr.bf16.mxu0 %v3890
    %4045 = vmatpush1.bf16.msra.mxu0 %v3889
    %4046 = vmatprep.subr.bf16.mxu0 %v3894
    %4047 = vmatpush1.bf16.msra.mxu0 %v3893
    %4048 = vmatprep.subr.bf16.mxu0 %v3898
    %4049 = vmatpush1.bf16.msra.mxu0 %v3897
    %4050 = vmatprep.subr.bf16.mxu0 %v3902
    %4051 = vmatpush1.bf16.msra.mxu0 %v3901
    %4052 = vmatprep.subr.bf16.mxu0 %v3906
    %4053 = vmatpush1.bf16.msra.mxu0 %v3905
    %4054 = vmatprep.subr.bf16.mxu0 %v3910
    %4055 = vmatpush1.bf16.msra.mxu0 %v3909
    %4056 = vmatprep.subr.bf16.mxu0 %v3914
    %4057 = vmatpush1.bf16.msra.mxu0 %v3913
    %4058 = vmatprep.subr.bf16.mxu0 %v3918
    %4059 = vmatpush1.bf16.msra.mxu0 %v3917
    %4060 = vmatprep.subr.bf16.mxu0 %v3922
    %4061 = vmatpush1.bf16.msra.mxu0 %v3921
    %4062 = vmatprep.subr.bf16.mxu0 %v3993
    %4063 = vmatpush1.bf16.msra.mxu0 %v3990
    %4064 = vmatprep.subr.bf16.mxu0 0
    %4065 = vmatpush1.bf16.msra.mxu0 0
    %4066 = vmatprep.subr.bf16.mxu0 0
    %4067 = vmatpush1.bf16.msra.mxu0 0
    %4068 = vmatprep.mubr.bf16.mxu0 %v3981
    %4069 = vmatmul.mubr.bf16.gmra.mrb[0].mxu0 %v3706
    %v4070 = vpop.f32.mrb[0].mxu0
    %v4071 = vadd.f32 0.0, %v4070
    %v4072 = vpop.f32.mrb[0].mxu0
    %v4073 = vadd.f32 0.0, %v4072
    %v4074 = vpop.f32.mrb[0].mxu0
    %v4075 = vpop.f32.mrb[0].mxu0
    %4076 = vdwg.mxu0
    %4077 = vst [vmem:[#allocation6] sm:$0xff] %v4030
    %4078 = vst [vmem:[#allocation6 + $0x8] sm:$0xff] %v4032
    %4079 = vst [vmem:[#allocation6 + $0x10] sm:$0xff] %v4071
    %4080 = vst [vmem:[#allocation6 + $0x18] sm:$0xff] %v4073
    // Predicated region
    $region46: #{tpu_custom_call.1} parent=1 // pred_check
      _
    $region47: #{tpu_custom_call.1} parent=1 // pred_check_branch
      %4082 = sbr.rel (0) target = $region49
    $region48: #{tpu_custom_call.1} parent=1 // pred_region
      %s4084 = ssub.s32 512, 512
      %4085 = vsyncadd [#allocation7], %s4084
      %s4087 = sshll.u32 [#allocation6], 4
      %s4088 = int_to_ptr.vmem [resolvable:$true] %s4087
      %4090 = dma.vmem_to_hbm [thread:$0]  %s4088, 512, %s11, [#allocation7]
    $region49: #{tpu_custom_call.1} parent=1 // pred_fallthru
      _
    // Predicated region
    $region50: #{tpu_custom_call.1} parent=1 // pred_check
      _
    $region51: #{tpu_custom_call.1} parent=1 // pred_check_branch
      %4092 = sbr.rel (0) target = $region53
    $region52: #{tpu_custom_call.1} parent=1 // pred_region
      %4093 = dma.done [#allocation7], 512
    $region53: #{tpu_custom_call.1} parent=1 // pred_fallthru
      _
    %4094 = vsyncpa [#allocation7], 1

</llo_original>
